<compile_context>
chip_gen: v5e
topology: v5e:2x2
jax: 0.10.0
libtpu: 0.0.40
codegen_flags: <defaults>
</compile_context>

<pallas_src>
import functools
import math

import jax
import jax.numpy as jnp
from jax.experimental import pallas as pl
from jax.experimental.pallas import tpu as pltpu


# ----------------------------------------------------------------------------
# Tile selection helpers
# ----------------------------------------------------------------------------

def _pick_tile(dim, pref=512):
    """Largest 128-multiple divisor of `dim` capped at `pref`; else full dim."""
    if dim % 128 == 0:
        t = min(pref, dim)
        t = (t // 128) * 128
        while dim % t != 0:
            t -= 128
        return t
    return dim


def _pick_row_tile(m, pref=512):
    """Largest multiple-of-8 divisor of `m` capped at `pref`; else full dim."""
    if m % 8 == 0:
        t = min(pref, m)
        t = (t // 8) * 8
        while m % t != 0:
            t -= 8
        return t
    return m


_VMEM_LIMIT = 32 * 1024 * 1024  # safe on v5e/v6e (128 MiB) and v7x (64 MiB)


# ----------------------------------------------------------------------------
# Pallas kernels
# ----------------------------------------------------------------------------

def _linear_kernel(x_ref, w_ref, b_ref, o_ref, acc_ref, *, activation):
    """y = act(x @ W + b); grid = (M_tiles, N_tiles, K_tiles), K innermost."""
    k = pl.program_id(2)

    @pl.when(k == 0)
    def _():
        acc_ref[...] = jnp.zeros_like(acc_ref)

    acc_ref[...] += jnp.dot(x_ref[...], w_ref[...],
                            preferred_element_type=jnp.float32)

    @pl.when(k == pl.num_programs(2) - 1)
    def _():
        y = acc_ref[...] + b_ref[...]
        if activation == "gelu":
            # TODO(synk): HF BERT default is exact erf GELU; tanh approx used here.
            y = jax.nn.gelu(y, approximate=True)
        elif activation == "relu":
            y = jnp.maximum(y, 0.0)
        o_ref[...] = y.astype(o_ref.dtype)


def _linear_res_ln_kernel(x_ref, w_ref, b_ref, r_ref, g_ref, bn_ref,
                          o_ref, acc_ref, *, eps):
    """LayerNorm((x @ W + b) + residual) fused; grid = (M_tiles, K_tiles)."""
    k = pl.program_id(1)

    @pl.when(k == 0)
    def _():
        acc_ref[...] = jnp.zeros_like(acc_ref)

    acc_ref[...] += jnp.dot(x_ref[...], w_ref[...],
                            preferred_element_type=jnp.float32)

    @pl.when(k == pl.num_programs(1) - 1)
    def _():
        y = acc_ref[...] + b_ref[...] + r_ref[...].astype(jnp.float32)
        mean = jnp.mean(y, axis=-1, keepdims=True)
        yc = y - mean
        var = jnp.mean(yc * yc, axis=-1, keepdims=True)
        y = yc * jax.lax.rsqrt(var + eps)
        y = y * g_ref[...] + bn_ref[...]
        o_ref[...] = y.astype(o_ref.dtype)


def _layernorm_kernel(x_ref, g_ref, b_ref, o_ref, *, eps, relu):
    x = x_ref[...].astype(jnp.float32)
    mean = jnp.mean(x, axis=-1, keepdims=True)
    xc = x - mean
    var = jnp.mean(xc * xc, axis=-1, keepdims=True)
    y = xc * jax.lax.rsqrt(var + eps)
    y = y * g_ref[...] + b_ref[...]
    if relu:
        y = jnp.maximum(y, 0.0)
    o_ref[...] = y.astype(o_ref.dtype)


def _classifier_kernel(x_ref, w1_ref, b1_ref, g_ref, bn_ref, w2_ref, b2_ref,
                       o_ref, acc_ref, *, eps):
    """Fused classifier head.

    y = x @ W1 + b1 ; y = LayerNorm(y) ; y = relu(y) ; out = y @ w2 + b2
    grid = (M_tiles, K_tiles); fc2 is a VPU row-dot (output dim == 1).
    """
    k = pl.program_id(1)

    @pl.when(k == 0)
    def _():
        acc_ref[...] = jnp.zeros_like(acc_ref)

    acc_ref[...] += jnp.dot(x_ref[...], w1_ref[...],
                            preferred_element_type=jnp.float32)

    @pl.when(k == pl.num_programs(1) - 1)
    def _():
        y = acc_ref[...] + b1_ref[...]
        mean = jnp.mean(y, axis=-1, keepdims=True)
        yc = y - mean
        var = jnp.mean(yc * yc, axis=-1, keepdims=True)
        y = yc * jax.lax.rsqrt(var + eps)
        y = y * g_ref[...] + bn_ref[...]
        y = jnp.maximum(y, 0.0)
        out = jnp.sum(y * w2_ref[...], axis=-1, keepdims=True) + b2_ref[...]
        o_ref[...] = out.astype(o_ref.dtype)


def _attention_kernel(q_ref, k_ref, v_ref, bias_ref, o_ref, *, scale):
    """All heads of one batch element per grid step."""
    q = q_ref[0]                                   # (nh, S, Dh) bf16
    k = k_ref[0]
    v = v_ref[0]
    s = jnp.einsum("hqd,hkd->hqk", q, k,
                   preferred_element_type=jnp.float32)
    s = s * scale + bias_ref[0, 0]                 # (1, S) broadcast over h, q
    s = s - jnp.max(s, axis=-1, keepdims=True)
    p = jnp.exp(s)
    denom = jnp.sum(p, axis=-1, keepdims=True)
    p = p * pl.reciprocal(denom, approx=True)
    out = jnp.einsum("hqk,hkd->hqd", p.astype(v.dtype), v,
                     preferred_element_type=jnp.float32)
    o_ref[0] = out.astype(o_ref.dtype)


# ----------------------------------------------------------------------------
# Kernel wrappers
# ----------------------------------------------------------------------------

def linear(x, w, b, activation=None, out_dtype=jnp.bfloat16,
           tm_pref=512, tn_pref=512, tk_pref=512):
    """x: (M, K), w: (K, N), b: (N,) -> act(x @ w + b) in out_dtype."""
    x = x.astype(jnp.bfloat16)
    w = w.astype(jnp.bfloat16)
    M, K = x.shape
    _, N = w.shape
    tm = _pick_row_tile(M, tm_pref)
    tk = _pick_tile(K, tk_pref)
    tn = _pick_tile(N, tn_pref)
    grid = (M // tm, N // tn, K // tk)
    kernel = functools.partial(_linear_kernel, activation=activation)
    return pl.pallas_call(
        kernel,
        out_shape=jax.ShapeDtypeStruct((M, N), out_dtype),
        grid_spec=pltpu.PrefetchScalarGridSpec(
            num_scalar_prefetch=0,
            grid=grid,
            in_specs=[
                pl.BlockSpec((tm, tk), lambda i, j, k: (i, k)),
                pl.BlockSpec((tk, tn), lambda i, j, k: (k, j)),
                pl.BlockSpec((1, tn), lambda i, j, k: (0, j)),
            ],
            out_specs=pl.BlockSpec((tm, tn), lambda i, j, k: (i, j)),
            scratch_shapes=[pltpu.VMEM((tm, tn), jnp.float32)],
        ),
        compiler_params=pltpu.CompilerParams(
            dimension_semantics=("parallel", "parallel", "arbitrary"),
            vmem_limit_bytes=_VMEM_LIMIT),
    )(x, w, b.reshape(1, N).astype(jnp.float32))


def linear_residual_layernorm(x, w, b, residual, gamma, beta, eps=1e-12,
                              out_dtype=jnp.bfloat16, tm_pref=256, tk_pref=512):
    """LayerNorm(x @ w + b + residual); full output row (N) resident."""
    x = x.astype(jnp.bfloat16)
    w = w.astype(jnp.bfloat16)
    residual = residual.astype(jnp.bfloat16)
    M, K = x.shape
    _, N = w.shape
    tm = _pick_row_tile(M, tm_pref)
    tk = _pick_tile(K, tk_pref)
    grid = (M // tm, K // tk)
    kernel = functools.partial(_linear_res_ln_kernel, eps=eps)
    return pl.pallas_call(
        kernel,
        out_shape=jax.ShapeDtypeStruct((M, N), out_dtype),
        grid_spec=pltpu.PrefetchScalarGridSpec(
            num_scalar_prefetch=0,
            grid=grid,
            in_specs=[
                pl.BlockSpec((tm, tk), lambda i, k: (i, k)),
                pl.BlockSpec((tk, N), lambda i, k: (k, 0)),
                pl.BlockSpec((1, N), lambda i, k: (0, 0)),
                pl.BlockSpec((tm, N), lambda i, k: (i, 0)),
                pl.BlockSpec((1, N), lambda i, k: (0, 0)),
                pl.BlockSpec((1, N), lambda i, k: (0, 0)),
            ],
            out_specs=pl.BlockSpec((tm, N), lambda i, k: (i, 0)),
            scratch_shapes=[pltpu.VMEM((tm, N), jnp.float32)],
        ),
        compiler_params=pltpu.CompilerParams(
            dimension_semantics=("parallel", "arbitrary"),
            vmem_limit_bytes=_VMEM_LIMIT),
    )(x, w, b.reshape(1, N).astype(jnp.float32), residual,
      gamma.reshape(1, N).astype(jnp.float32),
      beta.reshape(1, N).astype(jnp.float32))


def layer_norm(x, gamma, beta, eps=1e-12, relu=False,
               out_dtype=jnp.bfloat16, tm_pref=1024):
    M, D = x.shape
    tm = _pick_row_tile(M, tm_pref)
    grid = (M // tm,)
    kernel = functools.partial(_layernorm_kernel, eps=eps, relu=relu)
    return pl.pallas_call(
        kernel,
        out_shape=jax.ShapeDtypeStruct((M, D), out_dtype),
        grid_spec=pltpu.PrefetchScalarGridSpec(
            num_scalar_prefetch=0,
            grid=grid,
            in_specs=[
                pl.BlockSpec((tm, D), lambda i: (i, 0)),
                pl.BlockSpec((1, D), lambda i: (0, 0)),
                pl.BlockSpec((1, D), lambda i: (0, 0)),
            ],
            out_specs=pl.BlockSpec((tm, D), lambda i: (i, 0)),
        ),
        compiler_params=pltpu.CompilerParams(
            dimension_semantics=("parallel",),
            vmem_limit_bytes=_VMEM_LIMIT),
    )(x, gamma.reshape(1, D).astype(jnp.float32),
      beta.reshape(1, D).astype(jnp.float32))


def classifier_fused(x, w1, b1, gamma, beta, w2, b2, eps=1e-5,
                     tm_pref=256, tk_pref=512):
    """Linear(K->H) + LayerNorm(H) + ReLU + Linear(H->1), fully fused."""
    x = x.astype(jnp.bfloat16)
    w1 = w1.astype(jnp.bfloat16)
    M, K = x.shape
    _, H = w1.shape
    tm = _pick_row_tile(M, tm_pref)
    tk = _pick_tile(K, tk_pref)
    grid = (M // tm, K // tk)
    kernel = functools.partial(_classifier_kernel, eps=eps)
    return pl.pallas_call(
        kernel,
        out_shape=jax.ShapeDtypeStruct((M, 1), jnp.float32),
        grid_spec=pltpu.PrefetchScalarGridSpec(
            num_scalar_prefetch=0,
            grid=grid,
            in_specs=[
                pl.BlockSpec((tm, tk), lambda i, k: (i, k)),
                pl.BlockSpec((tk, H), lambda i, k: (k, 0)),
                pl.BlockSpec((1, H), lambda i, k: (0, 0)),
                pl.BlockSpec((1, H), lambda i, k: (0, 0)),
                pl.BlockSpec((1, H), lambda i, k: (0, 0)),
                pl.BlockSpec((1, H), lambda i, k: (0, 0)),
                pl.BlockSpec((1, 1), lambda i, k: (0, 0)),
            ],
            out_specs=pl.BlockSpec((tm, 1), lambda i, k: (i, 0)),
            scratch_shapes=[pltpu.VMEM((tm, H), jnp.float32)],
        ),
        compiler_params=pltpu.CompilerParams(
            dimension_semantics=("parallel", "arbitrary"),
            vmem_limit_bytes=_VMEM_LIMIT),
    )(x, w1, b1.reshape(1, H).astype(jnp.float32),
      gamma.reshape(1, H).astype(jnp.float32),
      beta.reshape(1, H).astype(jnp.float32),
      w2.reshape(1, H).astype(jnp.float32),
      b2.reshape(1, 1).astype(jnp.float32))


def multihead_attention(q, k, v, bias, scale):
    """q, k, v: (B, nh, S, Dh) bf16; bias: (B, 1, 1, S) additive mask bias."""
    B, nh, S, Dh = q.shape
    kernel = functools.partial(_attention_kernel, scale=scale)
    return pl.pallas_call(
        kernel,
        out_shape=jax.ShapeDtypeStruct((B, nh, S, Dh), q.dtype),
        grid_spec=pltpu.PrefetchScalarGridSpec(
            num_scalar_prefetch=0,
            grid=(B,),
            in_specs=[
                pl.BlockSpec((1, nh, S, Dh), lambda b: (b, 0, 0, 0)),
                pl.BlockSpec((1, nh, S, Dh), lambda b: (b, 0, 0, 0)),
                pl.BlockSpec((1, nh, S, Dh), lambda b: (b, 0, 0, 0)),
                pl.BlockSpec((1, 1, 1, S), lambda b: (b, 0, 0, 0)),
            ],
            out_specs=pl.BlockSpec((1, nh, S, Dh), lambda b: (b, 0, 0, 0)),
        ),
        compiler_params=pltpu.CompilerParams(
            dimension_semantics=("parallel",),
            vmem_limit_bytes=_VMEM_LIMIT),
    )(q, k, v, bias)


# ----------------------------------------------------------------------------
# Model (SplitBertModel encoder + image encoder + classifier)
# ----------------------------------------------------------------------------

def _ln_params(d):
    return {"g": jnp.ones((d,), jnp.float32), "b": jnp.zeros((d,), jnp.float32)}


def init_params(key, config, img_dim):
    H = config["hidden_size"]
    I = config["intermediate_size"]
    V = config["vocab_size"]
    P = config["max_position"]
    L = config["num_layers"]
    keys = iter(jax.random.split(key, 16 + 8 * L))
    scale = 0.02

    def nrm(shape, dtype=jnp.float32):
        return (scale * jax.random.normal(next(keys), shape, jnp.float32)).astype(dtype)

    def dense(din, dout):
        # matmul weights stored bf16 (MXU path); biases f32.
        return {"w": nrm((din, dout), jnp.bfloat16),
                "b": jnp.zeros((dout,), jnp.float32)}

    bert = {
        "word_emb": nrm((V, H)),
        "pos_emb": nrm((P, H)),
        "type_emb": nrm((2, H)),
        "emb_ln": _ln_params(H),
        "layers": [],
    }
    for _ in range(L):
        bert["layers"].append({
            "qkv": dense(H, 3 * H),        # fused W_q | W_k | W_v
            "o": dense(H, H),
            "ln1": _ln_params(H),
            "ffn1": dense(H, I),
            "ffn2": dense(I, H),
            "ln2": _ln_params(H),
        })

    return {
        "bert": bert,
        "img_fc": dense(img_dim, img_dim),       # nn.Linear(img_dim, img_dim)
        "img_ln": _ln_params(img_dim),           # nn.LayerNorm(img_dim)
        "cls_fc1": dense(img_dim + H, H),        # nn.Linear(bert+img, bert)
        "cls_ln": _ln_params(H),                 # nn.LayerNorm(bert)
        "cls_fc2": {"w": nrm((H, 1), jnp.float32),  # nn.Linear(bert, 1), VPU row-dot
                    "b": jnp.zeros((1,), jnp.float32)},
    }


def bert_forward(params, input_ids, attention_mask, config):
    B, S = input_ids.shape
    H = config["hidden_size"]
    nh = config["num_heads"]
    dh = H // nh

    # Embeddings (gather is glue in plain JAX) + LayerNorm kernel.
    # TODO(synk): token_type_ids assumed all-zero (type_emb[0]), as in the reference usage.
    emb = (params["word_emb"][input_ids]
           + params["pos_emb"][jnp.arange(S)][None, :, :]
           + params["type_emb"][0][None, None, :])
    x = layer_norm(emb.reshape(B * S, H),
                   params["emb_ln"]["g"], params["emb_ln"]["b"], eps=1e-12)

    # Extended attention-mask bias (B, 1, 1, S).
    bias = ((1.0 - attention_mask.astype(jnp.float32)) * -10000.0)[:, None, None, :]
    scale = 1.0 / math.sqrt(dh)

    for lp in params["layers"]:
        # Fused QKV projection: one (H, 3H) matmul reads x once.
        qkv = linear(x, lp["qkv"]["w"], lp["qkv"]["b"])            # (B*S, 3H)
        qkv = qkv.reshape(B, S, 3, nh, dh).transpose(2, 0, 3, 1, 4)  # (3,B,nh,S,dh)
        ctx = multihead_attention(qkv[0], qkv[1], qkv[2], bias, scale)  # (B,nh,S,dh)
        ctx = ctx.transpose(0, 2, 1, 3).reshape(B * S, H)

        # Attention output projection + residual + LayerNorm fused.
        x = linear_residual_layernorm(ctx, lp["o"]["w"], lp["o"]["b"], x,
                                      lp["ln1"]["g"], lp["ln1"]["b"], eps=1e-12)
        # FFN: intermediate GELU, then output projection + residual + LN fused.
        h = linear(x, lp["ffn1"]["w"], lp["ffn1"]["b"], activation="gelu")
        x = linear_residual_layernorm(h, lp["ffn2"]["w"], lp["ffn2"]["b"], x,
                                      lp["ln2"]["g"], lp["ln2"]["b"], eps=1e-12)

    return x.reshape(B, S, H)


def pretrain_split_bert_forward(params, image_features, input_ids,
                                attention_mask, config):
    # image_encoder = Linear(img_dim, img_dim) + LayerNorm(img_dim)
    img = linear(image_features, params["img_fc"]["w"], params["img_fc"]["b"])
    img = layer_norm(img, params["img_ln"]["g"], params["img_ln"]["b"], eps=1e-5)

    # TODO(synk): Tokenizer(vocab_file) (raw-text tokenization) and .cuda()
    # have no Pallas equivalent; input_ids / attention_mask are taken as inputs.
    seq_out = bert_forward(params["bert"], input_ids, attention_mask, config)

    B, S, H = seq_out.shape
    img_rep = jnp.broadcast_to(img[:, None, :], (B, S, img.shape[-1]))
    feats = jnp.concatenate([img_rep, seq_out.astype(img_rep.dtype)],
                            axis=-1).reshape(B * S, -1)

    # classifier = Linear(bert+img, bert) + LayerNorm(bert) + ReLU + Linear(bert, 1)
    # fully fused into one kernel (fc2 is a VPU row-dot in the epilogue).
    logits = classifier_fused(feats,
                              params["cls_fc1"]["w"], params["cls_fc1"]["b"],
                              params["cls_ln"]["g"], params["cls_ln"]["b"],
                              params["cls_fc2"]["w"], params["cls_fc2"]["b"],
                              eps=1e-5)
    return logits.reshape(B, S, 1), attention_mask


# ----------------------------------------------------------------------------
# Main
# ----------------------------------------------------------------------------

if __name__ == "__main__":
    config = dict(vocab_size=100, hidden_size=32, num_heads=4, num_layers=2,
                  intermediate_size=64, max_position=64)
    IMG_DIM = 2048          # hardcoded in the reference module
    B, S = 2, 8

    key = jax.random.PRNGKey(0)
    kparams, kimg, kids = jax.random.split(key, 3)

    params = init_params(kparams, config, IMG_DIM)
    image_features = jax.random.normal(kimg, (B, IMG_DIM), jnp.float32)
    input_ids = jax.random.randint(kids, (B, S), 0, config["vocab_size"])
    attention_mask = jnp.ones((B, S), jnp.int32).at[1, 6:].set(0)

    fwd = jax.jit(functools.partial(pretrain_split_bert_forward, config=config))
    out, mask = fwd(params, image_features, input_ids, attention_mask)
    jax.block_until_ready(out)
    jax.block_until_ready(mask)
    assert out.shape == (B, S, 1) and mask.shape == (B, S)
    print("KERNEL_OK")
</pallas_src>

<mosaic_0001>
module attributes {stable_mosaic.version = 11 : i64} {
  func.func @_layernorm_kernel(%arg0: i32, %arg1: memref<16x32xf32, #tpu.memory_space<vmem>>, %arg2: memref<1x32xf32, #tpu.memory_space<vmem>>, %arg3: memref<1x32xf32, #tpu.memory_space<vmem>>, %arg4: memref<16x32xbf16, #tpu.memory_space<vmem>>) attributes {dimension_semantics = [#tpu.dimension_semantics<parallel>], iteration_bounds = array<i64: 1>, scalar_prefetch = 0 : i64, scratch_operands = 0 : i64, tpu.core_type = #tpu.core_type<tc>, window_params = [{transform_indices = @transform_0, window_bounds = array<i64: 16, 32>}, {pipeline_mode = #tpu.pipeline_mode<synchronous>, transform_indices = @transform_1, window_bounds = array<i64: 1, 32>}, {pipeline_mode = #tpu.pipeline_mode<synchronous>, transform_indices = @transform_2, window_bounds = array<i64: 1, 32>}, {transform_indices = @transform_3, window_bounds = array<i64: 16, 32>}]} {
    %c0 = arith.constant 0 : index
    %c0_0 = arith.constant 0 : index
    %0 = vector.load %arg1[%c0, %c0_0] : memref<16x32xf32, #tpu.memory_space<vmem>>, vector<16x32xf32>
    %cst = arith.constant dense<0.000000e+00> : vector<16xf32>
    %1 = vector.multi_reduction <add>, %0, %cst [1] : vector<16x32xf32> to vector<16xf32>
    %2 = vector.shape_cast %1 : vector<16xf32> to vector<16x1xf32>
    %cst_1 = arith.constant 3.200000e+01 : f32
    %3 = vector.broadcast %cst_1 : f32 to vector<16x1xf32>
    %4 = arith.divf %2, %3 : vector<16x1xf32>
    %5 = vector.broadcast %4 : vector<16x1xf32> to vector<16x32xf32>
    %6 = arith.subf %0, %5 : vector<16x32xf32>
    %7 = arith.mulf %6, %6 : vector<16x32xf32>
    %cst_2 = arith.constant dense<0.000000e+00> : vector<16xf32>
    %8 = vector.multi_reduction <add>, %7, %cst_2 [1] : vector<16x32xf32> to vector<16xf32>
    %9 = vector.shape_cast %8 : vector<16xf32> to vector<16x1xf32>
    %cst_3 = arith.constant 3.200000e+01 : f32
    %10 = vector.broadcast %cst_3 : f32 to vector<16x1xf32>
    %11 = arith.divf %9, %10 : vector<16x1xf32>
    %cst_4 = arith.constant 9.99999996E-13 : f32
    %12 = vector.broadcast %cst_4 : f32 to vector<16x1xf32>
    %13 = arith.addf %11, %12 : vector<16x1xf32>
    %14 = math.rsqrt %13 : vector<16x1xf32>
    %15 = vector.broadcast %14 : vector<16x1xf32> to vector<16x32xf32>
    %16 = arith.mulf %6, %15 : vector<16x32xf32>
    %c0_5 = arith.constant 0 : index
    %c0_6 = arith.constant 0 : index
    %17 = vector.load %arg2[%c0_5, %c0_6] : memref<1x32xf32, #tpu.memory_space<vmem>>, vector<1x32xf32>
    %18 = vector.broadcast %17 : vector<1x32xf32> to vector<16x32xf32>
    %19 = arith.mulf %16, %18 : vector<16x32xf32>
    %c0_7 = arith.constant 0 : index
    %c0_8 = arith.constant 0 : index
    %20 = vector.load %arg3[%c0_7, %c0_8] : memref<1x32xf32, #tpu.memory_space<vmem>>, vector<1x32xf32>
    %21 = vector.broadcast %20 : vector<1x32xf32> to vector<16x32xf32>
    %22 = arith.addf %19, %21 : vector<16x32xf32>
    %23 = arith.truncf %22 : vector<16x32xf32> to vector<16x32xbf16>
    %c0_9 = arith.constant 0 : index
    %c0_10 = arith.constant 0 : index
    %24 = vector.load %arg4[%c0_9, %c0_10] : memref<16x32xbf16, #tpu.memory_space<vmem>>, vector<16x32xbf16>
    tpu.vector_store %arg4[%c0_9, %c0_10], %23 {strides = array<i32>} : memref<16x32xbf16, #tpu.memory_space<vmem>>, vector<16x32xbf16>,
    return
  }
  func.func @transform_0(%arg0: i32) -> (i32, i32) {
    %c0_i32 = arith.constant 0 : i32
    %c0_i32_0 = arith.constant 0 : i32
    return %arg0, %c0_i32 : i32, i32
  }
  func.func @transform_1(%arg0: i32) -> (i32, i32) {
    %c0_i32 = arith.constant 0 : i32
    %c0_i32_0 = arith.constant 0 : i32
    %c0_i32_1 = arith.constant 0 : i32
    return %c0_i32, %c0_i32_0 : i32, i32
  }
  func.func @transform_2(%arg0: i32) -> (i32, i32) {
    %c0_i32 = arith.constant 0 : i32
    %c0_i32_0 = arith.constant 0 : i32
    %c0_i32_1 = arith.constant 0 : i32
    return %c0_i32, %c0_i32_0 : i32, i32
  }
  func.func @transform_3(%arg0: i32) -> (i32, i32) {
    %c0_i32 = arith.constant 0 : i32
    %c0_i32_0 = arith.constant 0 : i32
    return %arg0, %c0_i32 : i32, i32
  }
}

module attributes {stable_mosaic.version = 11 : i64} {
  func.func @_linear_kernel(%arg0: i32, %arg1: i32, %arg2: i32, %arg3: memref<16x32xbf16, #tpu.memory_space<vmem>>, %arg4: memref<32x96xbf16, #tpu.memory_space<vmem>>, %arg5: memref<1x96xf32, #tpu.memory_space<vmem>>, %arg6: memref<16x96xbf16, #tpu.memory_space<vmem>>, %arg7: memref<16x96xf32, #tpu.memory_space<vmem>>) attributes {dimension_semantics = [#tpu.dimension_semantics<parallel>, #tpu.dimension_semantics<parallel>, #tpu.dimension_semantics<arbitrary>], iteration_bounds = array<i64: 1, 1, 1>, scalar_prefetch = 0 : i64, scratch_operands = 1 : i64, tpu.core_type = #tpu.core_type<tc>, window_params = [{transform_indices = @transform_0, window_bounds = array<i64: 16, 32>}, {transform_indices = @transform_1, window_bounds = array<i64: 32, 96>}, {transform_indices = @transform_2, window_bounds = array<i64: 1, 96>}, {transform_indices = @transform_3, window_bounds = array<i64: 16, 96>}]} {
    %c0_i32 = arith.constant 0 : i32
    %0 = arith.cmpi eq, %arg2, %c0_i32 : i32
    %1 = arith.extui %0 : i1 to i32
    %c0_i32_0 = arith.constant 0 : i32
    %2 = arith.cmpi ne, %1, %c0_i32_0 : i32
    scf.if %2 {
      %cst_10 = arith.constant 0.000000e+00 : f32
      %12 = vector.broadcast %cst_10 : f32 to vector<16x96xf32>
      %c0_11 = arith.constant 0 : index
      %c0_12 = arith.constant 0 : index
      %13 = vector.load %arg7[%c0_11, %c0_12] : memref<16x96xf32, #tpu.memory_space<vmem>>, vector<16x96xf32>
      tpu.vector_store %arg7[%c0_11, %c0_12], %12 {strides = array<i32>} : memref<16x96xf32, #tpu.memory_space<vmem>>, vector<16x96xf32>,
    } else {
    }
    %c0 = arith.constant 0 : index
    %c0_1 = arith.constant 0 : index
    %3 = vector.load %arg7[%c0, %c0_1] : memref<16x96xf32, #tpu.memory_space<vmem>>, vector<16x96xf32>
    %c0_2 = arith.constant 0 : index
    %c0_3 = arith.constant 0 : index
    %4 = vector.load %arg3[%c0_2, %c0_3] : memref<16x32xbf16, #tpu.memory_space<vmem>>, vector<16x32xbf16>
    %c0_4 = arith.constant 0 : index
    %c0_5 = arith.constant 0 : index
    %5 = vector.load %arg4[%c0_4, %c0_5] : memref<32x96xbf16, #tpu.memory_space<vmem>>, vector<32x96xbf16>
    %cst = arith.constant dense<0.000000e+00> : vector<16x96xf32>
    %6 = tpu.matmul %4, %5, %cst {dimension_numbers = #tpu.dot_dimension_numbers<[1], [0], [0], [1], [0, 0, 1, 1], [], []>} : vector<16x32xbf16>, vector<32x96xbf16>, vector<16x96xf32> -> vector<16x96xf32>
    %7 = arith.addf %3, %6 : vector<16x96xf32>
    %c0_6 = arith.constant 0 : index
    %c0_7 = arith.constant 0 : index
    %8 = vector.load %arg7[%c0_6, %c0_7] : memref<16x96xf32, #tpu.memory_space<vmem>>, vector<16x96xf32>
    tpu.vector_store %arg7[%c0_6, %c0_7], %7 {strides = array<i32>} : memref<16x96xf32, #tpu.memory_space<vmem>>, vector<16x96xf32>,
    %c0_i32_8 = arith.constant 0 : i32
    %9 = arith.cmpi eq, %arg2, %c0_i32_8 : i32
    %10 = arith.extui %9 : i1 to i32
    %c0_i32_9 = arith.constant 0 : i32
    %11 = arith.cmpi ne, %10, %c0_i32_9 : i32
    scf.if %11 {
      %c0_10 = arith.constant 0 : index
      %c0_11 = arith.constant 0 : index
      %12 = vector.load %arg7[%c0_10, %c0_11] : memref<16x96xf32, #tpu.memory_space<vmem>>, vector<16x96xf32>
      %c0_12 = arith.constant 0 : index
      %c0_13 = arith.constant 0 : index
      %13 = vector.load %arg5[%c0_12, %c0_13] : memref<1x96xf32, #tpu.memory_space<vmem>>, vector<1x96xf32>
      %14 = vector.broadcast %13 : vector<1x96xf32> to vector<16x96xf32>
      %15 = arith.addf %12, %14 : vector<16x96xf32>
      %16 = arith.truncf %15 : vector<16x96xf32> to vector<16x96xbf16>
      %c0_14 = arith.constant 0 : index
      %c0_15 = arith.constant 0 : index
      %17 = vector.load %arg6[%c0_14, %c0_15] : memref<16x96xbf16, #tpu.memory_space<vmem>>, vector<16x96xbf16>
      tpu.vector_store %arg6[%c0_14, %c0_15], %16 {strides = array<i32>} : memref<16x96xbf16, #tpu.memory_space<vmem>>, vector<16x96xbf16>,
    } else {
    }
    return
  }
  func.func @transform_0(%arg0: i32, %arg1: i32, %arg2: i32) -> (i32, i32) {
    %c0_i32 = arith.constant 0 : i32
    return %arg0, %arg2 : i32, i32
  }
  func.func @transform_1(%arg0: i32, %arg1: i32, %arg2: i32) -> (i32, i32) {
    %c0_i32 = arith.constant 0 : i32
    return %arg2, %arg1 : i32, i32
  }
  func.func @transform_2(%arg0: i32, %arg1: i32, %arg2: i32) -> (i32, i32) {
    %c0_i32 = arith.constant 0 : i32
    %c0_i32_0 = arith.constant 0 : i32
    return %c0_i32, %arg1 : i32, i32
  }
  func.func @transform_3(%arg0: i32, %arg1: i32, %arg2: i32) -> (i32, i32) {
    %c0_i32 = arith.constant 0 : i32
    return %arg0, %arg1 : i32, i32
  }
}

module attributes {stable_mosaic.version = 11 : i64} {
  func.func @_attention_kernel(%arg0: i32, %arg1: memref<1x4x8x8xbf16, #tpu.memory_space<vmem>>, %arg2: memref<1x4x8x8xbf16, #tpu.memory_space<vmem>>, %arg3: memref<1x4x8x8xbf16, #tpu.memory_space<vmem>>, %arg4: memref<1x1x1x8xf32, #tpu.memory_space<vmem>>, %arg5: memref<1x4x8x8xbf16, #tpu.memory_space<vmem>>) attributes {dimension_semantics = [#tpu.dimension_semantics<parallel>], iteration_bounds = array<i64: 2>, scalar_prefetch = 0 : i64, scratch_operands = 0 : i64, tpu.core_type = #tpu.core_type<tc>, window_params = [{transform_indices = @transform_0, window_bounds = array<i64: 1, 4, 8, 8>}, {transform_indices = @transform_1, window_bounds = array<i64: 1, 4, 8, 8>}, {transform_indices = @transform_2, window_bounds = array<i64: 1, 4, 8, 8>}, {transform_indices = @transform_3, window_bounds = array<i64: 1, 1, 1, 8>}, {transform_indices = @transform_4, window_bounds = array<i64: 1, 4, 8, 8>}]} {
    %c0 = arith.constant 0 : index
    %c0_0 = arith.constant 0 : index
    %c0_1 = arith.constant 0 : index
    %c0_2 = arith.constant 0 : index
    %0 = vector.load %arg1[%c0, %c0_0, %c0_1, %c0_2] : memref<1x4x8x8xbf16, #tpu.memory_space<vmem>>, vector<1x4x8x8xbf16>
    %1 = vector.shape_cast %0 : vector<1x4x8x8xbf16> to vector<4x8x8xbf16>
    %c0_3 = arith.constant 0 : index
    %c0_4 = arith.constant 0 : index
    %c0_5 = arith.constant 0 : index
    %c0_6 = arith.constant 0 : index
    %2 = vector.load %arg2[%c0_3, %c0_4, %c0_5, %c0_6] : memref<1x4x8x8xbf16, #tpu.memory_space<vmem>>, vector<1x4x8x8xbf16>
    %3 = vector.shape_cast %2 : vector<1x4x8x8xbf16> to vector<4x8x8xbf16>
    %c0_7 = arith.constant 0 : index
    %c0_8 = arith.constant 0 : index
    %c0_9 = arith.constant 0 : index
    %c0_10 = arith.constant 0 : index
    %4 = vector.load %arg3[%c0_7, %c0_8, %c0_9, %c0_10] : memref<1x4x8x8xbf16, #tpu.memory_space<vmem>>, vector<1x4x8x8xbf16>
    %5 = vector.shape_cast %4 : vector<1x4x8x8xbf16> to vector<4x8x8xbf16>
    "tpu.trace_start"() <{level = 10 : i32, message = "hqd,hkd->hqk"}> : () -> ()
    %cst = arith.constant dense<0.000000e+00> : vector<4x8x8xf32>
    %6 = tpu.matmul %1, %3, %cst {dimension_numbers = #tpu.dot_dimension_numbers<[2], [2], [1], [1], [0, 0, 0, 1, 1, 1], [0], [0]>} : vector<4x8x8xbf16>, vector<4x8x8xbf16>, vector<4x8x8xf32> -> vector<4x8x8xf32>
    "tpu.trace_stop"() : () -> ()
    %cst_11 = arith.constant 0.353553385 : f32
    %7 = vector.broadcast %cst_11 : f32 to vector<4x8x8xf32>
    %8 = arith.mulf %6, %7 : vector<4x8x8xf32>
    %c0_12 = arith.constant 0 : index
    %c0_13 = arith.constant 0 : index
    %c0_14 = arith.constant 0 : index
    %c0_15 = arith.constant 0 : index
    %9 = vector.load %arg4[%c0_12, %c0_13, %c0_14, %c0_15] : memref<1x1x1x8xf32, #tpu.memory_space<vmem>>, vector<1x1x1x8xf32>
    %10 = vector.shape_cast %9 : vector<1x1x1x8xf32> to vector<1x8xf32>
    %11 = vector.shape_cast %10 : vector<1x8xf32> to vector<1x1x8xf32>
    %12 = vector.broadcast %11 : vector<1x1x8xf32> to vector<4x8x8xf32>
    %13 = arith.addf %8, %12 : vector<4x8x8xf32>
    %cst_16 = arith.constant dense<0xFF800000> : vector<4x8xf32>
    %14 = vector.multi_reduction <maximumf>, %13, %cst_16 [2] : vector<4x8x8xf32> to vector<4x8xf32>
    %15 = vector.shape_cast %14 : vector<4x8xf32> to vector<4x8x1xf32>
    %16 = vector.broadcast %15 : vector<4x8x1xf32> to vector<4x8x8xf32>
    %17 = arith.subf %13, %16 : vector<4x8x8xf32>
    %18 = math.exp %17 : vector<4x8x8xf32>
    %cst_17 = arith.constant dense<0.000000e+00> : vector<4x8xf32>
    %19 = vector.multi_reduction <add>, %18, %cst_17 [2] : vector<4x8x8xf32> to vector<4x8xf32>
    %20 = vector.shape_cast %19 : vector<4x8xf32> to vector<4x8x1xf32>
    %21 = tpu.reciprocal %20 {approx = true} : vector<4x8x1xf32> -> vector<4x8x1xf32>
    %22 = vector.broadcast %21 : vector<4x8x1xf32> to vector<4x8x8xf32>
    %23 = arith.mulf %18, %22 : vector<4x8x8xf32>
    %24 = arith.truncf %23 : vector<4x8x8xf32> to vector<4x8x8xbf16>
    "tpu.trace_start"() <{level = 10 : i32, message = "hqk,hkd->hqd"}> : () -> ()
    %cst_18 = arith.constant dense<0.000000e+00> : vector<4x8x8xf32>
    %25 = tpu.matmul %24, %5, %cst_18 {dimension_numbers = #tpu.dot_dimension_numbers<[2], [1], [1], [2], [0, 0, 0, 1, 1, 2], [0], [0]>} : vector<4x8x8xbf16>, vector<4x8x8xbf16>, vector<4x8x8xf32> -> vector<4x8x8xf32>
    "tpu.trace_stop"() : () -> ()
    %26 = arith.truncf %25 : vector<4x8x8xf32> to vector<4x8x8xbf16>
    %c0_19 = arith.constant 0 : index
    %c0_20 = arith.constant 0 : index
    %c0_21 = arith.constant 0 : index
    %c0_22 = arith.constant 0 : index
    %27 = vector.load %arg5[%c0_19, %c0_20, %c0_21, %c0_22] : memref<1x4x8x8xbf16, #tpu.memory_space<vmem>>, vector<1x4x8x8xbf16>
    %28 = vector.shape_cast %27 : vector<1x4x8x8xbf16> to vector<4x8x8xbf16>
    %29 = vector.shape_cast %26 : vector<4x8x8xbf16> to vector<1x4x8x8xbf16>
    tpu.vector_store %arg5[%c0_19, %c0_20, %c0_21, %c0_22], %29 {strides = array<i32>} : memref<1x4x8x8xbf16, #tpu.memory_space<vmem>>, vector<1x4x8x8xbf16>,
    return
  }
  func.func @transform_0(%arg0: i32) -> (i32, i32, i32, i32) {
    %c0_i32 = arith.constant 0 : i32
    %c0_i32_0 = arith.constant 0 : i32
    %c0_i32_1 = arith.constant 0 : i32
    %c0_i32_2 = arith.constant 0 : i32
    return %arg0, %c0_i32, %c0_i32_0, %c0_i32_1 : i32, i32, i32, i32
  }
  func.func @transform_1(%arg0: i32) -> (i32, i32, i32, i32) {
    %c0_i32 = arith.constant 0 : i32
    %c0_i32_0 = arith.constant 0 : i32
    %c0_i32_1 = arith.constant 0 : i32
    %c0_i32_2 = arith.constant 0 : i32
    return %arg0, %c0_i32, %c0_i32_0, %c0_i32_1 : i32, i32, i32, i32
  }
  func.func @transform_2(%arg0: i32) -> (i32, i32, i32, i32) {
    %c0_i32 = arith.constant 0 : i32
    %c0_i32_0 = arith.constant 0 : i32
    %c0_i32_1 = arith.constant 0 : i32
    %c0_i32_2 = arith.constant 0 : i32
    return %arg0, %c0_i32, %c0_i32_0, %c0_i32_1 : i32, i32, i32, i32
  }
  func.func @transform_3(%arg0: i32) -> (i32, i32, i32, i32) {
    %c0_i32 = arith.constant 0 : i32
    %c0_i32_0 = arith.constant 0 : i32
    %c0_i32_1 = arith.constant 0 : i32
    %c0_i32_2 = arith.constant 0 : i32
    return %arg0, %c0_i32, %c0_i32_0, %c0_i32_1 : i32, i32, i32, i32
  }
  func.func @transform_4(%arg0: i32) -> (i32, i32, i32, i32) {
    %c0_i32 = arith.constant 0 : i32
    %c0_i32_0 = arith.constant 0 : i32
    %c0_i32_1 = arith.constant 0 : i32
    %c0_i32_2 = arith.constant 0 : i32
    return %arg0, %c0_i32, %c0_i32_0, %c0_i32_1 : i32, i32, i32, i32
  }
}

module attributes {stable_mosaic.version = 11 : i64} {
  func.func @_linear_res_ln_kernel(%arg0: i32, %arg1: i32, %arg2: memref<16x32xbf16, #tpu.memory_space<vmem>>, %arg3: memref<32x32xbf16, #tpu.memory_space<vmem>>, %arg4: memref<1x32xf32, #tpu.memory_space<vmem>>, %arg5: memref<16x32xbf16, #tpu.memory_space<vmem>>, %arg6: memref<1x32xf32, #tpu.memory_space<vmem>>, %arg7: memref<1x32xf32, #tpu.memory_space<vmem>>, %arg8: memref<16x32xbf16, #tpu.memory_space<vmem>>, %arg9: memref<16x32xf32, #tpu.memory_space<vmem>>) attributes {dimension_semantics = [#tpu.dimension_semantics<parallel>, #tpu.dimension_semantics<arbitrary>], iteration_bounds = array<i64: 1, 1>, scalar_prefetch = 0 : i64, scratch_operands = 1 : i64, tpu.core_type = #tpu.core_type<tc>, window_params = [{transform_indices = @transform_0, window_bounds = array<i64: 16, 32>}, {transform_indices = @transform_1, window_bounds = array<i64: 32, 32>}, {pipeline_mode = #tpu.pipeline_mode<synchronous>, transform_indices = @transform_2, window_bounds = array<i64: 1, 32>}, {transform_indices = @transform_3, window_bounds = array<i64: 16, 32>}, {pipeline_mode = #tpu.pipeline_mode<synchronous>, transform_indices = @transform_4, window_bounds = array<i64: 1, 32>}, {pipeline_mode = #tpu.pipeline_mode<synchronous>, transform_indices = @transform_5, window_bounds = array<i64: 1, 32>}, {transform_indices = @transform_6, window_bounds = array<i64: 16, 32>}]} {
    %c0_i32 = arith.constant 0 : i32
    %0 = arith.cmpi eq, %arg1, %c0_i32 : i32
    %1 = arith.extui %0 : i1 to i32
    %c0_i32_0 = arith.constant 0 : i32
    %2 = arith.cmpi ne, %1, %c0_i32_0 : i32
    scf.if %2 {
      %cst_10 = arith.constant 0.000000e+00 : f32
      %12 = vector.broadcast %cst_10 : f32 to vector<16x32xf32>
      %c0_11 = arith.constant 0 : index
      %c0_12 = arith.constant 0 : index
      %13 = vector.load %arg9[%c0_11, %c0_12] : memref<16x32xf32, #tpu.memory_space<vmem>>, vector<16x32xf32>
      tpu.vector_store %arg9[%c0_11, %c0_12], %12 {strides = array<i32>} : memref<16x32xf32, #tpu.memory_space<vmem>>, vector<16x32xf32>,
    } else {
    }
    %c0 = arith.constant 0 : index
    %c0_1 = arith.constant 0 : index
    %3 = vector.load %arg9[%c0, %c0_1] : memref<16x32xf32, #tpu.memory_space<vmem>>, vector<16x32xf32>
    %c0_2 = arith.constant 0 : index
    %c0_3 = arith.constant 0 : index
    %4 = vector.load %arg2[%c0_2, %c0_3] : memref<16x32xbf16, #tpu.memory_space<vmem>>, vector<16x32xbf16>
    %c0_4 = arith.constant 0 : index
    %c0_5 = arith.constant 0 : index
    %5 = vector.load %arg3[%c0_4, %c0_5] : memref<32x32xbf16, #tpu.memory_space<vmem>>, vector<32x32xbf16>
    %cst = arith.constant dense<0.000000e+00> : vector<16x32xf32>
    %6 = tpu.matmul %4, %5, %cst {dimension_numbers = #tpu.dot_dimension_numbers<[1], [0], [0], [1], [0, 0, 1, 1], [], []>} : vector<16x32xbf16>, vector<32x32xbf16>, vector<16x32xf32> -> vector<16x32xf32>
    %7 = arith.addf %3, %6 : vector<16x32xf32>
    %c0_6 = arith.constant 0 : index
    %c0_7 = arith.constant 0 : index
    %8 = vector.load %arg9[%c0_6, %c0_7] : memref<16x32xf32, #tpu.memory_space<vmem>>, vector<16x32xf32>
    tpu.vector_store %arg9[%c0_6, %c0_7], %7 {strides = array<i32>} : memref<16x32xf32, #tpu.memory_space<vmem>>, vector<16x32xf32>,
    %c0_i32_8 = arith.constant 0 : i32
    %9 = arith.cmpi eq, %arg1, %c0_i32_8 : i32
    %10 = arith.extui %9 : i1 to i32
    %c0_i32_9 = arith.constant 0 : i32
    %11 = arith.cmpi ne, %10, %c0_i32_9 : i32
    scf.if %11 {
      %c0_10 = arith.constant 0 : index
      %c0_11 = arith.constant 0 : index
      %12 = vector.load %arg9[%c0_10, %c0_11] : memref<16x32xf32, #tpu.memory_space<vmem>>, vector<16x32xf32>
      %c0_12 = arith.constant 0 : index
      %c0_13 = arith.constant 0 : index
      %13 = vector.load %arg4[%c0_12, %c0_13] : memref<1x32xf32, #tpu.memory_space<vmem>>, vector<1x32xf32>
      %14 = vector.broadcast %13 : vector<1x32xf32> to vector<16x32xf32>
      %15 = arith.addf %12, %14 : vector<16x32xf32>
      %c0_14 = arith.constant 0 : index
      %c0_15 = arith.constant 0 : index
      %16 = vector.load %arg5[%c0_14, %c0_15] : memref<16x32xbf16, #tpu.memory_space<vmem>>, vector<16x32xbf16>
      %17 = arith.extf %16 : vector<16x32xbf16> to vector<16x32xf32>
      %18 = arith.addf %15, %17 : vector<16x32xf32>
      %cst_16 = arith.constant dense<0.000000e+00> : vector<16xf32>
      %19 = vector.multi_reduction <add>, %18, %cst_16 [1] : vector<16x32xf32> to vector<16xf32>
      %20 = vector.shape_cast %19 : vector<16xf32> to vector<16x1xf32>
      %cst_17 = arith.constant 3.200000e+01 : f32
      %21 = vector.broadcast %cst_17 : f32 to vector<16x1xf32>
      %22 = arith.divf %20, %21 : vector<16x1xf32>
      %23 = vector.broadcast %22 : vector<16x1xf32> to vector<16x32xf32>
      %24 = arith.subf %18, %23 : vector<16x32xf32>
      %25 = arith.mulf %24, %24 : vector<16x32xf32>
      %cst_18 = arith.constant dense<0.000000e+00> : vector<16xf32>
      %26 = vector.multi_reduction <add>, %25, %cst_18 [1] : vector<16x32xf32> to vector<16xf32>
      %27 = vector.shape_cast %26 : vector<16xf32> to vector<16x1xf32>
      %cst_19 = arith.constant 3.200000e+01 : f32
      %28 = vector.broadcast %cst_19 : f32 to vector<16x1xf32>
      %29 = arith.divf %27, %28 : vector<16x1xf32>
      %cst_20 = arith.constant 9.99999996E-13 : f32
      %30 = vector.broadcast %cst_20 : f32 to vector<16x1xf32>
      %31 = arith.addf %29, %30 : vector<16x1xf32>
      %32 = math.rsqrt %31 : vector<16x1xf32>
      %33 = vector.broadcast %32 : vector<16x1xf32> to vector<16x32xf32>
      %34 = arith.mulf %24, %33 : vector<16x32xf32>
      %c0_21 = arith.constant 0 : index
      %c0_22 = arith.constant 0 : index
      %35 = vector.load %arg6[%c0_21, %c0_22] : memref<1x32xf32, #tpu.memory_space<vmem>>, vector<1x32xf32>
      %36 = vector.broadcast %35 : vector<1x32xf32> to vector<16x32xf32>
      %37 = arith.mulf %34, %36 : vector<16x32xf32>
      %c0_23 = arith.constant 0 : index
      %c0_24 = arith.constant 0 : index
      %38 = vector.load %arg7[%c0_23, %c0_24] : memref<1x32xf32, #tpu.memory_space<vmem>>, vector<1x32xf32>
      %39 = vector.broadcast %38 : vector<1x32xf32> to vector<16x32xf32>
      %40 = arith.addf %37, %39 : vector<16x32xf32>
      %41 = arith.truncf %40 : vector<16x32xf32> to vector<16x32xbf16>
      %c0_25 = arith.constant 0 : index
      %c0_26 = arith.constant 0 : index
      %42 = vector.load %arg8[%c0_25, %c0_26] : memref<16x32xbf16, #tpu.memory_space<vmem>>, vector<16x32xbf16>
      tpu.vector_store %arg8[%c0_25, %c0_26], %41 {strides = array<i32>} : memref<16x32xbf16, #tpu.memory_space<vmem>>, vector<16x32xbf16>,
    } else {
    }
    return
  }
  func.func @transform_0(%arg0: i32, %arg1: i32) -> (i32, i32) {
    %c0_i32 = arith.constant 0 : i32
    return %arg0, %arg1 : i32, i32
  }
  func.func @transform_1(%arg0: i32, %arg1: i32) -> (i32, i32) {
    %c0_i32 = arith.constant 0 : i32
    %c0_i32_0 = arith.constant 0 : i32
    return %arg1, %c0_i32 : i32, i32
  }
  func.func @transform_2(%arg0: i32, %arg1: i32) -> (i32, i32) {
    %c0_i32 = arith.constant 0 : i32
    %c0_i32_0 = arith.constant 0 : i32
    %c0_i32_1 = arith.constant 0 : i32
    return %c0_i32, %c0_i32_0 : i32, i32
  }
  func.func @transform_3(%arg0: i32, %arg1: i32) -> (i32, i32) {
    %c0_i32 = arith.constant 0 : i32
    %c0_i32_0 = arith.constant 0 : i32
    return %arg0, %c0_i32 : i32, i32
  }
  func.func @transform_4(%arg0: i32, %arg1: i32) -> (i32, i32) {
    %c0_i32 = arith.constant 0 : i32
    %c0_i32_0 = arith.constant 0 : i32
    %c0_i32_1 = arith.constant 0 : i32
    return %c0_i32, %c0_i32_0 : i32, i32
  }
  func.func @transform_5(%arg0: i32, %arg1: i32) -> (i32, i32) {
    %c0_i32 = arith.constant 0 : i32
    %c0_i32_0 = arith.constant 0 : i32
    %c0_i32_1 = arith.constant 0 : i32
    return %c0_i32, %c0_i32_0 : i32, i32
  }
  func.func @transform_6(%arg0: i32, %arg1: i32) -> (i32, i32) {
    %c0_i32 = arith.constant 0 : i32
    %c0_i32_0 = arith.constant 0 : i32
    return %arg0, %c0_i32 : i32, i32
  }
}

module attributes {stable_mosaic.version = 11 : i64} {
  func.func @_linear_kernel(%arg0: i32, %arg1: i32, %arg2: i32, %arg3: memref<16x32xbf16, #tpu.memory_space<vmem>>, %arg4: memref<32x64xbf16, #tpu.memory_space<vmem>>, %arg5: memref<1x64xf32, #tpu.memory_space<vmem>>, %arg6: memref<16x64xbf16, #tpu.memory_space<vmem>>, %arg7: memref<16x64xf32, #tpu.memory_space<vmem>>) attributes {dimension_semantics = [#tpu.dimension_semantics<parallel>, #tpu.dimension_semantics<parallel>, #tpu.dimension_semantics<arbitrary>], iteration_bounds = array<i64: 1, 1, 1>, scalar_prefetch = 0 : i64, scratch_operands = 1 : i64, tpu.core_type = #tpu.core_type<tc>, window_params = [{transform_indices = @transform_0, window_bounds = array<i64: 16, 32>}, {transform_indices = @transform_1, window_bounds = array<i64: 32, 64>}, {transform_indices = @transform_2, window_bounds = array<i64: 1, 64>}, {transform_indices = @transform_3, window_bounds = array<i64: 16, 64>}]} {
    %c0_i32 = arith.constant 0 : i32
    %0 = arith.cmpi eq, %arg2, %c0_i32 : i32
    %1 = arith.extui %0 : i1 to i32
    %c0_i32_0 = arith.constant 0 : i32
    %2 = arith.cmpi ne, %1, %c0_i32_0 : i32
    scf.if %2 {
      %cst_10 = arith.constant 0.000000e+00 : f32
      %12 = vector.broadcast %cst_10 : f32 to vector<16x64xf32>
      %c0_11 = arith.constant 0 : index
      %c0_12 = arith.constant 0 : index
      %13 = vector.load %arg7[%c0_11, %c0_12] : memref<16x64xf32, #tpu.memory_space<vmem>>, vector<16x64xf32>
      tpu.vector_store %arg7[%c0_11, %c0_12], %12 {strides = array<i32>} : memref<16x64xf32, #tpu.memory_space<vmem>>, vector<16x64xf32>,
    } else {
    }
    %c0 = arith.constant 0 : index
    %c0_1 = arith.constant 0 : index
    %3 = vector.load %arg7[%c0, %c0_1] : memref<16x64xf32, #tpu.memory_space<vmem>>, vector<16x64xf32>
    %c0_2 = arith.constant 0 : index
    %c0_3 = arith.constant 0 : index
    %4 = vector.load %arg3[%c0_2, %c0_3] : memref<16x32xbf16, #tpu.memory_space<vmem>>, vector<16x32xbf16>
    %c0_4 = arith.constant 0 : index
    %c0_5 = arith.constant 0 : index
    %5 = vector.load %arg4[%c0_4, %c0_5] : memref<32x64xbf16, #tpu.memory_space<vmem>>, vector<32x64xbf16>
    %cst = arith.constant dense<0.000000e+00> : vector<16x64xf32>
    %6 = tpu.matmul %4, %5, %cst {dimension_numbers = #tpu.dot_dimension_numbers<[1], [0], [0], [1], [0, 0, 1, 1], [], []>} : vector<16x32xbf16>, vector<32x64xbf16>, vector<16x64xf32> -> vector<16x64xf32>
    %7 = arith.addf %3, %6 : vector<16x64xf32>
    %c0_6 = arith.constant 0 : index
    %c0_7 = arith.constant 0 : index
    %8 = vector.load %arg7[%c0_6, %c0_7] : memref<16x64xf32, #tpu.memory_space<vmem>>, vector<16x64xf32>
    tpu.vector_store %arg7[%c0_6, %c0_7], %7 {strides = array<i32>} : memref<16x64xf32, #tpu.memory_space<vmem>>, vector<16x64xf32>,
    %c0_i32_8 = arith.constant 0 : i32
    %9 = arith.cmpi eq, %arg2, %c0_i32_8 : i32
    %10 = arith.extui %9 : i1 to i32
    %c0_i32_9 = arith.constant 0 : i32
    %11 = arith.cmpi ne, %10, %c0_i32_9 : i32
    scf.if %11 {
      %c0_10 = arith.constant 0 : index
      %c0_11 = arith.constant 0 : index
      %12 = vector.load %arg7[%c0_10, %c0_11] : memref<16x64xf32, #tpu.memory_space<vmem>>, vector<16x64xf32>
      %c0_12 = arith.constant 0 : index
      %c0_13 = arith.constant 0 : index
      %13 = vector.load %arg5[%c0_12, %c0_13] : memref<1x64xf32, #tpu.memory_space<vmem>>, vector<1x64xf32>
      %14 = vector.broadcast %13 : vector<1x64xf32> to vector<16x64xf32>
      %15 = arith.addf %12, %14 : vector<16x64xf32>
      %16 = arith.mulf %15, %15 : vector<16x64xf32>
      %17 = arith.mulf %15, %16 : vector<16x64xf32>
      %cst_14 = arith.constant 4.471500e-02 : f32
      %18 = vector.broadcast %cst_14 : f32 to vector<16x64xf32>
      %19 = arith.mulf %18, %17 : vector<16x64xf32>
      %20 = arith.addf %15, %19 : vector<16x64xf32>
      %cst_15 = arith.constant 0.797884583 : f32
      %21 = vector.broadcast %cst_15 : f32 to vector<16x64xf32>
      %22 = arith.mulf %21, %20 : vector<16x64xf32>
      %23 = math.tanh %22 : vector<16x64xf32>
      %cst_16 = arith.constant 1.000000e+00 : f32
      %24 = vector.broadcast %cst_16 : f32 to vector<16x64xf32>
      %25 = arith.addf %24, %23 : vector<16x64xf32>
      %cst_17 = arith.constant 5.000000e-01 : f32
      %26 = vector.broadcast %cst_17 : f32 to vector<16x64xf32>
      %27 = arith.mulf %26, %25 : vector<16x64xf32>
      %28 = arith.mulf %15, %27 : vector<16x64xf32>
      %29 = arith.truncf %28 : vector<16x64xf32> to vector<16x64xbf16>
      %c0_18 = arith.constant 0 : index
      %c0_19 = arith.constant 0 : index
      %30 = vector.load %arg6[%c0_18, %c0_19] : memref<16x64xbf16, #tpu.memory_space<vmem>>, vector<16x64xbf16>
      tpu.vector_store %arg6[%c0_18, %c0_19], %29 {strides = array<i32>} : memref<16x64xbf16, #tpu.memory_space<vmem>>, vector<16x64xbf16>,
    } else {
    }
    return
  }
  func.func @transform_0(%arg0: i32, %arg1: i32, %arg2: i32) -> (i32, i32) {
    %c0_i32 = arith.constant 0 : i32
    return %arg0, %arg2 : i32, i32
  }
  func.func @transform_1(%arg0: i32, %arg1: i32, %arg2: i32) -> (i32, i32) {
    %c0_i32 = arith.constant 0 : i32
    return %arg2, %arg1 : i32, i32
  }
  func.func @transform_2(%arg0: i32, %arg1: i32, %arg2: i32) -> (i32, i32) {
    %c0_i32 = arith.constant 0 : i32
    %c0_i32_0 = arith.constant 0 : i32
    return %c0_i32, %arg1 : i32, i32
  }
  func.func @transform_3(%arg0: i32, %arg1: i32, %arg2: i32) -> (i32, i32) {
    %c0_i32 = arith.constant 0 : i32
    return %arg0, %arg1 : i32, i32
  }
}

module attributes {stable_mosaic.version = 11 : i64} {
  func.func @_linear_res_ln_kernel(%arg0: i32, %arg1: i32, %arg2: memref<16x64xbf16, #tpu.memory_space<vmem>>, %arg3: memref<64x32xbf16, #tpu.memory_space<vmem>>, %arg4: memref<1x32xf32, #tpu.memory_space<vmem>>, %arg5: memref<16x32xbf16, #tpu.memory_space<vmem>>, %arg6: memref<1x32xf32, #tpu.memory_space<vmem>>, %arg7: memref<1x32xf32, #tpu.memory_space<vmem>>, %arg8: memref<16x32xbf16, #tpu.memory_space<vmem>>, %arg9: memref<16x32xf32, #tpu.memory_space<vmem>>) attributes {dimension_semantics = [#tpu.dimension_semantics<parallel>, #tpu.dimension_semantics<arbitrary>], iteration_bounds = array<i64: 1, 1>, scalar_prefetch = 0 : i64, scratch_operands = 1 : i64, tpu.core_type = #tpu.core_type<tc>, window_params = [{transform_indices = @transform_0, window_bounds = array<i64: 16, 64>}, {transform_indices = @transform_1, window_bounds = array<i64: 64, 32>}, {pipeline_mode = #tpu.pipeline_mode<synchronous>, transform_indices = @transform_2, window_bounds = array<i64: 1, 32>}, {transform_indices = @transform_3, window_bounds = array<i64: 16, 32>}, {pipeline_mode = #tpu.pipeline_mode<synchronous>, transform_indices = @transform_4, window_bounds = array<i64: 1, 32>}, {pipeline_mode = #tpu.pipeline_mode<synchronous>, transform_indices = @transform_5, window_bounds = array<i64: 1, 32>}, {transform_indices = @transform_6, window_bounds = array<i64: 16, 32>}]} {
    %c0_i32 = arith.constant 0 : i32
    %0 = arith.cmpi eq, %arg1, %c0_i32 : i32
    %1 = arith.extui %0 : i1 to i32
    %c0_i32_0 = arith.constant 0 : i32
    %2 = arith.cmpi ne, %1, %c0_i32_0 : i32
    scf.if %2 {
      %cst_10 = arith.constant 0.000000e+00 : f32
      %12 = vector.broadcast %cst_10 : f32 to vector<16x32xf32>
      %c0_11 = arith.constant 0 : index
      %c0_12 = arith.constant 0 : index
      %13 = vector.load %arg9[%c0_11, %c0_12] : memref<16x32xf32, #tpu.memory_space<vmem>>, vector<16x32xf32>
      tpu.vector_store %arg9[%c0_11, %c0_12], %12 {strides = array<i32>} : memref<16x32xf32, #tpu.memory_space<vmem>>, vector<16x32xf32>,
    } else {
    }
    %c0 = arith.constant 0 : index
    %c0_1 = arith.constant 0 : index
    %3 = vector.load %arg9[%c0, %c0_1] : memref<16x32xf32, #tpu.memory_space<vmem>>, vector<16x32xf32>
    %c0_2 = arith.constant 0 : index
    %c0_3 = arith.constant 0 : index
    %4 = vector.load %arg2[%c0_2, %c0_3] : memref<16x64xbf16, #tpu.memory_space<vmem>>, vector<16x64xbf16>
    %c0_4 = arith.constant 0 : index
    %c0_5 = arith.constant 0 : index
    %5 = vector.load %arg3[%c0_4, %c0_5] : memref<64x32xbf16, #tpu.memory_space<vmem>>, vector<64x32xbf16>
    %cst = arith.constant dense<0.000000e+00> : vector<16x32xf32>
    %6 = tpu.matmul %4, %5, %cst {dimension_numbers = #tpu.dot_dimension_numbers<[1], [0], [0], [1], [0, 0, 1, 1], [], []>} : vector<16x64xbf16>, vector<64x32xbf16>, vector<16x32xf32> -> vector<16x32xf32>
    %7 = arith.addf %3, %6 : vector<16x32xf32>
    %c0_6 = arith.constant 0 : index
    %c0_7 = arith.constant 0 : index
    %8 = vector.load %arg9[%c0_6, %c0_7] : memref<16x32xf32, #tpu.memory_space<vmem>>, vector<16x32xf32>
    tpu.vector_store %arg9[%c0_6, %c0_7], %7 {strides = array<i32>} : memref<16x32xf32, #tpu.memory_space<vmem>>, vector<16x32xf32>,
    %c0_i32_8 = arith.constant 0 : i32
    %9 = arith.cmpi eq, %arg1, %c0_i32_8 : i32
    %10 = arith.extui %9 : i1 to i32
    %c0_i32_9 = arith.constant 0 : i32
    %11 = arith.cmpi ne, %10, %c0_i32_9 : i32
    scf.if %11 {
      %c0_10 = arith.constant 0 : index
      %c0_11 = arith.constant 0 : index
      %12 = vector.load %arg9[%c0_10, %c0_11] : memref<16x32xf32, #tpu.memory_space<vmem>>, vector<16x32xf32>
      %c0_12 = arith.constant 0 : index
      %c0_13 = arith.constant 0 : index
      %13 = vector.load %arg4[%c0_12, %c0_13] : memref<1x32xf32, #tpu.memory_space<vmem>>, vector<1x32xf32>
      %14 = vector.broadcast %13 : vector<1x32xf32> to vector<16x32xf32>
      %15 = arith.addf %12, %14 : vector<16x32xf32>
      %c0_14 = arith.constant 0 : index
      %c0_15 = arith.constant 0 : index
      %16 = vector.load %arg5[%c0_14, %c0_15] : memref<16x32xbf16, #tpu.memory_space<vmem>>, vector<16x32xbf16>
      %17 = arith.extf %16 : vector<16x32xbf16> to vector<16x32xf32>
      %18 = arith.addf %15, %17 : vector<16x32xf32>
      %cst_16 = arith.constant dense<0.000000e+00> : vector<16xf32>
      %19 = vector.multi_reduction <add>, %18, %cst_16 [1] : vector<16x32xf32> to vector<16xf32>
      %20 = vector.shape_cast %19 : vector<16xf32> to vector<16x1xf32>
      %cst_17 = arith.constant 3.200000e+01 : f32
      %21 = vector.broadcast %cst_17 : f32 to vector<16x1xf32>
      %22 = arith.divf %20, %21 : vector<16x1xf32>
      %23 = vector.broadcast %22 : vector<16x1xf32> to vector<16x32xf32>
      %24 = arith.subf %18, %23 : vector<16x32xf32>
      %25 = arith.mulf %24, %24 : vector<16x32xf32>
      %cst_18 = arith.constant dense<0.000000e+00> : vector<16xf32>
      %26 = vector.multi_reduction <add>, %25, %cst_18 [1] : vector<16x32xf32> to vector<16xf32>
      %27 = vector.shape_cast %26 : vector<16xf32> to vector<16x1xf32>
      %cst_19 = arith.constant 3.200000e+01 : f32
      %28 = vector.broadcast %cst_19 : f32 to vector<16x1xf32>
      %29 = arith.divf %27, %28 : vector<16x1xf32>
      %cst_20 = arith.constant 9.99999996E-13 : f32
      %30 = vector.broadcast %cst_20 : f32 to vector<16x1xf32>
      %31 = arith.addf %29, %30 : vector<16x1xf32>
      %32 = math.rsqrt %31 : vector<16x1xf32>
      %33 = vector.broadcast %32 : vector<16x1xf32> to vector<16x32xf32>
      %34 = arith.mulf %24, %33 : vector<16x32xf32>
      %c0_21 = arith.constant 0 : index
      %c0_22 = arith.constant 0 : index
      %35 = vector.load %arg6[%c0_21, %c0_22] : memref<1x32xf32, #tpu.memory_space<vmem>>, vector<1x32xf32>
      %36 = vector.broadcast %35 : vector<1x32xf32> to vector<16x32xf32>
      %37 = arith.mulf %34, %36 : vector<16x32xf32>
      %c0_23 = arith.constant 0 : index
      %c0_24 = arith.constant 0 : index
      %38 = vector.load %arg7[%c0_23, %c0_24] : memref<1x32xf32, #tpu.memory_space<vmem>>, vector<1x32xf32>
      %39 = vector.broadcast %38 : vector<1x32xf32> to vector<16x32xf32>
      %40 = arith.addf %37, %39 : vector<16x32xf32>
      %41 = arith.truncf %40 : vector<16x32xf32> to vector<16x32xbf16>
      %c0_25 = arith.constant 0 : index
      %c0_26 = arith.constant 0 : index
      %42 = vector.load %arg8[%c0_25, %c0_26] : memref<16x32xbf16, #tpu.memory_space<vmem>>, vector<16x32xbf16>
      tpu.vector_store %arg8[%c0_25, %c0_26], %41 {strides = array<i32>} : memref<16x32xbf16, #tpu.memory_space<vmem>>, vector<16x32xbf16>,
    } else {
    }
    return
  }
  func.func @transform_0(%arg0: i32, %arg1: i32) -> (i32, i32) {
    %c0_i32 = arith.constant 0 : i32
    return %arg0, %arg1 : i32, i32
  }
  func.func @transform_1(%arg0: i32, %arg1: i32) -> (i32, i32) {
    %c0_i32 = arith.constant 0 : i32
    %c0_i32_0 = arith.constant 0 : i32
    return %arg1, %c0_i32 : i32, i32
  }
  func.func @transform_2(%arg0: i32, %arg1: i32) -> (i32, i32) {
    %c0_i32 = arith.constant 0 : i32
    %c0_i32_0 = arith.constant 0 : i32
    %c0_i32_1 = arith.constant 0 : i32
    return %c0_i32, %c0_i32_0 : i32, i32
  }
  func.func @transform_3(%arg0: i32, %arg1: i32) -> (i32, i32) {
    %c0_i32 = arith.constant 0 : i32
    %c0_i32_0 = arith.constant 0 : i32
    return %arg0, %c0_i32 : i32, i32
  }
  func.func @transform_4(%arg0: i32, %arg1: i32) -> (i32, i32) {
    %c0_i32 = arith.constant 0 : i32
    %c0_i32_0 = arith.constant 0 : i32
    %c0_i32_1 = arith.constant 0 : i32
    return %c0_i32, %c0_i32_0 : i32, i32
  }
  func.func @transform_5(%arg0: i32, %arg1: i32) -> (i32, i32) {
    %c0_i32 = arith.constant 0 : i32
    %c0_i32_0 = arith.constant 0 : i32
    %c0_i32_1 = arith.constant 0 : i32
    return %c0_i32, %c0_i32_0 : i32, i32
  }
  func.func @transform_6(%arg0: i32, %arg1: i32) -> (i32, i32) {
    %c0_i32 = arith.constant 0 : i32
    %c0_i32_0 = arith.constant 0 : i32
    return %arg0, %c0_i32 : i32, i32
  }
}

module attributes {stable_mosaic.version = 11 : i64} {
  func.func @_linear_kernel(%arg0: i32, %arg1: i32, %arg2: i32, %arg3: memref<2x512xbf16, #tpu.memory_space<vmem>>, %arg4: memref<512x512xbf16, #tpu.memory_space<vmem>>, %arg5: memref<1x512xf32, #tpu.memory_space<vmem>>, %arg6: memref<2x512xbf16, #tpu.memory_space<vmem>>, %arg7: memref<2x512xf32, #tpu.memory_space<vmem>>) attributes {dimension_semantics = [#tpu.dimension_semantics<parallel>, #tpu.dimension_semantics<parallel>, #tpu.dimension_semantics<arbitrary>], iteration_bounds = array<i64: 1, 4, 4>, scalar_prefetch = 0 : i64, scratch_operands = 1 : i64, tpu.core_type = #tpu.core_type<tc>, window_params = [{transform_indices = @transform_0, window_bounds = array<i64: 2, 512>}, {transform_indices = @transform_1, window_bounds = array<i64: 512, 512>}, {transform_indices = @transform_2, window_bounds = array<i64: 1, 512>}, {transform_indices = @transform_3, window_bounds = array<i64: 2, 512>}]} {
    %c0_i32 = arith.constant 0 : i32
    %0 = arith.cmpi eq, %arg2, %c0_i32 : i32
    %1 = arith.extui %0 : i1 to i32
    %c0_i32_0 = arith.constant 0 : i32
    %2 = arith.cmpi ne, %1, %c0_i32_0 : i32
    scf.if %2 {
      %cst_9 = arith.constant 0.000000e+00 : f32
      %12 = vector.broadcast %cst_9 : f32 to vector<2x512xf32>
      %c0_10 = arith.constant 0 : index
      %c0_11 = arith.constant 0 : index
      %13 = vector.load %arg7[%c0_10, %c0_11] : memref<2x512xf32, #tpu.memory_space<vmem>>, vector<2x512xf32>
      tpu.vector_store %arg7[%c0_10, %c0_11], %12 {strides = array<i32>} : memref<2x512xf32, #tpu.memory_space<vmem>>, vector<2x512xf32>,
    } else {
    }
    %c0 = arith.constant 0 : index
    %c0_1 = arith.constant 0 : index
    %3 = vector.load %arg7[%c0, %c0_1] : memref<2x512xf32, #tpu.memory_space<vmem>>, vector<2x512xf32>
    %c0_2 = arith.constant 0 : index
    %c0_3 = arith.constant 0 : index
    %4 = vector.load %arg3[%c0_2, %c0_3] : memref<2x512xbf16, #tpu.memory_space<vmem>>, vector<2x512xbf16>
    %c0_4 = arith.constant 0 : index
    %c0_5 = arith.constant 0 : index
    %5 = vector.load %arg4[%c0_4, %c0_5] : memref<512x512xbf16, #tpu.memory_space<vmem>>, vector<512x512xbf16>
    %cst = arith.constant dense<0.000000e+00> : vector<2x512xf32>
    %6 = tpu.matmul %4, %5, %cst {dimension_numbers = #tpu.dot_dimension_numbers<[1], [0], [0], [1], [0, 0, 1, 1], [], []>} : vector<2x512xbf16>, vector<512x512xbf16>, vector<2x512xf32> -> vector<2x512xf32>
    %7 = arith.addf %3, %6 : vector<2x512xf32>
    %c0_6 = arith.constant 0 : index
    %c0_7 = arith.constant 0 : index
    %8 = vector.load %arg7[%c0_6, %c0_7] : memref<2x512xf32, #tpu.memory_space<vmem>>, vector<2x512xf32>
    tpu.vector_store %arg7[%c0_6, %c0_7], %7 {strides = array<i32>} : memref<2x512xf32, #tpu.memory_space<vmem>>, vector<2x512xf32>,
    %c3_i32 = arith.constant 3 : i32
    %9 = arith.cmpi eq, %arg2, %c3_i32 : i32
    %10 = arith.extui %9 : i1 to i32
    %c0_i32_8 = arith.constant 0 : i32
    %11 = arith.cmpi ne, %10, %c0_i32_8 : i32
    scf.if %11 {
      %c0_9 = arith.constant 0 : index
      %c0_10 = arith.constant 0 : index
      %12 = vector.load %arg7[%c0_9, %c0_10] : memref<2x512xf32, #tpu.memory_space<vmem>>, vector<2x512xf32>
      %c0_11 = arith.constant 0 : index
      %c0_12 = arith.constant 0 : index
      %13 = vector.load %arg5[%c0_11, %c0_12] : memref<1x512xf32, #tpu.memory_space<vmem>>, vector<1x512xf32>
      %14 = vector.broadcast %13 : vector<1x512xf32> to vector<2x512xf32>
      %15 = arith.addf %12, %14 : vector<2x512xf32>
      %16 = arith.truncf %15 : vector<2x512xf32> to vector<2x512xbf16>
      %c0_13 = arith.constant 0 : index
      %c0_14 = arith.constant 0 : index
      %17 = vector.load %arg6[%c0_13, %c0_14] : memref<2x512xbf16, #tpu.memory_space<vmem>>, vector<2x512xbf16>
      tpu.vector_store %arg6[%c0_13, %c0_14], %16 {strides = array<i32>} : memref<2x512xbf16, #tpu.memory_space<vmem>>, vector<2x512xbf16>,
    } else {
    }
    return
  }
  func.func @transform_0(%arg0: i32, %arg1: i32, %arg2: i32) -> (i32, i32) {
    %c0_i32 = arith.constant 0 : i32
    return %arg0, %arg2 : i32, i32
  }
  func.func @transform_1(%arg0: i32, %arg1: i32, %arg2: i32) -> (i32, i32) {
    %c0_i32 = arith.constant 0 : i32
    return %arg2, %arg1 : i32, i32
  }
  func.func @transform_2(%arg0: i32, %arg1: i32, %arg2: i32) -> (i32, i32) {
    %c0_i32 = arith.constant 0 : i32
    %c0_i32_0 = arith.constant 0 : i32
    return %c0_i32, %arg1 : i32, i32
  }
  func.func @transform_3(%arg0: i32, %arg1: i32, %arg2: i32) -> (i32, i32) {
    %c0_i32 = arith.constant 0 : i32
    return %arg0, %arg1 : i32, i32
  }
}

module attributes {stable_mosaic.version = 11 : i64} {
  func.func @_layernorm_kernel(%arg0: i32, %arg1: memref<2x2048xbf16, #tpu.memory_space<vmem>>, %arg2: memref<1x2048xf32, #tpu.memory_space<vmem>>, %arg3: memref<1x2048xf32, #tpu.memory_space<vmem>>, %arg4: memref<2x2048xbf16, #tpu.memory_space<vmem>>) attributes {dimension_semantics = [#tpu.dimension_semantics<parallel>], iteration_bounds = array<i64: 1>, scalar_prefetch = 0 : i64, scratch_operands = 0 : i64, tpu.core_type = #tpu.core_type<tc>, window_params = [{transform_indices = @transform_0, window_bounds = array<i64: 2, 2048>}, {pipeline_mode = #tpu.pipeline_mode<synchronous>, transform_indices = @transform_1, window_bounds = array<i64: 1, 2048>}, {pipeline_mode = #tpu.pipeline_mode<synchronous>, transform_indices = @transform_2, window_bounds = array<i64: 1, 2048>}, {transform_indices = @transform_3, window_bounds = array<i64: 2, 2048>}]} {
    %c0 = arith.constant 0 : index
    %c0_0 = arith.constant 0 : index
    %0 = vector.load %arg1[%c0, %c0_0] : memref<2x2048xbf16, #tpu.memory_space<vmem>>, vector<2x2048xbf16>
    %1 = arith.extf %0 : vector<2x2048xbf16> to vector<2x2048xf32>
    %cst = arith.constant dense<0.000000e+00> : vector<2xf32>
    %2 = vector.multi_reduction <add>, %1, %cst [1] : vector<2x2048xf32> to vector<2xf32>
    %3 = vector.shape_cast %2 : vector<2xf32> to vector<2x1xf32>
    %cst_1 = arith.constant 2.048000e+03 : f32
    %4 = vector.broadcast %cst_1 : f32 to vector<2x1xf32>
    %5 = arith.divf %3, %4 : vector<2x1xf32>
    %6 = vector.broadcast %5 : vector<2x1xf32> to vector<2x2048xf32>
    %7 = arith.subf %1, %6 : vector<2x2048xf32>
    %8 = arith.mulf %7, %7 : vector<2x2048xf32>
    %cst_2 = arith.constant dense<0.000000e+00> : vector<2xf32>
    %9 = vector.multi_reduction <add>, %8, %cst_2 [1] : vector<2x2048xf32> to vector<2xf32>
    %10 = vector.shape_cast %9 : vector<2xf32> to vector<2x1xf32>
    %cst_3 = arith.constant 2.048000e+03 : f32
    %11 = vector.broadcast %cst_3 : f32 to vector<2x1xf32>
    %12 = arith.divf %10, %11 : vector<2x1xf32>
    %cst_4 = arith.constant 9.99999974E-6 : f32
    %13 = vector.broadcast %cst_4 : f32 to vector<2x1xf32>
    %14 = arith.addf %12, %13 : vector<2x1xf32>
    %15 = math.rsqrt %14 : vector<2x1xf32>
    %16 = vector.broadcast %15 : vector<2x1xf32> to vector<2x2048xf32>
    %17 = arith.mulf %7, %16 : vector<2x2048xf32>
    %c0_5 = arith.constant 0 : index
    %c0_6 = arith.constant 0 : index
    %18 = vector.load %arg2[%c0_5, %c0_6] : memref<1x2048xf32, #tpu.memory_space<vmem>>, vector<1x2048xf32>
    %19 = vector.broadcast %18 : vector<1x2048xf32> to vector<2x2048xf32>
    %20 = arith.mulf %17, %19 : vector<2x2048xf32>
    %c0_7 = arith.constant 0 : index
    %c0_8 = arith.constant 0 : index
    %21 = vector.load %arg3[%c0_7, %c0_8] : memref<1x2048xf32, #tpu.memory_space<vmem>>, vector<1x2048xf32>
    %22 = vector.broadcast %21 : vector<1x2048xf32> to vector<2x2048xf32>
    %23 = arith.addf %20, %22 : vector<2x2048xf32>
    %24 = arith.truncf %23 : vector<2x2048xf32> to vector<2x2048xbf16>
    %c0_9 = arith.constant 0 : index
    %c0_10 = arith.constant 0 : index
    %25 = vector.load %arg4[%c0_9, %c0_10] : memref<2x2048xbf16, #tpu.memory_space<vmem>>, vector<2x2048xbf16>
    tpu.vector_store %arg4[%c0_9, %c0_10], %24 {strides = array<i32>} : memref<2x2048xbf16, #tpu.memory_space<vmem>>, vector<2x2048xbf16>,
    return
  }
  func.func @transform_0(%arg0: i32) -> (i32, i32) {
    %c0_i32 = arith.constant 0 : i32
    %c0_i32_0 = arith.constant 0 : i32
    return %arg0, %c0_i32 : i32, i32
  }
  func.func @transform_1(%arg0: i32) -> (i32, i32) {
    %c0_i32 = arith.constant 0 : i32
    %c0_i32_0 = arith.constant 0 : i32
    %c0_i32_1 = arith.constant 0 : i32
    return %c0_i32, %c0_i32_0 : i32, i32
  }
  func.func @transform_2(%arg0: i32) -> (i32, i32) {
    %c0_i32 = arith.constant 0 : i32
    %c0_i32_0 = arith.constant 0 : i32
    %c0_i32_1 = arith.constant 0 : i32
    return %c0_i32, %c0_i32_0 : i32, i32
  }
  func.func @transform_3(%arg0: i32) -> (i32, i32) {
    %c0_i32 = arith.constant 0 : i32
    %c0_i32_0 = arith.constant 0 : i32
    return %arg0, %c0_i32 : i32, i32
  }
}

module attributes {stable_mosaic.version = 11 : i64} {
  func.func @_classifier_kernel(%arg0: i32, %arg1: i32, %arg2: memref<16x2080xbf16, #tpu.memory_space<vmem>>, %arg3: memref<2080x32xbf16, #tpu.memory_space<vmem>>, %arg4: memref<1x32xf32, #tpu.memory_space<vmem>>, %arg5: memref<1x32xf32, #tpu.memory_space<vmem>>, %arg6: memref<1x32xf32, #tpu.memory_space<vmem>>, %arg7: memref<1x32xf32, #tpu.memory_space<vmem>>, %arg8: memref<1x1xf32, #tpu.memory_space<vmem>>, %arg9: memref<16x1xf32, #tpu.memory_space<vmem>>, %arg10: memref<16x32xf32, #tpu.memory_space<vmem>>) attributes {dimension_semantics = [#tpu.dimension_semantics<parallel>, #tpu.dimension_semantics<arbitrary>], iteration_bounds = array<i64: 1, 1>, scalar_prefetch = 0 : i64, scratch_operands = 1 : i64, tpu.core_type = #tpu.core_type<tc>, window_params = [{transform_indices = @transform_0, window_bounds = array<i64: 16, 2080>}, {transform_indices = @transform_1, window_bounds = array<i64: 2080, 32>}, {pipeline_mode = #tpu.pipeline_mode<synchronous>, transform_indices = @transform_2, window_bounds = array<i64: 1, 32>}, {pipeline_mode = #tpu.pipeline_mode<synchronous>, transform_indices = @transform_3, window_bounds = array<i64: 1, 32>}, {pipeline_mode = #tpu.pipeline_mode<synchronous>, transform_indices = @transform_4, window_bounds = array<i64: 1, 32>}, {pipeline_mode = #tpu.pipeline_mode<synchronous>, transform_indices = @transform_5, window_bounds = array<i64: 1, 32>}, {pipeline_mode = #tpu.pipeline_mode<synchronous>, transform_indices = @transform_6, window_bounds = array<i64: 1, 1>}, {transform_indices = @transform_7, window_bounds = array<i64: 16, 1>}]} {
    %c0_i32 = arith.constant 0 : i32
    %0 = arith.cmpi eq, %arg1, %c0_i32 : i32
    %1 = arith.extui %0 : i1 to i32
    %c0_i32_0 = arith.constant 0 : i32
    %2 = arith.cmpi ne, %1, %c0_i32_0 : i32
    scf.if %2 {
      %cst_10 = arith.constant 0.000000e+00 : f32
      %12 = vector.broadcast %cst_10 : f32 to vector<16x32xf32>
      %c0_11 = arith.constant 0 : index
      %c0_12 = arith.constant 0 : index
      %13 = vector.load %arg10[%c0_11, %c0_12] : memref<16x32xf32, #tpu.memory_space<vmem>>, vector<16x32xf32>
      tpu.vector_store %arg10[%c0_11, %c0_12], %12 {strides = array<i32>} : memref<16x32xf32, #tpu.memory_space<vmem>>, vector<16x32xf32>,
    } else {
    }
    %c0 = arith.constant 0 : index
    %c0_1 = arith.constant 0 : index
    %3 = vector.load %arg10[%c0, %c0_1] : memref<16x32xf32, #tpu.memory_space<vmem>>, vector<16x32xf32>
    %c0_2 = arith.constant 0 : index
    %c0_3 = arith.constant 0 : index
    %4 = vector.load %arg2[%c0_2, %c0_3] : memref<16x2080xbf16, #tpu.memory_space<vmem>>, vector<16x2080xbf16>
    %c0_4 = arith.constant 0 : index
    %c0_5 = arith.constant 0 : index
    %5 = vector.load %arg3[%c0_4, %c0_5] : memref<2080x32xbf16, #tpu.memory_space<vmem>>, vector<2080x32xbf16>
    %cst = arith.constant dense<0.000000e+00> : vector<16x32xf32>
    %6 = tpu.matmul %4, %5, %cst {dimension_numbers = #tpu.dot_dimension_numbers<[1], [0], [0], [1], [0, 0, 1, 1], [], []>} : vector<16x2080xbf16>, vector<2080x32xbf16>, vector<16x32xf32> -> vector<16x32xf32>
    %7 = arith.addf %3, %6 : vector<16x32xf32>
    %c0_6 = arith.constant 0 : index
    %c0_7 = arith.constant 0 : index
    %8 = vector.load %arg10[%c0_6, %c0_7] : memref<16x32xf32, #tpu.memory_space<vmem>>, vector<16x32xf32>
    tpu.vector_store %arg10[%c0_6, %c0_7], %7 {strides = array<i32>} : memref<16x32xf32, #tpu.memory_space<vmem>>, vector<16x32xf32>,
    %c0_i32_8 = arith.constant 0 : i32
    %9 = arith.cmpi eq, %arg1, %c0_i32_8 : i32
    %10 = arith.extui %9 : i1 to i32
    %c0_i32_9 = arith.constant 0 : i32
    %11 = arith.cmpi ne, %10, %c0_i32_9 : i32
    scf.if %11 {
      %c0_10 = arith.constant 0 : index
      %c0_11 = arith.constant 0 : index
      %12 = vector.load %arg10[%c0_10, %c0_11] : memref<16x32xf32, #tpu.memory_space<vmem>>, vector<16x32xf32>
      %c0_12 = arith.constant 0 : index
      %c0_13 = arith.constant 0 : index
      %13 = vector.load %arg4[%c0_12, %c0_13] : memref<1x32xf32, #tpu.memory_space<vmem>>, vector<1x32xf32>
      %14 = vector.broadcast %13 : vector<1x32xf32> to vector<16x32xf32>
      %15 = arith.addf %12, %14 : vector<16x32xf32>
      %cst_14 = arith.constant dense<0.000000e+00> : vector<16xf32>
      %16 = vector.multi_reduction <add>, %15, %cst_14 [1] : vector<16x32xf32> to vector<16xf32>
      %17 = vector.shape_cast %16 : vector<16xf32> to vector<16x1xf32>
      %cst_15 = arith.constant 3.200000e+01 : f32
      %18 = vector.broadcast %cst_15 : f32 to vector<16x1xf32>
      %19 = arith.divf %17, %18 : vector<16x1xf32>
      %20 = vector.broadcast %19 : vector<16x1xf32> to vector<16x32xf32>
      %21 = arith.subf %15, %20 : vector<16x32xf32>
      %22 = arith.mulf %21, %21 : vector<16x32xf32>
      %cst_16 = arith.constant dense<0.000000e+00> : vector<16xf32>
      %23 = vector.multi_reduction <add>, %22, %cst_16 [1] : vector<16x32xf32> to vector<16xf32>
      %24 = vector.shape_cast %23 : vector<16xf32> to vector<16x1xf32>
      %cst_17 = arith.constant 3.200000e+01 : f32
      %25 = vector.broadcast %cst_17 : f32 to vector<16x1xf32>
      %26 = arith.divf %24, %25 : vector<16x1xf32>
      %cst_18 = arith.constant 9.99999974E-6 : f32
      %27 = vector.broadcast %cst_18 : f32 to vector<16x1xf32>
      %28 = arith.addf %26, %27 : vector<16x1xf32>
      %29 = math.rsqrt %28 : vector<16x1xf32>
      %30 = vector.broadcast %29 : vector<16x1xf32> to vector<16x32xf32>
      %31 = arith.mulf %21, %30 : vector<16x32xf32>
      %c0_19 = arith.constant 0 : index
      %c0_20 = arith.constant 0 : index
      %32 = vector.load %arg5[%c0_19, %c0_20] : memref<1x32xf32, #tpu.memory_space<vmem>>, vector<1x32xf32>
      %33 = vector.broadcast %32 : vector<1x32xf32> to vector<16x32xf32>
      %34 = arith.mulf %31, %33 : vector<16x32xf32>
      %c0_21 = arith.constant 0 : index
      %c0_22 = arith.constant 0 : index
      %35 = vector.load %arg6[%c0_21, %c0_22] : memref<1x32xf32, #tpu.memory_space<vmem>>, vector<1x32xf32>
      %36 = vector.broadcast %35 : vector<1x32xf32> to vector<16x32xf32>
      %37 = arith.addf %34, %36 : vector<16x32xf32>
      %cst_23 = arith.constant 0.000000e+00 : f32
      %38 = vector.broadcast %cst_23 : f32 to vector<16x32xf32>
      %39 = arith.maximumf %37, %38 : vector<16x32xf32>
      %c0_24 = arith.constant 0 : index
      %c0_25 = arith.constant 0 : index
      %40 = vector.load %arg7[%c0_24, %c0_25] : memref<1x32xf32, #tpu.memory_space<vmem>>, vector<1x32xf32>
      %41 = vector.broadcast %40 : vector<1x32xf32> to vector<16x32xf32>
      %42 = arith.mulf %39, %41 : vector<16x32xf32>
      %cst_26 = arith.constant dense<0.000000e+00> : vector<16xf32>
      %43 = vector.multi_reduction <add>, %42, %cst_26 [1] : vector<16x32xf32> to vector<16xf32>
      %44 = vector.shape_cast %43 : vector<16xf32> to vector<16x1xf32>
      %c0_27 = arith.constant 0 : index
      %c0_28 = arith.constant 0 : index
      %45 = vector.load %arg8[%c0_27, %c0_28] : memref<1x1xf32, #tpu.memory_space<vmem>>, vector<1x1xf32>
      %46 = vector.broadcast %45 : vector<1x1xf32> to vector<16x1xf32>
      %47 = arith.addf %44, %46 : vector<16x1xf32>
      %c0_29 = arith.constant 0 : index
      %c0_30 = arith.constant 0 : index
      %48 = vector.load %arg9[%c0_29, %c0_30] : memref<16x1xf32, #tpu.memory_space<vmem>>, vector<16x1xf32>
      tpu.vector_store %arg9[%c0_29, %c0_30], %47 {strides = array<i32>} : memref<16x1xf32, #tpu.memory_space<vmem>>, vector<16x1xf32>,
    } else {
    }
    return
  }
  func.func @transform_0(%arg0: i32, %arg1: i32) -> (i32, i32) {
    %c0_i32 = arith.constant 0 : i32
    return %arg0, %arg1 : i32, i32
  }
  func.func @transform_1(%arg0: i32, %arg1: i32) -> (i32, i32) {
    %c0_i32 = arith.constant 0 : i32
    %c0_i32_0 = arith.constant 0 : i32
    return %arg1, %c0_i32 : i32, i32
  }
  func.func @transform_2(%arg0: i32, %arg1: i32) -> (i32, i32) {
    %c0_i32 = arith.constant 0 : i32
    %c0_i32_0 = arith.constant 0 : i32
    %c0_i32_1 = arith.constant 0 : i32
    return %c0_i32, %c0_i32_0 : i32, i32
  }
  func.func @transform_3(%arg0: i32, %arg1: i32) -> (i32, i32) {
    %c0_i32 = arith.constant 0 : i32
    %c0_i32_0 = arith.constant 0 : i32
    %c0_i32_1 = arith.constant 0 : i32
    return %c0_i32, %c0_i32_0 : i32, i32
  }
  func.func @transform_4(%arg0: i32, %arg1: i32) -> (i32, i32) {
    %c0_i32 = arith.constant 0 : i32
    %c0_i32_0 = arith.constant 0 : i32
    %c0_i32_1 = arith.constant 0 : i32
    return %c0_i32, %c0_i32_0 : i32, i32
  }
  func.func @transform_5(%arg0: i32, %arg1: i32) -> (i32, i32) {
    %c0_i32 = arith.constant 0 : i32
    %c0_i32_0 = arith.constant 0 : i32
    %c0_i32_1 = arith.constant 0 : i32
    return %c0_i32, %c0_i32_0 : i32, i32
  }
  func.func @transform_6(%arg0: i32, %arg1: i32) -> (i32, i32) {
    %c0_i32 = arith.constant 0 : i32
    %c0_i32_0 = arith.constant 0 : i32
    %c0_i32_1 = arith.constant 0 : i32
    return %c0_i32, %c0_i32_0 : i32, i32
  }
  func.func @transform_7(%arg0: i32, %arg1: i32) -> (i32, i32) {
    %c0_i32 = arith.constant 0 : i32
    %c0_i32_0 = arith.constant 0 : i32
    return %arg0, %c0_i32 : i32, i32
  }
}

</mosaic_0001>

<llo_original>
// kernel: pretrain_split_bert_forward.17
$region0: #{pretrain_split_bert_forward.17}
  #allocation0 [shape = 'u32[]', space=smem, size = 0x4, offset = 0x4, fixed_abs, tag = 'smem constant byte address 0x4 - core index']
  #allocation1 [shape = 'u32[72,128]{1,0:T(1,128)}', space=vmem, size = 0x9000, scoped, tag = 'internal scratch']
  #allocation2 [shape = 'f32[16,96]{1,0:T(8,128)}', space=vmem, size = 0x2000, scoped, tag = 'scratch operand']
  %s0 = inlined_call_operand.vmem [shape: bf16[16,32], index: 0, kind: input, shape index: {}]
  %s1 = inlined_call_operand.hbm [shape: bf16[32,96], index: 1, kind: input, shape index: {}]
  %s2 = inlined_call_operand.hbm [shape: f32[1,96], index: 2, kind: input, shape index: {}]
  %s3 = inlined_call_operand.vmem [shape: bf16[16,96], index: 3, kind: output, shape index: {}]
  %s4 = sld [smem:[#allocation0]]
  $region38: #{pretrain_split_bert_forward.17} parent=0
    _
  %s6 = ssub.s32 1, %s4
  %s7 = scalar_select 0, %s6, %s4
  $region1: #{pretrain_split_bert_forward.17} parent=0
    #allocation3 [shape = 'u8[8192]{0}', space=vmem, size = 0x2000, scoped, tag = 'input window, operand 1, single buffered']
    #allocation4 [shape = 's32[1]{0}', space=sflag, size = 0x4, scoped, tag = 'scoped memory for pretrain_split_bert_forward.17']
    #allocation5 [shape = 'u8[512]{0}', space=vmem, size = 0x400, scoped, tag = 'input window, operand 2, single buffered']
    #allocation6 [shape = 's32[1]{0}', space=sflag, size = 0x4, scoped, tag = 'scoped memory for pretrain_split_bert_forward.17']
    %8 = vsyncpa [#allocation4], 0
    %9 = vsyncpa [#allocation6], 0
    // Predicated region
    $region2: #{pretrain_split_bert_forward.17} parent=1 // pred_check
      _
    $region3: #{pretrain_split_bert_forward.17} parent=1 // pred_check_branch
      %11 = sbr.rel (0) target = $region5
    $region4: #{pretrain_split_bert_forward.17} parent=1 // pred_region
      _
    $region5: #{pretrain_split_bert_forward.17} parent=1 // pred_fallthru
      _
    // Predicated region
    $region6: #{pretrain_split_bert_forward.17} parent=1 // pred_check
      _
    $region7: #{pretrain_split_bert_forward.17} parent=1 // pred_check_branch
      %13 = sbr.rel (0) target = $region9
    $region8: #{pretrain_split_bert_forward.17} parent=1 // pred_region
      %15 = vsyncadd [#allocation4], 0
      %s16 = sshll.u32 %s1, 4
      %s17 = int_to_ptr.hbm [resolvable:$true] %s16
      %s18 = sshll.u32 [#allocation3], 4
      %s19 = int_to_ptr.vmem [resolvable:$true] %s18
      %24 = dma.hbm_to_vmem [thread:$0]  %s17, 256, %s19, [#allocation4], 64, 64, 4
    $region9: #{pretrain_split_bert_forward.17} parent=1 // pred_fallthru
      _
    // Predicated region
    $region10: #{pretrain_split_bert_forward.17} parent=1 // pred_check
      _
    $region11: #{pretrain_split_bert_forward.17} parent=1 // pred_check_branch
      %26 = sbr.rel (0) target = $region13
    $region12: #{pretrain_split_bert_forward.17} parent=1 // pred_region
      %28 = vsyncadd [#allocation6], 0
      %s30 = sshll.u32 %s2, 4
      %s31 = int_to_ptr.hbm [resolvable:$true] %s30
      %s32 = sshll.u32 [#allocation5], 4
      %s33 = int_to_ptr.vmem [resolvable:$true] %s32
      %35 = dma.hbm_to_vmem [thread:$0]  %s31, 16, %s33, [#allocation6]
    $region13: #{pretrain_split_bert_forward.17} parent=1 // pred_fallthru
      _
    // Predicated region
    $region14: #{pretrain_split_bert_forward.17} parent=1 // pred_check
      _
    $region15: #{pretrain_split_bert_forward.17} parent=1 // pred_check_branch
      %37 = sbr.rel (0) target = $region17
    $region16: #{pretrain_split_bert_forward.17} parent=1 // pred_region
      %39 = dma.done [#allocation4], 256
    $region17: #{pretrain_split_bert_forward.17} parent=1 // pred_fallthru
      _
    // Predicated region
    $region18: #{pretrain_split_bert_forward.17} parent=1 // pred_check
      _
    $region19: #{pretrain_split_bert_forward.17} parent=1 // pred_check_branch
      %41 = sbr.rel (0) target = $region21
    $region20: #{pretrain_split_bert_forward.17} parent=1 // pred_region
      %43 = dma.done [#allocation6], 16
    $region21: #{pretrain_split_bert_forward.17} parent=1 // pred_fallthru
      _
    %p45 = scmp.eq.s32.totalorder 0, 0
    // Predicated region
    $region22: #{pretrain_split_bert_forward.17} parent=1 // pred_check
      %p46 = pneg %p45
    $region23: #{pretrain_split_bert_forward.17} parent=1 // pred_check_branch
      %48 = sbr.rel (%p46) target = $region25
    $region24: #{pretrain_split_bert_forward.17} parent=1 // pred_region
      %vm49 = vcmask 785408
      %50 = vst.msk [vmem:[#allocation2] sm:$0xff] %vm49, 0.0
      %51 = vst.msk [vmem:[#allocation2 + $0x8] sm:$0xff] %vm49, 0.0
    $region25: #{pretrain_split_bert_forward.17} parent=1 // pred_fallthru
      _
    %v52 = vld [vmem:[#allocation2] sm:$0xff]
    %v53 = vld [vmem:[#allocation2 + $0x8] sm:$0xff]
    %v54 = vld [vmem:[%s0] sm:$0xf]
    %v55 = vld [vmem:[%s0 + $0x4] sm:$0xf]
    %v56 = vld [vmem:[#allocation3] sm:$0xf]
    %v57 = vld [vmem:[#allocation3 + $0x4] sm:$0xf]
    %v58 = vld [vmem:[#allocation3 + $0x8] sm:$0xf]
    %v59 = vld [vmem:[#allocation3 + $0xc] sm:$0xf]
    %v62 = vunpack.c.l.b16 %v54
    %v63 = vunpack.c.l.b16 %v55
    %v64 = vpack.c.b16 %v63, %v62
    %v69 = vunpack.c.l.b16 %v56
    %v70 = vunpack.c.l.b16 %v57
    %v71 = vunpack.c.l.b16 %v58
    %v72 = vunpack.c.l.b16 %v59
    %v73 = vpack.c.b16 %v70, %v69
    %v74 = vpack.c.b16 %v72, %v71
    %vm77 = vcmask 261120
    %v79 = vsel %vm77, %v64, 0
    %81 = vmatpush.bf16.msra.mxu0 0
    %82 = vmatpush.bf16.msra.mxu0 0
    %83 = vmatpush.bf16.msra.mxu0 0
    %84 = vmatpush.bf16.msra.mxu0 0
    %85 = vmatpush.bf16.msra.mxu0 0
    %86 = vmatpush.bf16.msra.mxu0 0
    %87 = vmatpush.bf16.msra.mxu0 %v74
    %88 = vmatpush.bf16.msra.mxu0 %v73
    %89 = vmatmul.bf16.gmra.mxu0 %v79
    %v90 = vpop.f32.mrf.mxu0
    %v91 = vadd.f32 0.0, %v90
    %v92 = vpop.f32.mrf.mxu0
    %v93 = vadd.f32 0.0, %v92
    %94 = vdwg.mxu0
    %v95 = vadd.f32 %v52, %v91
    %v96 = vadd.f32 %v53, %v93
    %vm97 = vcmask 785408
    %98 = vst.msk [vmem:[#allocation2] sm:$0xff] %vm97, %v95
    %99 = vst.msk [vmem:[#allocation2 + $0x8] sm:$0xff] %vm97, %v96
    // Predicated region
    $region26: #{pretrain_split_bert_forward.17} parent=1 // pred_check
      %p100 = pneg %p45
    $region27: #{pretrain_split_bert_forward.17} parent=1 // pred_check_branch
      %102 = sbr.rel (%p100) target = $region29
    $region28: #{pretrain_split_bert_forward.17} parent=1 // pred_region
      %v103 = vld [vmem:[#allocation2] sm:$0xff]
      %v104 = vld [vmem:[#allocation2 + $0x8] sm:$0xff]
      %v105 = vld [vmem:[#allocation5] sm:$0x1]
      %v107 = vperm.slane %v105, 0
      %v109 = vadd.f32 %v103, %v107
      %v110 = vadd.f32 %v104, %v107
      %v111 = vpack.c.bf16 %v109, %v109
      %v112 = vpack.c.bf16 %v110, %v110
      %vm113 = vcmask 781312
      %114 = vst.msk [vmem:[%s3] sm:$0xf] %vm113, %v111
      %115 = vst.msk [vmem:[%s3 + $0x4] sm:$0xf] %vm113, %v112
    $region29: #{pretrain_split_bert_forward.17} parent=1 // pred_fallthru
      _
    // Predicated region
    $region30: #{pretrain_split_bert_forward.17} parent=1 // pred_check
      _
    $region31: #{pretrain_split_bert_forward.17} parent=1 // pred_check_branch
      %117 = sbr.rel (0) target = $region33
    $region32: #{pretrain_split_bert_forward.17} parent=1 // pred_region
      _
    $region33: #{pretrain_split_bert_forward.17} parent=1 // pred_fallthru
      _
    // Predicated region
    $region34: #{pretrain_split_bert_forward.17} parent=1 // pred_check
      _
    $region35: #{pretrain_split_bert_forward.17} parent=1 // pred_check_branch
      %119 = sbr.rel (0) target = $region37
    $region36: #{pretrain_split_bert_forward.17} parent=1 // pred_region
      _
    $region37: #{pretrain_split_bert_forward.17} parent=1 // pred_fallthru
      _
    %120 = vsyncpa [#allocation4], 1
    %121 = vsyncpa [#allocation6], 1

// kernel: pretrain_split_bert_forward.16
$region0: #{pretrain_split_bert_forward.16}
  #allocation0 [shape = 'u32[]', space=smem, size = 0x4, offset = 0x4, fixed_abs, tag = 'smem constant byte address 0x4 - core index']
  #allocation1 [shape = 'u32[72,128]{1,0:T(1,128)}', space=vmem, size = 0x9000, scoped, tag = 'internal scratch']
  %s0 = inlined_call_operand.vmem [shape: f32[16,32], index: 0, kind: input, shape index: {}]
  %s1 = inlined_call_operand.hbm [shape: f32[1,32], index: 1, kind: input, shape index: {}]
  %s2 = inlined_call_operand.hbm [shape: f32[1,32], index: 2, kind: input, shape index: {}]
  %s3 = inlined_call_operand.vmem [shape: bf16[16,32], index: 3, kind: output, shape index: {}]
  %s4 = sld [smem:[#allocation0]]
  $region30: #{pretrain_split_bert_forward.16} parent=0
    _
  %s6 = ssub.s32 1, %s4
  %s7 = scalar_select 0, %s6, %s4
  $region1: #{pretrain_split_bert_forward.16} parent=0
    #allocation2 [shape = 'u8[512]{0}', space=vmem, size = 0x400, scoped, tag = 'input window, operand 1, single buffered']
    #allocation3 [shape = 's32[1]{0}', space=sflag, size = 0x4, scoped, tag = 'scoped memory for pretrain_split_bert_forward.16']
    #allocation4 [shape = 'u8[512]{0}', space=vmem, size = 0x400, scoped, tag = 'input window, operand 2, single buffered']
    #allocation5 [shape = 's32[1]{0}', space=sflag, size = 0x4, scoped, tag = 'scoped memory for pretrain_split_bert_forward.16']
    %8 = vsyncpa [#allocation3], 0
    %9 = vsyncpa [#allocation5], 0
    // Predicated region
    $region2: #{pretrain_split_bert_forward.16} parent=1 // pred_check
      _
    $region3: #{pretrain_split_bert_forward.16} parent=1 // pred_check_branch
      %11 = sbr.rel (0) target = $region5
    $region4: #{pretrain_split_bert_forward.16} parent=1 // pred_region
      _
    $region5: #{pretrain_split_bert_forward.16} parent=1 // pred_fallthru
      _
    // Predicated region
    $region6: #{pretrain_split_bert_forward.16} parent=1 // pred_check
      _
    $region7: #{pretrain_split_bert_forward.16} parent=1 // pred_check_branch
      %13 = sbr.rel (0) target = $region9
    $region8: #{pretrain_split_bert_forward.16} parent=1 // pred_region
      %15 = vsyncadd [#allocation3], 0
      %s17 = sshll.u32 %s1, 4
      %s18 = int_to_ptr.hbm [resolvable:$true] %s17
      %s19 = sshll.u32 [#allocation2], 4
      %s20 = int_to_ptr.vmem [resolvable:$true] %s19
      %22 = dma.hbm_to_vmem [thread:$0]  %s18, 16, %s20, [#allocation3]
    $region9: #{pretrain_split_bert_forward.16} parent=1 // pred_fallthru
      _
    // Predicated region
    $region10: #{pretrain_split_bert_forward.16} parent=1 // pred_check
      _
    $region11: #{pretrain_split_bert_forward.16} parent=1 // pred_check_branch
      %24 = sbr.rel (0) target = $region13
    $region12: #{pretrain_split_bert_forward.16} parent=1 // pred_region
      %26 = vsyncadd [#allocation5], 0
      %s28 = sshll.u32 %s2, 4
      %s29 = int_to_ptr.hbm [resolvable:$true] %s28
      %s30 = sshll.u32 [#allocation4], 4
      %s31 = int_to_ptr.vmem [resolvable:$true] %s30
      %33 = dma.hbm_to_vmem [thread:$0]  %s29, 16, %s31, [#allocation5]
    $region13: #{pretrain_split_bert_forward.16} parent=1 // pred_fallthru
      _
    // Predicated region
    $region14: #{pretrain_split_bert_forward.16} parent=1 // pred_check
      _
    $region15: #{pretrain_split_bert_forward.16} parent=1 // pred_check_branch
      %35 = sbr.rel (0) target = $region17
    $region16: #{pretrain_split_bert_forward.16} parent=1 // pred_region
      %37 = dma.done [#allocation3], 16
    $region17: #{pretrain_split_bert_forward.16} parent=1 // pred_fallthru
      _
    // Predicated region
    $region18: #{pretrain_split_bert_forward.16} parent=1 // pred_check
      _
    $region19: #{pretrain_split_bert_forward.16} parent=1 // pred_check_branch
      %39 = sbr.rel (0) target = $region21
    $region20: #{pretrain_split_bert_forward.16} parent=1 // pred_region
      %41 = dma.done [#allocation5], 16
    $region21: #{pretrain_split_bert_forward.16} parent=1 // pred_fallthru
      _
    %v42 = vld [vmem:[%s0] sm:$0xff]
    %v43 = vld [vmem:[%s0 + $0x8] sm:$0xff]
    %vm44 = vcmask 261120
    %v45 = vsel %vm44, %v42, 0.0
    %46 = vadd.xlane.f32.xlu0 %v45
    %v47 = vpop.xlane.xlu0 %46
    %v48 = vsel %vm44, %v43, 0.0
    %49 = vadd.xlane.f32.xlu0 %v48
    %v50 = vpop.xlane.xlu0 %49
    %v51 = vrcp.pop 32.0
    %v52 = vmul.f32 32.0, %v51
    %v53 = vsub.f32 1.0, %v52
    %v54 = vmul.f32 %v51, %v53
    %v55 = vadd.f32 %v51, %v54
    %vm56 = vweird.f32 %v51
    %v57 = vsel %vm56, %v51, %v55
    %v58 = vmul.f32 %v47, %v57
    %v59 = vmul.f32 %v50, %v57
    %v60 = vsub.f32 %v42, %v58
    %v61 = vsub.f32 %v43, %v59
    %v62 = vmul.f32 %v60, %v60
    %v63 = vmul.f32 %v61, %v61
    %v64 = vsel %vm44, %v62, 0.0
    %65 = vadd.xlane.f32.xlu0 %v64
    %v66 = vpop.xlane.xlu0 %65
    %v67 = vsel %vm44, %v63, 0.0
    %68 = vadd.xlane.f32.xlu0 %v67
    %v69 = vpop.xlane.xlu0 %68
    %v70 = vmul.f32 %v66, %v57
    %v71 = vmul.f32 %v69, %v57
    %v72 = vadd.f32 %v70, 1e-12
    %v73 = vadd.f32 %v71, 1e-12
    %v74 = vrsqrt.pop %v72
    %v75 = vmul.f32 %v74, %v72
    %v76 = vmul.f32 %v75, %v74
    %v77 = vmul.f32 0.5, %v76
    %v78 = vsub.f32 1.5, %v77
    %v79 = vmul.f32 %v74, %v78
    %vm80 = vweird.f32 %v72
    %vm81 = vweird.f32 %v74
    %vm82 = vmor %vm80, %vm81
    %v83 = vsel %vm82, %v74, %v79
    %v84 = vrsqrt.pop %v73
    %v85 = vmul.f32 %v84, %v73
    %v86 = vmul.f32 %v85, %v84
    %v87 = vmul.f32 0.5, %v86
    %v88 = vsub.f32 1.5, %v87
    %v89 = vmul.f32 %v84, %v88
    %vm90 = vweird.f32 %v73
    %vm91 = vweird.f32 %v84
    %vm92 = vmor %vm90, %vm91
    %v93 = vsel %vm92, %v84, %v89
    %v94 = vmul.f32 %v60, %v83
    %v95 = vmul.f32 %v61, %v93
    %v96 = vld [vmem:[#allocation2] sm:$0x1]
    %v98 = vperm.slane %v96, 0
    %v100 = vmul.f32 %v94, %v98
    %v101 = vmul.f32 %v95, %v98
    %v102 = vld [vmem:[#allocation4] sm:$0x1]
    %v104 = vperm.slane %v102, 0
    %v106 = vadd.f32 %v100, %v104
    %v107 = vadd.f32 %v101, %v104
    %v108 = vpack.c.bf16 %v106, %v106
    %v109 = vpack.c.bf16 %v107, %v107
    %vm110 = vcmask 257024
    %111 = vst.msk [vmem:[%s3] sm:$0xf] %vm110, %v108
    %112 = vst.msk [vmem:[%s3 + $0x4] sm:$0xf] %vm110, %v109
    // Predicated region
    $region22: #{pretrain_split_bert_forward.16} parent=1 // pred_check
      _
    $region23: #{pretrain_split_bert_forward.16} parent=1 // pred_check_branch
      %114 = sbr.rel (0) target = $region25
    $region24: #{pretrain_split_bert_forward.16} parent=1 // pred_region
      _
    $region25: #{pretrain_split_bert_forward.16} parent=1 // pred_fallthru
      _
    // Predicated region
    $region26: #{pretrain_split_bert_forward.16} parent=1 // pred_check
      _
    $region27: #{pretrain_split_bert_forward.16} parent=1 // pred_check_branch
      %116 = sbr.rel (0) target = $region29
    $region28: #{pretrain_split_bert_forward.16} parent=1 // pred_region
      _
    $region29: #{pretrain_split_bert_forward.16} parent=1 // pred_fallthru
      _
    %117 = vsyncpa [#allocation3], 1
    %118 = vsyncpa [#allocation5], 1

// kernel: pretrain_split_bert_forward.18
$region0: #{pretrain_split_bert_forward.18}
  #allocation0 [shape = 'u32[]', space=smem, size = 0x4, offset = 0x4, fixed_abs, tag = 'smem constant byte address 0x4 - core index']
  #allocation1 [shape = 'u32[72,128]{1,0:T(1,128)}', space=vmem, size = 0x9000, scoped, tag = 'internal scratch']
  %s0 = inlined_call_operand.vmem [shape: bf16[2,4,8,8], index: 0, kind: input, shape index: {}]
  %s1 = inlined_call_operand.vmem [shape: bf16[2,4,8,8], index: 1, kind: input, shape index: {}]
  %s2 = inlined_call_operand.vmem [shape: bf16[2,4,8,8], index: 2, kind: input, shape index: {}]
  %s3 = inlined_call_operand.vmem [shape: f32[2,1,1,8], index: 3, kind: input, shape index: {}]
  %s4 = inlined_call_operand.vmem [shape: bf16[2,4,8,8], index: 4, kind: output, shape index: {}]
  %s5 = sld [smem:[#allocation0]]
  $region49: #{pretrain_split_bert_forward.18} parent=0
    _
  %s7 = ssub.s32 1, %s5
  %s8 = scalar_select 0, %s7, %s5
  loop: start=0, step=1, limit=4
  $region2: #{pretrain_split_bert_forward.18} parent=0 // loop_pre_header
    _
  $region3: #{pretrain_split_bert_forward.18} parent=0 // loop_header
    %s10 = sphi 0, %s14
    %p11 = scmp.ge.s32.totalorder %s10, 4
    %s20 = sphi 0, %s22
    %s23 = sphi 0, %s20
    %s24 = sphi 0, %s23
    %s40 = sphi 0, %s24
    %s46 = sphi 0, %s48
    %s49 = sphi 0, %s46
    %s50 = sphi 0, %s49
    %s66 = sphi 0, %s50
    %s72 = sphi 0, %s74
    %s75 = sphi 0, %s72
    %s76 = sphi 0, %s75
    %s92 = sphi 0, %s76
    %s98 = sphi 0, %s100
    %s101 = sphi 0, %s98
    %s102 = sphi 0, %s101
    %s118 = sphi 0, %s102
    %s124 = sphi 0, %s126
    %s127 = sphi 0, %s124
    %s128 = sphi 0, %s127
    %s144 = sphi 0, %s128
  $region4: #{pretrain_split_bert_forward.18} parent=0 // loop_header_branch
    %13 = sbr.rel (%p11) target = $region8
  $region5: #{pretrain_split_bert_forward.18} parent=0 // loop_body
    %s15 = ssub.s32 %s10, 1
    %s16 = ssub.s32 %s10, 2
    %s17 = sadd.s32 %s10, 1
    %s18 = ssub.s32 %s10, %s17
    %p19 = scmp.eq.s32.totalorder %s18, 0
    %s21 = sadd.s32 %s20, 1
    %s22 = scalar_select %p19, %s20, %s21
    %p25 = pneg %p19
    %p26 = scmp.eq.s32.totalorder %s10, 1
    %p27 = por %p25, %p26
    %p28 = scmp.ne.s32.totalorder %s20, %s23
    %p29 = scmp.eq.s32.totalorder %s10, 0
    %p30 = por %p28, %p29
    %p31 = scmp.ne.s32.totalorder %s20, %s23
    %p32 = scmp.eq.s32.totalorder %s15, 1
    %p33 = por %p31, %p32
    %p34 = scmp.ne.s32.totalorder %s23, %s24
    %p35 = scmp.eq.s32.totalorder %s15, 0
    %p36 = por %p34, %p35
    %p37 = scmp.ne.s32.totalorder %s23, %s24
    %p38 = scmp.eq.s32.totalorder %s16, 1
    %p39 = por %p37, %p38
    %p41 = scmp.ne.s32.totalorder %s24, %s40
    %p42 = scmp.eq.s32.totalorder %s16, 0
    %p43 = por %p41, %p42
    %s44 = ssub.s32 %s10, %s17
    %p45 = scmp.eq.s32.totalorder %s44, 0
    %s47 = sadd.s32 %s46, 1
    %s48 = scalar_select %p45, %s46, %s47
    %p51 = pneg %p45
    %p52 = scmp.eq.s32.totalorder %s10, 1
    %p53 = por %p51, %p52
    %p54 = scmp.ne.s32.totalorder %s46, %s49
    %p55 = scmp.eq.s32.totalorder %s10, 0
    %p56 = por %p54, %p55
    %p57 = scmp.ne.s32.totalorder %s46, %s49
    %p58 = scmp.eq.s32.totalorder %s15, 1
    %p59 = por %p57, %p58
    %p60 = scmp.ne.s32.totalorder %s49, %s50
    %p61 = scmp.eq.s32.totalorder %s15, 0
    %p62 = por %p60, %p61
    %p63 = scmp.ne.s32.totalorder %s49, %s50
    %p64 = scmp.eq.s32.totalorder %s16, 1
    %p65 = por %p63, %p64
    %p67 = scmp.ne.s32.totalorder %s50, %s66
    %p68 = scmp.eq.s32.totalorder %s16, 0
    %p69 = por %p67, %p68
    %s70 = ssub.s32 %s10, %s17
    %p71 = scmp.eq.s32.totalorder %s70, 0
    %s73 = sadd.s32 %s72, 1
    %s74 = scalar_select %p71, %s72, %s73
    %p77 = pneg %p71
    %p78 = scmp.eq.s32.totalorder %s10, 1
    %p79 = por %p77, %p78
    %p80 = scmp.ne.s32.totalorder %s72, %s75
    %p81 = scmp.eq.s32.totalorder %s10, 0
    %p82 = por %p80, %p81
    %p83 = scmp.ne.s32.totalorder %s72, %s75
    %p84 = scmp.eq.s32.totalorder %s15, 1
    %p85 = por %p83, %p84
    %p86 = scmp.ne.s32.totalorder %s75, %s76
    %p87 = scmp.eq.s32.totalorder %s15, 0
    %p88 = por %p86, %p87
    %p89 = scmp.ne.s32.totalorder %s75, %s76
    %p90 = scmp.eq.s32.totalorder %s16, 1
    %p91 = por %p89, %p90
    %p93 = scmp.ne.s32.totalorder %s76, %s92
    %p94 = scmp.eq.s32.totalorder %s16, 0
    %p95 = por %p93, %p94
    %s96 = ssub.s32 %s10, %s17
    %p97 = scmp.eq.s32.totalorder %s96, 0
    %s99 = sadd.s32 %s98, 1
    %s100 = scalar_select %p97, %s98, %s99
    %p103 = pneg %p97
    %p104 = scmp.eq.s32.totalorder %s10, 1
    %p105 = por %p103, %p104
    %p106 = scmp.ne.s32.totalorder %s98, %s101
    %p107 = scmp.eq.s32.totalorder %s10, 0
    %p108 = por %p106, %p107
    %p109 = scmp.ne.s32.totalorder %s98, %s101
    %p110 = scmp.eq.s32.totalorder %s15, 1
    %p111 = por %p109, %p110
    %p112 = scmp.ne.s32.totalorder %s101, %s102
    %p113 = scmp.eq.s32.totalorder %s15, 0
    %p114 = por %p112, %p113
    %p115 = scmp.ne.s32.totalorder %s101, %s102
    %p116 = scmp.eq.s32.totalorder %s16, 1
    %p117 = por %p115, %p116
    %p119 = scmp.ne.s32.totalorder %s102, %s118
    %p120 = scmp.eq.s32.totalorder %s16, 0
    %p121 = por %p119, %p120
    %s122 = ssub.s32 %s10, %s17
    %p123 = scmp.eq.s32.totalorder %s122, 0
    %s125 = sadd.s32 %s124, 1
    %s126 = scalar_select %p123, %s124, %s125
    %p129 = pneg %p123
    %p130 = scmp.eq.s32.totalorder %s10, 1
    %p131 = por %p129, %p130
    %p132 = scmp.ne.s32.totalorder %s124, %s127
    %p133 = scmp.eq.s32.totalorder %s10, 0
    %p134 = por %p132, %p133
    %p135 = scmp.ne.s32.totalorder %s124, %s127
    %p136 = scmp.eq.s32.totalorder %s15, 1
    %p137 = por %p135, %p136
    %p138 = scmp.ne.s32.totalorder %s127, %s128
    %p139 = scmp.eq.s32.totalorder %s15, 0
    %p140 = por %p138, %p139
    %p141 = scmp.ne.s32.totalorder %s127, %s128
    %p142 = scmp.eq.s32.totalorder %s16, 1
    %p143 = por %p141, %p142
    %p145 = scmp.ne.s32.totalorder %s128, %s144
    %p146 = scmp.eq.s32.totalorder %s16, 0
    %p147 = por %p145, %p146
    %p148 = scmp.le.s32.totalorder 1, %s10
    %p149 = scmp.lt.s32.totalorder %s10, 3
    %p150 = pnand %p148, %p149
    %p151 = pneg %p150
    // Predicated region
    $region9: #{pretrain_split_bert_forward.18} parent=5 // pred_check
      _
    $region10: #{pretrain_split_bert_forward.18} parent=5 // pred_check_branch
      %153 = sbr.rel (%p150) target = $region12
    $region11: #{pretrain_split_bert_forward.18} parent=5 // pred_region
      %s154 = ssub.s32 %s10, 1
    $region12: #{pretrain_split_bert_forward.18} parent=5 // pred_fallthru
      _
    %p155 = scmp.lt.s32.totalorder %s10, 2
    // Predicated region
    $region13: #{pretrain_split_bert_forward.18} parent=5 // pred_check
      %p156 = pneg %p155
    $region14: #{pretrain_split_bert_forward.18} parent=5 // pred_check_branch
      %158 = sbr.rel (%p156) target = $region16
    $region15: #{pretrain_split_bert_forward.18} parent=5 // pred_region
      // Predicated region
      $region17: #{pretrain_split_bert_forward.18} parent=15 // pred_check
        %p159 = pneg %p30
      $region18: #{pretrain_split_bert_forward.18} parent=15 // pred_check_branch
        %161 = sbr.rel (%p159) target = $region20
      $region19: #{pretrain_split_bert_forward.18} parent=15 // pred_region
        %p162 = scmp.lt.s32.totalorder %s10, 1
        %s163 = scalar_select %p162, %s10, 1
        %s164 = smul.addr %s163, 4
        %s165 = smul.addr %s164, 4
        %s166 = scalar_lea.vmem %s0, %s165
      $region20: #{pretrain_split_bert_forward.18} parent=15 // pred_fallthru
        _
      // Predicated region
      $region21: #{pretrain_split_bert_forward.18} parent=15 // pred_check
        %p167 = pneg %p56
      $region22: #{pretrain_split_bert_forward.18} parent=15 // pred_check_branch
        %169 = sbr.rel (%p167) target = $region24
      $region23: #{pretrain_split_bert_forward.18} parent=15 // pred_region
        %p170 = scmp.lt.s32.totalorder %s10, 1
        %s171 = scalar_select %p170, %s10, 1
        %s172 = smul.addr %s171, 4
        %s173 = smul.addr %s172, 4
        %s174 = scalar_lea.vmem %s1, %s173
      $region24: #{pretrain_split_bert_forward.18} parent=15 // pred_fallthru
        _
      // Predicated region
      $region25: #{pretrain_split_bert_forward.18} parent=15 // pred_check
        %p175 = pneg %p82
      $region26: #{pretrain_split_bert_forward.18} parent=15 // pred_check_branch
        %177 = sbr.rel (%p175) target = $region28
      $region27: #{pretrain_split_bert_forward.18} parent=15 // pred_region
        %p178 = scmp.lt.s32.totalorder %s10, 1
        %s179 = scalar_select %p178, %s10, 1
        %s180 = smul.addr %s179, 4
        %s181 = smul.addr %s180, 4
        %s182 = scalar_lea.vmem %s2, %s181
      $region28: #{pretrain_split_bert_forward.18} parent=15 // pred_fallthru
        _
      // Predicated region
      $region29: #{pretrain_split_bert_forward.18} parent=15 // pred_check
        %p183 = pneg %p108
      $region30: #{pretrain_split_bert_forward.18} parent=15 // pred_check_branch
        %185 = sbr.rel (%p183) target = $region32
      $region31: #{pretrain_split_bert_forward.18} parent=15 // pred_region
        %p186 = scmp.lt.s32.totalorder %s10, 1
        %s187 = scalar_select %p186, %s10, 1
        %s188 = scalar_lea.vmem %s3, %s187
      $region32: #{pretrain_split_bert_forward.18} parent=15 // pred_fallthru
        _
    $region16: #{pretrain_split_bert_forward.18} parent=5 // pred_fallthru
      _
    %p189 = scmp.le.s32.totalorder 1, %s10
    %p190 = scmp.lt.s32.totalorder %s10, 3
    %p191 = pnand %p189, %p190
    %p192 = pneg %p191
    // Predicated region
    $region33: #{pretrain_split_bert_forward.18} parent=5 // pred_check
      _
    $region34: #{pretrain_split_bert_forward.18} parent=5 // pred_check_branch
      %194 = sbr.rel (%p191) target = $region36
    $region35: #{pretrain_split_bert_forward.18} parent=5 // pred_region
      %s195 = ssub.s32 %s10, 1
      %p196 = scmp.lt.s32.totalorder %s15, 1
      %s197 = scalar_select %p196, %s15, 1
      %s198 = smul.addr %s197, 4
      %s199 = smul.addr %s198, 4
      %s200 = scalar_lea.vmem %s0, %s199
      %p201 = pneg %p36
      %p202 = pneg %p33
      %p203 = scmp.lt.s32.totalorder %s15, 1
      %s204 = scalar_select %p203, %s15, 1
      %s205 = smul.addr %s204, 4
      %s206 = smul.addr %s205, 4
      %s207 = scalar_lea.vmem %s1, %s206
      %p208 = pneg %p62
      %p209 = pneg %p59
      %p210 = scmp.lt.s32.totalorder %s15, 1
      %s211 = scalar_select %p210, %s15, 1
      %s212 = smul.addr %s211, 4
      %s213 = smul.addr %s212, 4
      %s214 = scalar_lea.vmem %s2, %s213
      %p215 = pneg %p88
      %p216 = pneg %p85
      %p217 = scmp.lt.s32.totalorder %s15, 1
      %s218 = scalar_select %p217, %s15, 1
      %s219 = scalar_lea.vmem %s3, %s218
      %p220 = pneg %p114
      %p221 = pneg %p111
      %p222 = pneg %p140
      %p223 = pneg %p137
      %p224 = scmp.lt.s32.totalorder %s15, 1
      %s225 = scalar_select %p224, %s15, 1
      %s226 = smul.addr %s225, 4
      %s227 = smul.addr %s226, 4
      %s228 = scalar_lea.vmem %s4, %s227
      %p229 = scmp.lt.s32.totalorder %s15, 1
      %s230 = scalar_select %p229, %s15, 1
      %s231 = smul.addr %s230, 4
      %s232 = smul.addr %s231, 4
      %s233 = scalar_lea.vmem %s0, %s232
      %p234 = scmp.lt.s32.totalorder %s15, 1
      %s235 = scalar_select %p234, %s15, 1
      %s236 = smul.addr %s235, 4
      %s237 = smul.addr %s236, 4
      %s238 = scalar_lea.vmem %s1, %s237
      %p239 = scmp.lt.s32.totalorder %s15, 1
      %s240 = scalar_select %p239, %s15, 1
      %s241 = smul.addr %s240, 4
      %s242 = smul.addr %s241, 4
      %s243 = scalar_lea.vmem %s2, %s242
      %p244 = scmp.lt.s32.totalorder %s15, 1
      %s245 = scalar_select %p244, %s15, 1
      %s246 = scalar_lea.vmem %s3, %s245
      %p247 = scmp.lt.s32.totalorder %s15, 1
      %s248 = scalar_select %p247, %s15, 1
      %s249 = smul.addr %s248, 4
      %s250 = smul.addr %s249, 4
      %s251 = scalar_lea.vmem %s4, %s250
      %v253 = vld [vmem:[%s233] sm:$0xf]
      %v254 = vld [vmem:[%s233 + $0x4] sm:$0xf]
      %v255 = vld [vmem:[%s233 + $0x8] sm:$0xf]
      %v256 = vld [vmem:[%s233 + $0xc] sm:$0xf]
      %v257 = vld [vmem:[%s238] sm:$0xf]
      %v258 = vld [vmem:[%s238 + $0x4] sm:$0xf]
      %v259 = vld [vmem:[%s238 + $0x8] sm:$0xf]
      %v260 = vld [vmem:[%s238 + $0xc] sm:$0xf]
      %v261 = vld [vmem:[%s243] sm:$0xf]
      %v262 = vld [vmem:[%s243 + $0x4] sm:$0xf]
      %v263 = vld [vmem:[%s243 + $0x8] sm:$0xf]
      %v264 = vld [vmem:[%s243 + $0xc] sm:$0xf]
      %vm265 = vcmask 64512
      %v267 = vsel %vm265, %v253, 0
      %v270 = vsel %vm265, %v257, 0
      %272 = vmatpush.bf16.xpose.msra.mxu0 0
      %273 = vmatpush.bf16.xpose.msra.mxu0 0
      %274 = vmatpush.bf16.xpose.msra.mxu0 0
      %275 = vmatpush.bf16.xpose.msra.mxu0 0
      %276 = vmatpush.bf16.xpose.msra.mxu0 0
      %277 = vmatpush.bf16.xpose.msra.mxu0 0
      %278 = vmatpush.bf16.xpose.msra.mxu0 0
      %279 = vmatpush.bf16.xpose.msra.mxu0 %v270
      %280 = vmatmul.bf16.gmra.mxu0 %v267
      %v281 = vpop.f32.mrf.mxu0
      %v282 = vadd.f32 0.0, %v281
      %v283 = vpop.f32.mrf.mxu0
      %284 = vdwg.mxu0
      %v286 = vsel %vm265, %v254, 0
      %v289 = vsel %vm265, %v258, 0
      %291 = vmatpush.bf16.xpose.msra.mxu0 0
      %292 = vmatpush.bf16.xpose.msra.mxu0 0
      %293 = vmatpush.bf16.xpose.msra.mxu0 0
      %294 = vmatpush.bf16.xpose.msra.mxu0 0
      %295 = vmatpush.bf16.xpose.msra.mxu0 0
      %296 = vmatpush.bf16.xpose.msra.mxu0 0
      %297 = vmatpush.bf16.xpose.msra.mxu0 0
      %298 = vmatpush.bf16.xpose.msra.mxu0 %v289
      %299 = vmatmul.bf16.gmra.mxu0 %v286
      %v300 = vpop.f32.mrf.mxu0
      %v301 = vadd.f32 0.0, %v300
      %v302 = vpop.f32.mrf.mxu0
      %303 = vdwg.mxu0
      %v305 = vsel %vm265, %v255, 0
      %v308 = vsel %vm265, %v259, 0
      %310 = vmatpush.bf16.xpose.msra.mxu0 0
      %311 = vmatpush.bf16.xpose.msra.mxu0 0
      %312 = vmatpush.bf16.xpose.msra.mxu0 0
      %313 = vmatpush.bf16.xpose.msra.mxu0 0
      %314 = vmatpush.bf16.xpose.msra.mxu0 0
      %315 = vmatpush.bf16.xpose.msra.mxu0 0
      %316 = vmatpush.bf16.xpose.msra.mxu0 0
      %317 = vmatpush.bf16.xpose.msra.mxu0 %v308
      %318 = vmatmul.bf16.gmra.mxu0 %v305
      %v319 = vpop.f32.mrf.mxu0
      %v320 = vadd.f32 0.0, %v319
      %v321 = vpop.f32.mrf.mxu0
      %322 = vdwg.mxu0
      %v324 = vsel %vm265, %v256, 0
      %v327 = vsel %vm265, %v260, 0
      %329 = vmatpush.bf16.xpose.msra.mxu0 0
      %330 = vmatpush.bf16.xpose.msra.mxu0 0
      %331 = vmatpush.bf16.xpose.msra.mxu0 0
      %332 = vmatpush.bf16.xpose.msra.mxu0 0
      %333 = vmatpush.bf16.xpose.msra.mxu0 0
      %334 = vmatpush.bf16.xpose.msra.mxu0 0
      %335 = vmatpush.bf16.xpose.msra.mxu0 0
      %336 = vmatpush.bf16.xpose.msra.mxu0 %v327
      %337 = vmatmul.bf16.gmra.mxu0 %v324
      %v338 = vpop.f32.mrf.mxu0
      %v339 = vadd.f32 0.0, %v338
      %v340 = vpop.f32.mrf.mxu0
      %341 = vdwg.mxu0
      %v342 = vmul.f32 %v282, 0.35355338
      %v343 = vmul.f32 %v301, 0.35355338
      %v344 = vmul.f32 %v320, 0.35355338
      %v345 = vmul.f32 %v339, 0.35355338
      %v346 = vld [vmem:[%s246] sm:$0x1]
      %v348 = vperm.slane %v346, 0
      %v350 = vadd.f32 %v342, %v348
      %v351 = vadd.f32 %v343, %v348
      %v352 = vadd.f32 %v344, %v348
      %v353 = vadd.f32 %v345, %v348
      %v354 = vsel %vm265, %v350, -inf
      %355 = vmax.xlane.f32.xlu0 %v354
      %v356 = vpop.xlane.xlu0 %355
      %v357 = vsel %vm265, %v351, -inf
      %358 = vmax.xlane.f32.xlu0 %v357
      %v359 = vpop.xlane.xlu0 %358
      %v360 = vsel %vm265, %v352, -inf
      %361 = vmax.xlane.f32.xlu0 %v360
      %v362 = vpop.xlane.xlu0 %361
      %v363 = vsel %vm265, %v353, -inf
      %364 = vmax.xlane.f32.xlu0 %v363
      %v365 = vpop.xlane.xlu0 %364
      %v366 = vsub.f32 %v350, %v356
      %v367 = vsub.f32 %v351, %v359
      %v368 = vsub.f32 %v352, %v362
      %v369 = vsub.f32 %v353, %v365
      %v370 = vmul.f32 %v366, 1.442695
      %v371 = vpow.pop %v370
      %v372 = vmul.f32 %v367, 1.442695
      %v373 = vpow.pop %v372
      %v374 = vmul.f32 %v368, 1.442695
      %v375 = vpow.pop %v374
      %v376 = vmul.f32 %v369, 1.442695
      %v377 = vpow.pop %v376
      %v378 = vsel %vm265, %v371, 0.0
      %379 = vadd.xlane.f32.xlu0 %v378
      %v380 = vpop.xlane.xlu0 %379
      %v381 = vsel %vm265, %v373, 0.0
      %382 = vadd.xlane.f32.xlu0 %v381
      %v383 = vpop.xlane.xlu0 %382
      %v384 = vsel %vm265, %v375, 0.0
      %385 = vadd.xlane.f32.xlu0 %v384
      %v386 = vpop.xlane.xlu0 %385
      %v387 = vsel %vm265, %v377, 0.0
      %388 = vadd.xlane.f32.xlu0 %v387
      %v389 = vpop.xlane.xlu0 %388
      %v390 = vrcp.pop %v380
      %v391 = vrcp.pop %v383
      %v392 = vrcp.pop %v386
      %v393 = vrcp.pop %v389
      %v394 = vmul.f32 %v371, %v390
      %v395 = vmul.f32 %v373, %v391
      %v396 = vmul.f32 %v375, %v392
      %v397 = vmul.f32 %v377, %v393
      %v398 = vpack.c.bf16 %v394, %v394
      %v399 = vpack.c.bf16 %v395, %v395
      %v400 = vpack.c.bf16 %v396, %v396
      %v401 = vpack.c.bf16 %v397, %v397
      %v403 = vsel %vm265, %v398, 0
      %vm405 = vcmask 1043456
      %v407 = vsel %vm405, %v261, 0
      %409 = vmatpush.bf16.msra.mxu0 0
      %410 = vmatpush.bf16.msra.mxu0 0
      %411 = vmatpush.bf16.msra.mxu0 0
      %412 = vmatpush.bf16.msra.mxu0 0
      %413 = vmatpush.bf16.msra.mxu0 0
      %414 = vmatpush.bf16.msra.mxu0 0
      %415 = vmatpush.bf16.msra.mxu0 0
      %416 = vmatpush.bf16.msra.mxu0 %v407
      %417 = vmatmul.bf16.gmra.mxu0 %v403
      %v418 = vpop.f32.mrf.mxu0
      %v419 = vadd.f32 0.0, %v418
      %v420 = vpop.f32.mrf.mxu0
      %421 = vdwg.mxu0
      %v423 = vsel %vm265, %v399, 0
      %v426 = vsel %vm405, %v262, 0
      %428 = vmatpush.bf16.msra.mxu0 0
      %429 = vmatpush.bf16.msra.mxu0 0
      %430 = vmatpush.bf16.msra.mxu0 0
      %431 = vmatpush.bf16.msra.mxu0 0
      %432 = vmatpush.bf16.msra.mxu0 0
      %433 = vmatpush.bf16.msra.mxu0 0
      %434 = vmatpush.bf16.msra.mxu0 0
      %435 = vmatpush.bf16.msra.mxu0 %v426
      %436 = vmatmul.bf16.gmra.mxu0 %v423
      %v437 = vpop.f32.mrf.mxu0
      %v438 = vadd.f32 0.0, %v437
      %v439 = vpop.f32.mrf.mxu0
      %440 = vdwg.mxu0
      %v442 = vsel %vm265, %v400, 0
      %v445 = vsel %vm405, %v263, 0
      %447 = vmatpush.bf16.msra.mxu0 0
      %448 = vmatpush.bf16.msra.mxu0 0
      %449 = vmatpush.bf16.msra.mxu0 0
      %450 = vmatpush.bf16.msra.mxu0 0
      %451 = vmatpush.bf16.msra.mxu0 0
      %452 = vmatpush.bf16.msra.mxu0 0
      %453 = vmatpush.bf16.msra.mxu0 0
      %454 = vmatpush.bf16.msra.mxu0 %v445
      %455 = vmatmul.bf16.gmra.mxu0 %v442
      %v456 = vpop.f32.mrf.mxu0
      %v457 = vadd.f32 0.0, %v456
      %v458 = vpop.f32.mrf.mxu0
      %459 = vdwg.mxu0
      %v461 = vsel %vm265, %v401, 0
      %v464 = vsel %vm405, %v264, 0
      %466 = vmatpush.bf16.msra.mxu0 0
      %467 = vmatpush.bf16.msra.mxu0 0
      %468 = vmatpush.bf16.msra.mxu0 0
      %469 = vmatpush.bf16.msra.mxu0 0
      %470 = vmatpush.bf16.msra.mxu0 0
      %471 = vmatpush.bf16.msra.mxu0 0
      %472 = vmatpush.bf16.msra.mxu0 0
      %473 = vmatpush.bf16.msra.mxu0 %v464
      %474 = vmatmul.bf16.gmra.mxu0 %v461
      %v475 = vpop.f32.mrf.mxu0
      %v476 = vadd.f32 0.0, %v475
      %v477 = vpop.f32.mrf.mxu0
      %478 = vdwg.mxu0
      %v479 = vpack.c.bf16 %v419, %v419
      %v480 = vpack.c.bf16 %v438, %v438
      %v481 = vpack.c.bf16 %v457, %v457
      %v482 = vpack.c.bf16 %v476, %v476
      %vm483 = vcmask 60416
      %484 = vst.msk [vmem:[%s251] sm:$0xf] %vm483, %v479
      %485 = vst.msk [vmem:[%s251 + $0x4] sm:$0xf] %vm483, %v480
      %486 = vst.msk [vmem:[%s251 + $0x8] sm:$0xf] %vm483, %v481
      %487 = vst.msk [vmem:[%s251 + $0xc] sm:$0xf] %vm483, %v482
      %p488 = scmp.lt.s32.totalorder %s15, 1
      %s489 = scalar_select %p488, %s15, 1
      %s490 = smul.addr %s489, 4
      %s491 = smul.addr %s490, 4
      %s492 = scalar_lea.vmem %s4, %s491
      // Predicated region
      $region37: #{pretrain_split_bert_forward.18} parent=35 // pred_check
        %p493 = pneg %p137
      $region38: #{pretrain_split_bert_forward.18} parent=35 // pred_check_branch
        %495 = sbr.rel (%p493) target = $region40
      $region39: #{pretrain_split_bert_forward.18} parent=35 // pred_region
        _
      $region40: #{pretrain_split_bert_forward.18} parent=35 // pred_fallthru
        _
    $region36: #{pretrain_split_bert_forward.18} parent=5 // pred_fallthru
      _
    %p496 = scmp.le.s32.totalorder 2, %s10
    // Predicated region
    $region41: #{pretrain_split_bert_forward.18} parent=5 // pred_check
      %p497 = pneg %p496
    $region42: #{pretrain_split_bert_forward.18} parent=5 // pred_check_branch
      %499 = sbr.rel (%p497) target = $region44
    $region43: #{pretrain_split_bert_forward.18} parent=5 // pred_region
      %s500 = ssub.s32 %s10, 2
      // Predicated region
      $region45: #{pretrain_split_bert_forward.18} parent=43 // pred_check
        %p501 = pneg %p143
      $region46: #{pretrain_split_bert_forward.18} parent=43 // pred_check_branch
        %503 = sbr.rel (%p501) target = $region48
      $region47: #{pretrain_split_bert_forward.18} parent=43 // pred_region
        %p504 = scmp.lt.s32.totalorder %s16, 1
        %s505 = scalar_select %p504, %s16, 1
        %s506 = smul.addr %s505, 4
        %s507 = smul.addr %s506, 4
        %s508 = scalar_lea.vmem %s4, %s507
      $region48: #{pretrain_split_bert_forward.18} parent=43 // pred_fallthru
        _
    $region44: #{pretrain_split_bert_forward.18} parent=5 // pred_fallthru
      _
  $region6: #{pretrain_split_bert_forward.18} parent=0 // loop_footer
    %s14 = sadd.s32 1, %s10
  $region7: #{pretrain_split_bert_forward.18} parent=0 // loop_footer_branch
    %9 = sbr.rel target = $region3
  $region8: #{pretrain_split_bert_forward.18} parent=0 // loop_exit
    _

// kernel: pretrain_split_bert_forward.19
$region0: #{pretrain_split_bert_forward.19}
  #allocation0 [shape = 'u32[]', space=smem, size = 0x4, offset = 0x4, fixed_abs, tag = 'smem constant byte address 0x4 - core index']
  #allocation1 [shape = 'u32[72,128]{1,0:T(1,128)}', space=vmem, size = 0x9000, scoped, tag = 'internal scratch']
  #allocation2 [shape = 'f32[16,32]{1,0:T(8,128)}', space=vmem, size = 0x2000, scoped, tag = 'scratch operand']
  %s0 = inlined_call_operand.vmem [shape: bf16[16,32], index: 0, kind: input, shape index: {}]
  %s1 = inlined_call_operand.hbm [shape: bf16[32,32], index: 1, kind: input, shape index: {}]
  %s2 = inlined_call_operand.hbm [shape: f32[1,32], index: 2, kind: input, shape index: {}]
  %s3 = inlined_call_operand.vmem [shape: bf16[16,32], index: 3, kind: input, shape index: {}]
  %s4 = inlined_call_operand.hbm [shape: f32[1,32], index: 4, kind: input, shape index: {}]
  %s5 = inlined_call_operand.hbm [shape: f32[1,32], index: 5, kind: input, shape index: {}]
  %s6 = inlined_call_operand.vmem [shape: bf16[16,32], index: 6, kind: output, shape index: {}]
  %s7 = sld [smem:[#allocation0]]
  $region58: #{pretrain_split_bert_forward.19} parent=0
    _
  %s9 = ssub.s32 1, %s7
  %s10 = scalar_select 0, %s9, %s7
  $region1: #{pretrain_split_bert_forward.19} parent=0
    #allocation3 [shape = 'u8[8192]{0}', space=vmem, size = 0x2000, scoped, tag = 'input window, operand 1, single buffered']
    #allocation4 [shape = 's32[1]{0}', space=sflag, size = 0x4, scoped, tag = 'scoped memory for pretrain_split_bert_forward.19']
    #allocation5 [shape = 'u8[512]{0}', space=vmem, size = 0x400, scoped, tag = 'input window, operand 2, single buffered']
    #allocation6 [shape = 's32[1]{0}', space=sflag, size = 0x4, scoped, tag = 'scoped memory for pretrain_split_bert_forward.19']
    #allocation7 [shape = 'u8[512]{0}', space=vmem, size = 0x400, scoped, tag = 'input window, operand 4, single buffered']
    #allocation8 [shape = 'u8[512]{0}', space=vmem, size = 0x400, scoped, tag = 'input window, operand 5, single buffered']
    #allocation9 [shape = 's32[1]{0}', space=sflag, size = 0x4, scoped, tag = 'scoped memory for pretrain_split_bert_forward.19']
    %11 = vsyncpa [#allocation4], 0
    %12 = vsyncpa [#allocation6], 0
    %13 = vsyncpa [#allocation9], 0
    // Predicated region
    $region2: #{pretrain_split_bert_forward.19} parent=1 // pred_check
      _
    $region3: #{pretrain_split_bert_forward.19} parent=1 // pred_check_branch
      %15 = sbr.rel (0) target = $region5
    $region4: #{pretrain_split_bert_forward.19} parent=1 // pred_region
      _
    $region5: #{pretrain_split_bert_forward.19} parent=1 // pred_fallthru
      _
    // Predicated region
    $region6: #{pretrain_split_bert_forward.19} parent=1 // pred_check
      _
    $region7: #{pretrain_split_bert_forward.19} parent=1 // pred_check_branch
      %17 = sbr.rel (0) target = $region9
    $region8: #{pretrain_split_bert_forward.19} parent=1 // pred_region
      %19 = vsyncadd [#allocation4], 0
      %s20 = sshll.u32 %s1, 4
      %s21 = int_to_ptr.hbm [resolvable:$true] %s20
      %s22 = sshll.u32 [#allocation3], 4
      %s23 = int_to_ptr.vmem [resolvable:$true] %s22
      %28 = dma.hbm_to_vmem [thread:$0]  %s21, 256, %s23, [#allocation4], 64, 64, 4
    $region9: #{pretrain_split_bert_forward.19} parent=1 // pred_fallthru
      _
    // Predicated region
    $region10: #{pretrain_split_bert_forward.19} parent=1 // pred_check
      _
    $region11: #{pretrain_split_bert_forward.19} parent=1 // pred_check_branch
      %30 = sbr.rel (0) target = $region13
    $region12: #{pretrain_split_bert_forward.19} parent=1 // pred_region
      %32 = vsyncadd [#allocation6], 0
      %s34 = sshll.u32 %s2, 4
      %s35 = int_to_ptr.hbm [resolvable:$true] %s34
      %s36 = sshll.u32 [#allocation5], 4
      %s37 = int_to_ptr.vmem [resolvable:$true] %s36
      %39 = dma.hbm_to_vmem [thread:$0]  %s35, 16, %s37, [#allocation6]
    $region13: #{pretrain_split_bert_forward.19} parent=1 // pred_fallthru
      _
    // Predicated region
    $region14: #{pretrain_split_bert_forward.19} parent=1 // pred_check
      _
    $region15: #{pretrain_split_bert_forward.19} parent=1 // pred_check_branch
      %41 = sbr.rel (0) target = $region17
    $region16: #{pretrain_split_bert_forward.19} parent=1 // pred_region
      _
    $region17: #{pretrain_split_bert_forward.19} parent=1 // pred_fallthru
      _
    // Predicated region
    $region18: #{pretrain_split_bert_forward.19} parent=1 // pred_check
      _
    $region19: #{pretrain_split_bert_forward.19} parent=1 // pred_check_branch
      %43 = sbr.rel (0) target = $region21
    $region20: #{pretrain_split_bert_forward.19} parent=1 // pred_region
      %45 = vsyncadd [#allocation6], 0
      %s47 = sshll.u32 %s4, 4
      %s48 = int_to_ptr.hbm [resolvable:$true] %s47
      %s49 = sshll.u32 [#allocation7], 4
      %s50 = int_to_ptr.vmem [resolvable:$true] %s49
      %52 = dma.hbm_to_vmem [thread:$0]  %s48, 16, %s50, [#allocation6]
    $region21: #{pretrain_split_bert_forward.19} parent=1 // pred_fallthru
      _
    // Predicated region
    $region22: #{pretrain_split_bert_forward.19} parent=1 // pred_check
      _
    $region23: #{pretrain_split_bert_forward.19} parent=1 // pred_check_branch
      %54 = sbr.rel (0) target = $region25
    $region24: #{pretrain_split_bert_forward.19} parent=1 // pred_region
      %56 = vsyncadd [#allocation9], 0
      %s58 = sshll.u32 %s5, 4
      %s59 = int_to_ptr.hbm [resolvable:$true] %s58
      %s60 = sshll.u32 [#allocation8], 4
      %s61 = int_to_ptr.vmem [resolvable:$true] %s60
      %63 = dma.hbm_to_vmem [thread:$0]  %s59, 16, %s61, [#allocation9]
    $region25: #{pretrain_split_bert_forward.19} parent=1 // pred_fallthru
      _
    // Predicated region
    $region26: #{pretrain_split_bert_forward.19} parent=1 // pred_check
      _
    $region27: #{pretrain_split_bert_forward.19} parent=1 // pred_check_branch
      %65 = sbr.rel (0) target = $region29
    $region28: #{pretrain_split_bert_forward.19} parent=1 // pred_region
      %67 = dma.done [#allocation4], 256
    $region29: #{pretrain_split_bert_forward.19} parent=1 // pred_fallthru
      _
    // Predicated region
    $region30: #{pretrain_split_bert_forward.19} parent=1 // pred_check
      _
    $region31: #{pretrain_split_bert_forward.19} parent=1 // pred_check_branch
      %69 = sbr.rel (0) target = $region33
    $region32: #{pretrain_split_bert_forward.19} parent=1 // pred_region
      %71 = dma.done [#allocation6], 16
    $region33: #{pretrain_split_bert_forward.19} parent=1 // pred_fallthru
      _
    // Predicated region
    $region34: #{pretrain_split_bert_forward.19} parent=1 // pred_check
      _
    $region35: #{pretrain_split_bert_forward.19} parent=1 // pred_check_branch
      %73 = sbr.rel (0) target = $region37
    $region36: #{pretrain_split_bert_forward.19} parent=1 // pred_region
      %75 = dma.done [#allocation6], 16
    $region37: #{pretrain_split_bert_forward.19} parent=1 // pred_fallthru
      _
    // Predicated region
    $region38: #{pretrain_split_bert_forward.19} parent=1 // pred_check
      _
    $region39: #{pretrain_split_bert_forward.19} parent=1 // pred_check_branch
      %77 = sbr.rel (0) target = $region41
    $region40: #{pretrain_split_bert_forward.19} parent=1 // pred_region
      %79 = dma.done [#allocation9], 16
    $region41: #{pretrain_split_bert_forward.19} parent=1 // pred_fallthru
      _
    %p81 = scmp.eq.s32.totalorder 0, 0
    // Predicated region
    $region42: #{pretrain_split_bert_forward.19} parent=1 // pred_check
      %p82 = pneg %p81
    $region43: #{pretrain_split_bert_forward.19} parent=1 // pred_check_branch
      %84 = sbr.rel (%p82) target = $region45
    $region44: #{pretrain_split_bert_forward.19} parent=1 // pred_region
      %vm85 = vcmask 261120
      %86 = vst.msk [vmem:[#allocation2] sm:$0xff] %vm85, 0.0
      %87 = vst.msk [vmem:[#allocation2 + $0x8] sm:$0xff] %vm85, 0.0
    $region45: #{pretrain_split_bert_forward.19} parent=1 // pred_fallthru
      _
    %v88 = vld [vmem:[#allocation2] sm:$0xff]
    %v89 = vld [vmem:[#allocation2 + $0x8] sm:$0xff]
    %v90 = vld [vmem:[%s0] sm:$0xf]
    %v91 = vld [vmem:[%s0 + $0x4] sm:$0xf]
    %v92 = vld [vmem:[#allocation3] sm:$0xf]
    %v93 = vld [vmem:[#allocation3 + $0x4] sm:$0xf]
    %v94 = vld [vmem:[#allocation3 + $0x8] sm:$0xf]
    %v95 = vld [vmem:[#allocation3 + $0xc] sm:$0xf]
    %v98 = vunpack.c.l.b16 %v90
    %v99 = vunpack.c.l.b16 %v91
    %v100 = vpack.c.b16 %v99, %v98
    %v105 = vunpack.c.l.b16 %v92
    %v106 = vunpack.c.l.b16 %v93
    %v107 = vunpack.c.l.b16 %v94
    %v108 = vunpack.c.l.b16 %v95
    %v109 = vpack.c.b16 %v106, %v105
    %v110 = vpack.c.b16 %v108, %v107
    %vm113 = vcmask 261120
    %v115 = vsel %vm113, %v100, 0
    %117 = vmatpush.bf16.msra.mxu0 0
    %118 = vmatpush.bf16.msra.mxu0 0
    %119 = vmatpush.bf16.msra.mxu0 0
    %120 = vmatpush.bf16.msra.mxu0 0
    %121 = vmatpush.bf16.msra.mxu0 0
    %122 = vmatpush.bf16.msra.mxu0 0
    %123 = vmatpush.bf16.msra.mxu0 %v110
    %124 = vmatpush.bf16.msra.mxu0 %v109
    %125 = vmatmul.bf16.gmra.mxu0 %v115
    %v126 = vpop.f32.mrf.mxu0
    %v127 = vadd.f32 0.0, %v126
    %v128 = vpop.f32.mrf.mxu0
    %v129 = vadd.f32 0.0, %v128
    %130 = vdwg.mxu0
    %v131 = vadd.f32 %v88, %v127
    %v132 = vadd.f32 %v89, %v129
    %133 = vst.msk [vmem:[#allocation2] sm:$0xff] %vm113, %v131
    %134 = vst.msk [vmem:[#allocation2 + $0x8] sm:$0xff] %vm113, %v132
    // Predicated region
    $region46: #{pretrain_split_bert_forward.19} parent=1 // pred_check
      %p135 = pneg %p81
    $region47: #{pretrain_split_bert_forward.19} parent=1 // pred_check_branch
      %137 = sbr.rel (%p135) target = $region49
    $region48: #{pretrain_split_bert_forward.19} parent=1 // pred_region
      %v138 = vld [vmem:[#allocation2] sm:$0xff]
      %v139 = vld [vmem:[#allocation2 + $0x8] sm:$0xff]
      %v140 = vld [vmem:[#allocation5] sm:$0x1]
      %v142 = vperm.slane %v140, 0
      %v144 = vadd.f32 %v138, %v142
      %v145 = vadd.f32 %v139, %v142
      %v146 = vld [vmem:[%s3] sm:$0xf]
      %v147 = vld [vmem:[%s3 + $0x4] sm:$0xf]
      %v148 = vunpack.c.l.bf16 %v146
      %v149 = vunpack.c.l.bf16 %v147
      %v150 = vadd.f32 %v144, %v148
      %v151 = vadd.f32 %v145, %v149
      %v152 = vsel %vm113, %v150, 0.0
      %153 = vadd.xlane.f32.xlu0 %v152
      %v154 = vpop.xlane.xlu0 %153
      %v155 = vsel %vm113, %v151, 0.0
      %156 = vadd.xlane.f32.xlu0 %v155
      %v157 = vpop.xlane.xlu0 %156
      %v158 = vrcp.pop 32.0
      %v159 = vmul.f32 32.0, %v158
      %v160 = vsub.f32 1.0, %v159
      %v161 = vmul.f32 %v158, %v160
      %v162 = vadd.f32 %v158, %v161
      %vm163 = vweird.f32 %v158
      %v164 = vsel %vm163, %v158, %v162
      %v165 = vmul.f32 %v154, %v164
      %v166 = vmul.f32 %v157, %v164
      %v167 = vsub.f32 %v150, %v165
      %v168 = vsub.f32 %v151, %v166
      %v169 = vmul.f32 %v167, %v167
      %v170 = vmul.f32 %v168, %v168
      %v171 = vsel %vm113, %v169, 0.0
      %172 = vadd.xlane.f32.xlu0 %v171
      %v173 = vpop.xlane.xlu0 %172
      %v174 = vsel %vm113, %v170, 0.0
      %175 = vadd.xlane.f32.xlu0 %v174
      %v176 = vpop.xlane.xlu0 %175
      %v177 = vmul.f32 %v173, %v164
      %v178 = vmul.f32 %v176, %v164
      %v179 = vadd.f32 %v177, 1e-12
      %v180 = vadd.f32 %v178, 1e-12
      %v181 = vrsqrt.pop %v179
      %v182 = vmul.f32 %v181, %v179
      %v183 = vmul.f32 %v182, %v181
      %v184 = vmul.f32 0.5, %v183
      %v185 = vsub.f32 1.5, %v184
      %v186 = vmul.f32 %v181, %v185
      %vm187 = vweird.f32 %v179
      %vm188 = vweird.f32 %v181
      %vm189 = vmor %vm187, %vm188
      %v190 = vsel %vm189, %v181, %v186
      %v191 = vrsqrt.pop %v180
      %v192 = vmul.f32 %v191, %v180
      %v193 = vmul.f32 %v192, %v191
      %v194 = vmul.f32 0.5, %v193
      %v195 = vsub.f32 1.5, %v194
      %v196 = vmul.f32 %v191, %v195
      %vm197 = vweird.f32 %v180
      %vm198 = vweird.f32 %v191
      %vm199 = vmor %vm197, %vm198
      %v200 = vsel %vm199, %v191, %v196
      %v201 = vmul.f32 %v167, %v190
      %v202 = vmul.f32 %v168, %v200
      %v203 = vld [vmem:[#allocation7] sm:$0x1]
      %v205 = vperm.slane %v203, 0
      %v207 = vmul.f32 %v201, %v205
      %v208 = vmul.f32 %v202, %v205
      %v209 = vld [vmem:[#allocation8] sm:$0x1]
      %v211 = vperm.slane %v209, 0
      %v213 = vadd.f32 %v207, %v211
      %v214 = vadd.f32 %v208, %v211
      %v215 = vpack.c.bf16 %v213, %v213
      %v216 = vpack.c.bf16 %v214, %v214
      %vm217 = vcmask 257024
      %218 = vst.msk [vmem:[%s6] sm:$0xf] %vm217, %v215
      %219 = vst.msk [vmem:[%s6 + $0x4] sm:$0xf] %vm217, %v216
    $region49: #{pretrain_split_bert_forward.19} parent=1 // pred_fallthru
      _
    // Predicated region
    $region50: #{pretrain_split_bert_forward.19} parent=1 // pred_check
      _
    $region51: #{pretrain_split_bert_forward.19} parent=1 // pred_check_branch
      %221 = sbr.rel (0) target = $region53
    $region52: #{pretrain_split_bert_forward.19} parent=1 // pred_region
      _
    $region53: #{pretrain_split_bert_forward.19} parent=1 // pred_fallthru
      _
    // Predicated region
    $region54: #{pretrain_split_bert_forward.19} parent=1 // pred_check
      _
    $region55: #{pretrain_split_bert_forward.19} parent=1 // pred_check_branch
      %223 = sbr.rel (0) target = $region57
    $region56: #{pretrain_split_bert_forward.19} parent=1 // pred_region
      _
    $region57: #{pretrain_split_bert_forward.19} parent=1 // pred_fallthru
      _
    %224 = vsyncpa [#allocation4], 1
    %225 = vsyncpa [#allocation6], 1
    %226 = vsyncpa [#allocation9], 1

// kernel: pretrain_split_bert_forward.20
$region0: #{pretrain_split_bert_forward.20}
  #allocation0 [shape = 'u32[]', space=smem, size = 0x4, offset = 0x4, fixed_abs, tag = 'smem constant byte address 0x4 - core index']
  #allocation1 [shape = 'u32[72,128]{1,0:T(1,128)}', space=vmem, size = 0x9000, scoped, tag = 'internal scratch']
  #allocation2 [shape = 'f32[16,64]{1,0:T(8,128)}', space=vmem, size = 0x2000, scoped, tag = 'scratch operand']
  %s0 = inlined_call_operand.vmem [shape: bf16[16,32], index: 0, kind: input, shape index: {}]
  %s1 = inlined_call_operand.hbm [shape: bf16[32,64], index: 1, kind: input, shape index: {}]
  %s2 = inlined_call_operand.hbm [shape: f32[1,64], index: 2, kind: input, shape index: {}]
  %s3 = inlined_call_operand.vmem [shape: bf16[16,64], index: 3, kind: output, shape index: {}]
  %s4 = sld [smem:[#allocation0]]
  $region38: #{pretrain_split_bert_forward.20} parent=0
    _
  %s6 = ssub.s32 1, %s4
  %s7 = scalar_select 0, %s6, %s4
  $region1: #{pretrain_split_bert_forward.20} parent=0
    #allocation3 [shape = 'u8[8192]{0}', space=vmem, size = 0x2000, scoped, tag = 'input window, operand 1, single buffered']
    #allocation4 [shape = 's32[1]{0}', space=sflag, size = 0x4, scoped, tag = 'scoped memory for pretrain_split_bert_forward.20']
    #allocation5 [shape = 'u8[512]{0}', space=vmem, size = 0x400, scoped, tag = 'input window, operand 2, single buffered']
    #allocation6 [shape = 's32[1]{0}', space=sflag, size = 0x4, scoped, tag = 'scoped memory for pretrain_split_bert_forward.20']
    %8 = vsyncpa [#allocation4], 0
    %9 = vsyncpa [#allocation6], 0
    // Predicated region
    $region2: #{pretrain_split_bert_forward.20} parent=1 // pred_check
      _
    $region3: #{pretrain_split_bert_forward.20} parent=1 // pred_check_branch
      %11 = sbr.rel (0) target = $region5
    $region4: #{pretrain_split_bert_forward.20} parent=1 // pred_region
      _
    $region5: #{pretrain_split_bert_forward.20} parent=1 // pred_fallthru
      _
    // Predicated region
    $region6: #{pretrain_split_bert_forward.20} parent=1 // pred_check
      _
    $region7: #{pretrain_split_bert_forward.20} parent=1 // pred_check_branch
      %13 = sbr.rel (0) target = $region9
    $region8: #{pretrain_split_bert_forward.20} parent=1 // pred_region
      %15 = vsyncadd [#allocation4], 0
      %s16 = sshll.u32 %s1, 4
      %s17 = int_to_ptr.hbm [resolvable:$true] %s16
      %s18 = sshll.u32 [#allocation3], 4
      %s19 = int_to_ptr.vmem [resolvable:$true] %s18
      %24 = dma.hbm_to_vmem [thread:$0]  %s17, 256, %s19, [#allocation4], 64, 64, 4
    $region9: #{pretrain_split_bert_forward.20} parent=1 // pred_fallthru
      _
    // Predicated region
    $region10: #{pretrain_split_bert_forward.20} parent=1 // pred_check
      _
    $region11: #{pretrain_split_bert_forward.20} parent=1 // pred_check_branch
      %26 = sbr.rel (0) target = $region13
    $region12: #{pretrain_split_bert_forward.20} parent=1 // pred_region
      %28 = vsyncadd [#allocation6], 0
      %s30 = sshll.u32 %s2, 4
      %s31 = int_to_ptr.hbm [resolvable:$true] %s30
      %s32 = sshll.u32 [#allocation5], 4
      %s33 = int_to_ptr.vmem [resolvable:$true] %s32
      %35 = dma.hbm_to_vmem [thread:$0]  %s31, 16, %s33, [#allocation6]
    $region13: #{pretrain_split_bert_forward.20} parent=1 // pred_fallthru
      _
    // Predicated region
    $region14: #{pretrain_split_bert_forward.20} parent=1 // pred_check
      _
    $region15: #{pretrain_split_bert_forward.20} parent=1 // pred_check_branch
      %37 = sbr.rel (0) target = $region17
    $region16: #{pretrain_split_bert_forward.20} parent=1 // pred_region
      %39 = dma.done [#allocation4], 256
    $region17: #{pretrain_split_bert_forward.20} parent=1 // pred_fallthru
      _
    // Predicated region
    $region18: #{pretrain_split_bert_forward.20} parent=1 // pred_check
      _
    $region19: #{pretrain_split_bert_forward.20} parent=1 // pred_check_branch
      %41 = sbr.rel (0) target = $region21
    $region20: #{pretrain_split_bert_forward.20} parent=1 // pred_region
      %43 = dma.done [#allocation6], 16
    $region21: #{pretrain_split_bert_forward.20} parent=1 // pred_fallthru
      _
    %p45 = scmp.eq.s32.totalorder 0, 0
    // Predicated region
    $region22: #{pretrain_split_bert_forward.20} parent=1 // pred_check
      %p46 = pneg %p45
    $region23: #{pretrain_split_bert_forward.20} parent=1 // pred_check_branch
      %48 = sbr.rel (%p46) target = $region25
    $region24: #{pretrain_split_bert_forward.20} parent=1 // pred_region
      %vm49 = vcmask 523264
      %50 = vst.msk [vmem:[#allocation2] sm:$0xff] %vm49, 0.0
      %51 = vst.msk [vmem:[#allocation2 + $0x8] sm:$0xff] %vm49, 0.0
    $region25: #{pretrain_split_bert_forward.20} parent=1 // pred_fallthru
      _
    %v52 = vld [vmem:[#allocation2] sm:$0xff]
    %v53 = vld [vmem:[#allocation2 + $0x8] sm:$0xff]
    %v54 = vld [vmem:[%s0] sm:$0xf]
    %v55 = vld [vmem:[%s0 + $0x4] sm:$0xf]
    %v56 = vld [vmem:[#allocation3] sm:$0xf]
    %v57 = vld [vmem:[#allocation3 + $0x4] sm:$0xf]
    %v58 = vld [vmem:[#allocation3 + $0x8] sm:$0xf]
    %v59 = vld [vmem:[#allocation3 + $0xc] sm:$0xf]
    %v62 = vunpack.c.l.b16 %v54
    %v63 = vunpack.c.l.b16 %v55
    %v64 = vpack.c.b16 %v63, %v62
    %v69 = vunpack.c.l.b16 %v56
    %v70 = vunpack.c.l.b16 %v57
    %v71 = vunpack.c.l.b16 %v58
    %v72 = vunpack.c.l.b16 %v59
    %v73 = vpack.c.b16 %v70, %v69
    %v74 = vpack.c.b16 %v72, %v71
    %vm77 = vcmask 261120
    %v79 = vsel %vm77, %v64, 0
    %81 = vmatpush.bf16.msra.mxu0 0
    %82 = vmatpush.bf16.msra.mxu0 0
    %83 = vmatpush.bf16.msra.mxu0 0
    %84 = vmatpush.bf16.msra.mxu0 0
    %85 = vmatpush.bf16.msra.mxu0 0
    %86 = vmatpush.bf16.msra.mxu0 0
    %87 = vmatpush.bf16.msra.mxu0 %v74
    %88 = vmatpush.bf16.msra.mxu0 %v73
    %89 = vmatmul.bf16.gmra.mxu0 %v79
    %v90 = vpop.f32.mrf.mxu0
    %v91 = vadd.f32 0.0, %v90
    %v92 = vpop.f32.mrf.mxu0
    %v93 = vadd.f32 0.0, %v92
    %94 = vdwg.mxu0
    %v95 = vadd.f32 %v52, %v91
    %v96 = vadd.f32 %v53, %v93
    %vm97 = vcmask 523264
    %98 = vst.msk [vmem:[#allocation2] sm:$0xff] %vm97, %v95
    %99 = vst.msk [vmem:[#allocation2 + $0x8] sm:$0xff] %vm97, %v96
    // Predicated region
    $region26: #{pretrain_split_bert_forward.20} parent=1 // pred_check
      %p100 = pneg %p45
    $region27: #{pretrain_split_bert_forward.20} parent=1 // pred_check_branch
      %102 = sbr.rel (%p100) target = $region29
    $region28: #{pretrain_split_bert_forward.20} parent=1 // pred_region
      %v103 = vld [vmem:[#allocation2] sm:$0xff]
      %v104 = vld [vmem:[#allocation2 + $0x8] sm:$0xff]
      %v105 = vld [vmem:[#allocation5] sm:$0x1]
      %v107 = vperm.slane %v105, 0
      %v109 = vadd.f32 %v103, %v107
      %v110 = vadd.f32 %v104, %v107
      %v111 = vmul.f32 %v109, %v109
      %v112 = vmul.f32 %v110, %v110
      %v113 = vmul.f32 %v109, %v111
      %v114 = vmul.f32 %v110, %v112
      %v115 = vmul.f32 %v113, 0.044715
      %v116 = vmul.f32 %v114, 0.044715
      %v117 = vadd.f32 %v109, %v115
      %v118 = vadd.f32 %v110, %v116
      %v119 = vmul.f32 %v117, 0.7978846
      %v120 = vmul.f32 %v118, 0.7978846
      %v121 = vtanh.pop %v119
      %v122 = vtanh.pop %v120
      %v123 = vadd.f32 %v121, 1.0
      %v124 = vadd.f32 %v122, 1.0
      %v125 = vmul.f32 %v123, 0.5
      %v126 = vmul.f32 %v124, 0.5
      %v127 = vmul.f32 %v109, %v125
      %v128 = vmul.f32 %v110, %v126
      %v129 = vpack.c.bf16 %v127, %v127
      %v130 = vpack.c.bf16 %v128, %v128
      %vm131 = vcmask 519168
      %132 = vst.msk [vmem:[%s3] sm:$0xf] %vm131, %v129
      %133 = vst.msk [vmem:[%s3 + $0x4] sm:$0xf] %vm131, %v130
    $region29: #{pretrain_split_bert_forward.20} parent=1 // pred_fallthru
      _
    // Predicated region
    $region30: #{pretrain_split_bert_forward.20} parent=1 // pred_check
      _
    $region31: #{pretrain_split_bert_forward.20} parent=1 // pred_check_branch
      %135 = sbr.rel (0) target = $region33
    $region32: #{pretrain_split_bert_forward.20} parent=1 // pred_region
      _
    $region33: #{pretrain_split_bert_forward.20} parent=1 // pred_fallthru
      _
    // Predicated region
    $region34: #{pretrain_split_bert_forward.20} parent=1 // pred_check
      _
    $region35: #{pretrain_split_bert_forward.20} parent=1 // pred_check_branch
      %137 = sbr.rel (0) target = $region37
    $region36: #{pretrain_split_bert_forward.20} parent=1 // pred_region
      _
    $region37: #{pretrain_split_bert_forward.20} parent=1 // pred_fallthru
      _
    %138 = vsyncpa [#allocation4], 1
    %139 = vsyncpa [#allocation6], 1

// kernel: pretrain_split_bert_forward.21
$region0: #{pretrain_split_bert_forward.21}
  #allocation0 [shape = 'u32[]', space=smem, size = 0x4, offset = 0x4, fixed_abs, tag = 'smem constant byte address 0x4 - core index']
  #allocation1 [shape = 'u32[72,128]{1,0:T(1,128)}', space=vmem, size = 0x9000, scoped, tag = 'internal scratch']
  #allocation2 [shape = 'f32[16,32]{1,0:T(8,128)}', space=vmem, size = 0x2000, scoped, tag = 'scratch operand']
  %s0 = inlined_call_operand.vmem [shape: bf16[16,64], index: 0, kind: input, shape index: {}]
  %s1 = inlined_call_operand.vmem [shape: bf16[64,32], index: 1, kind: input, shape index: {}]
  %s2 = inlined_call_operand.hbm [shape: f32[1,32], index: 2, kind: input, shape index: {}]
  %s3 = inlined_call_operand.vmem [shape: bf16[16,32], index: 3, kind: input, shape index: {}]
  %s4 = inlined_call_operand.hbm [shape: f32[1,32], index: 4, kind: input, shape index: {}]
  %s5 = inlined_call_operand.hbm [shape: f32[1,32], index: 5, kind: input, shape index: {}]
  %s6 = inlined_call_operand.vmem [shape: bf16[16,32], index: 6, kind: output, shape index: {}]
  %s7 = sld [smem:[#allocation0]]
  $region54: #{pretrain_split_bert_forward.21} parent=0
    _
  %s9 = ssub.s32 1, %s7
  %s10 = scalar_select 0, %s9, %s7
  $region1: #{pretrain_split_bert_forward.21} parent=0
    #allocation3 [shape = 'u8[512]{0}', space=vmem, size = 0x400, scoped, tag = 'input window, operand 2, single buffered']
    #allocation4 [shape = 's32[1]{0}', space=sflag, size = 0x4, scoped, tag = 'scoped memory for pretrain_split_bert_forward.21']
    #allocation5 [shape = 'u8[512]{0}', space=vmem, size = 0x400, scoped, tag = 'input window, operand 4, single buffered']
    #allocation6 [shape = 's32[1]{0}', space=sflag, size = 0x4, scoped, tag = 'scoped memory for pretrain_split_bert_forward.21']
    #allocation7 [shape = 'u8[512]{0}', space=vmem, size = 0x400, scoped, tag = 'input window, operand 5, single buffered']
    %11 = vsyncpa [#allocation4], 0
    %12 = vsyncpa [#allocation6], 0
    // Predicated region
    $region2: #{pretrain_split_bert_forward.21} parent=1 // pred_check
      _
    $region3: #{pretrain_split_bert_forward.21} parent=1 // pred_check_branch
      %14 = sbr.rel (0) target = $region5
    $region4: #{pretrain_split_bert_forward.21} parent=1 // pred_region
      _
    $region5: #{pretrain_split_bert_forward.21} parent=1 // pred_fallthru
      _
    // Predicated region
    $region6: #{pretrain_split_bert_forward.21} parent=1 // pred_check
      _
    $region7: #{pretrain_split_bert_forward.21} parent=1 // pred_check_branch
      %16 = sbr.rel (0) target = $region9
    $region8: #{pretrain_split_bert_forward.21} parent=1 // pred_region
      _
    $region9: #{pretrain_split_bert_forward.21} parent=1 // pred_fallthru
      _
    // Predicated region
    $region10: #{pretrain_split_bert_forward.21} parent=1 // pred_check
      _
    $region11: #{pretrain_split_bert_forward.21} parent=1 // pred_check_branch
      %18 = sbr.rel (0) target = $region13
    $region12: #{pretrain_split_bert_forward.21} parent=1 // pred_region
      %20 = vsyncadd [#allocation4], 0
      %s22 = sshll.u32 %s2, 4
      %s23 = int_to_ptr.hbm [resolvable:$true] %s22
      %s24 = sshll.u32 [#allocation3], 4
      %s25 = int_to_ptr.vmem [resolvable:$true] %s24
      %27 = dma.hbm_to_vmem [thread:$0]  %s23, 16, %s25, [#allocation4]
    $region13: #{pretrain_split_bert_forward.21} parent=1 // pred_fallthru
      _
    // Predicated region
    $region14: #{pretrain_split_bert_forward.21} parent=1 // pred_check
      _
    $region15: #{pretrain_split_bert_forward.21} parent=1 // pred_check_branch
      %29 = sbr.rel (0) target = $region17
    $region16: #{pretrain_split_bert_forward.21} parent=1 // pred_region
      _
    $region17: #{pretrain_split_bert_forward.21} parent=1 // pred_fallthru
      _
    // Predicated region
    $region18: #{pretrain_split_bert_forward.21} parent=1 // pred_check
      _
    $region19: #{pretrain_split_bert_forward.21} parent=1 // pred_check_branch
      %31 = sbr.rel (0) target = $region21
    $region20: #{pretrain_split_bert_forward.21} parent=1 // pred_region
      %33 = vsyncadd [#allocation6], 0
      %s35 = sshll.u32 %s4, 4
      %s36 = int_to_ptr.hbm [resolvable:$true] %s35
      %s37 = sshll.u32 [#allocation5], 4
      %s38 = int_to_ptr.vmem [resolvable:$true] %s37
      %40 = dma.hbm_to_vmem [thread:$0]  %s36, 16, %s38, [#allocation6]
    $region21: #{pretrain_split_bert_forward.21} parent=1 // pred_fallthru
      _
    // Predicated region
    $region22: #{pretrain_split_bert_forward.21} parent=1 // pred_check
      _
    $region23: #{pretrain_split_bert_forward.21} parent=1 // pred_check_branch
      %42 = sbr.rel (0) target = $region25
    $region24: #{pretrain_split_bert_forward.21} parent=1 // pred_region
      %44 = vsyncadd [#allocation6], 0
      %s46 = sshll.u32 %s5, 4
      %s47 = int_to_ptr.hbm [resolvable:$true] %s46
      %s48 = sshll.u32 [#allocation7], 4
      %s49 = int_to_ptr.vmem [resolvable:$true] %s48
      %51 = dma.hbm_to_vmem [thread:$0]  %s47, 16, %s49, [#allocation6]
    $region25: #{pretrain_split_bert_forward.21} parent=1 // pred_fallthru
      _
    // Predicated region
    $region26: #{pretrain_split_bert_forward.21} parent=1 // pred_check
      _
    $region27: #{pretrain_split_bert_forward.21} parent=1 // pred_check_branch
      %53 = sbr.rel (0) target = $region29
    $region28: #{pretrain_split_bert_forward.21} parent=1 // pred_region
      %55 = dma.done [#allocation4], 16
    $region29: #{pretrain_split_bert_forward.21} parent=1 // pred_fallthru
      _
    // Predicated region
    $region30: #{pretrain_split_bert_forward.21} parent=1 // pred_check
      _
    $region31: #{pretrain_split_bert_forward.21} parent=1 // pred_check_branch
      %57 = sbr.rel (0) target = $region33
    $region32: #{pretrain_split_bert_forward.21} parent=1 // pred_region
      %59 = dma.done [#allocation6], 16
    $region33: #{pretrain_split_bert_forward.21} parent=1 // pred_fallthru
      _
    // Predicated region
    $region34: #{pretrain_split_bert_forward.21} parent=1 // pred_check
      _
    $region35: #{pretrain_split_bert_forward.21} parent=1 // pred_check_branch
      %61 = sbr.rel (0) target = $region37
    $region36: #{pretrain_split_bert_forward.21} parent=1 // pred_region
      %63 = dma.done [#allocation6], 16
    $region37: #{pretrain_split_bert_forward.21} parent=1 // pred_fallthru
      _
    %p65 = scmp.eq.s32.totalorder 0, 0
    // Predicated region
    $region38: #{pretrain_split_bert_forward.21} parent=1 // pred_check
      %p66 = pneg %p65
    $region39: #{pretrain_split_bert_forward.21} parent=1 // pred_check_branch
      %68 = sbr.rel (%p66) target = $region41
    $region40: #{pretrain_split_bert_forward.21} parent=1 // pred_region
      %vm69 = vcmask 261120
      %70 = vst.msk [vmem:[#allocation2] sm:$0xff] %vm69, 0.0
      %71 = vst.msk [vmem:[#allocation2 + $0x8] sm:$0xff] %vm69, 0.0
    $region41: #{pretrain_split_bert_forward.21} parent=1 // pred_fallthru
      _
    %v72 = vld [vmem:[#allocation2] sm:$0xff]
    %v73 = vld [vmem:[#allocation2 + $0x8] sm:$0xff]
    %v74 = vld [vmem:[%s0] sm:$0xf]
    %v75 = vld [vmem:[%s0 + $0x4] sm:$0xf]
    %v76 = vld [vmem:[%s1] sm:$0xf]
    %v77 = vld [vmem:[%s1 + $0x4] sm:$0xf]
    %v78 = vld [vmem:[%s1 + $0x8] sm:$0xf]
    %v79 = vld [vmem:[%s1 + $0xc] sm:$0xf]
    %v80 = vld [vmem:[%s1 + $0x10] sm:$0xf]
    %v81 = vld [vmem:[%s1 + $0x14] sm:$0xf]
    %v82 = vld [vmem:[%s1 + $0x18] sm:$0xf]
    %v83 = vld [vmem:[%s1 + $0x1c] sm:$0xf]
    %v86 = vunpack.c.l.b16 %v74
    %v87 = vunpack.c.l.b16 %v75
    %v88 = vpack.c.b16 %v87, %v86
    %v97 = vunpack.c.l.b16 %v76
    %v98 = vunpack.c.l.b16 %v77
    %v99 = vunpack.c.l.b16 %v78
    %v100 = vunpack.c.l.b16 %v79
    %v101 = vunpack.c.l.b16 %v80
    %v102 = vunpack.c.l.b16 %v81
    %v103 = vunpack.c.l.b16 %v82
    %v104 = vunpack.c.l.b16 %v83
    %v105 = vpack.c.b16 %v98, %v97
    %v106 = vpack.c.b16 %v100, %v99
    %v107 = vpack.c.b16 %v102, %v101
    %v108 = vpack.c.b16 %v104, %v103
    %vm113 = vcmask 523264
    %v115 = vsel %vm113, %v88, 0
    %117 = vmatpush.bf16.msra.mxu0 0
    %118 = vmatpush.bf16.msra.mxu0 0
    %119 = vmatpush.bf16.msra.mxu0 0
    %120 = vmatpush.bf16.msra.mxu0 0
    %121 = vmatpush.bf16.msra.mxu0 %v108
    %122 = vmatpush.bf16.msra.mxu0 %v107
    %123 = vmatpush.bf16.msra.mxu0 %v106
    %124 = vmatpush.bf16.msra.mxu0 %v105
    %125 = vmatmul.bf16.gmra.mxu0 %v115
    %v126 = vpop.f32.mrf.mxu0
    %v127 = vadd.f32 0.0, %v126
    %v128 = vpop.f32.mrf.mxu0
    %v129 = vadd.f32 0.0, %v128
    %130 = vdwg.mxu0
    %v131 = vadd.f32 %v72, %v127
    %v132 = vadd.f32 %v73, %v129
    %vm133 = vcmask 261120
    %134 = vst.msk [vmem:[#allocation2] sm:$0xff] %vm133, %v131
    %135 = vst.msk [vmem:[#allocation2 + $0x8] sm:$0xff] %vm133, %v132
    // Predicated region
    $region42: #{pretrain_split_bert_forward.21} parent=1 // pred_check
      %p136 = pneg %p65
    $region43: #{pretrain_split_bert_forward.21} parent=1 // pred_check_branch
      %138 = sbr.rel (%p136) target = $region45
    $region44: #{pretrain_split_bert_forward.21} parent=1 // pred_region
      %v139 = vld [vmem:[#allocation2] sm:$0xff]
      %v140 = vld [vmem:[#allocation2 + $0x8] sm:$0xff]
      %v141 = vld [vmem:[#allocation3] sm:$0x1]
      %v143 = vperm.slane %v141, 0
      %v145 = vadd.f32 %v139, %v143
      %v146 = vadd.f32 %v140, %v143
      %v147 = vld [vmem:[%s3] sm:$0xf]
      %v148 = vld [vmem:[%s3 + $0x4] sm:$0xf]
      %v149 = vunpack.c.l.bf16 %v147
      %v150 = vunpack.c.l.bf16 %v148
      %v151 = vadd.f32 %v145, %v149
      %v152 = vadd.f32 %v146, %v150
      %v153 = vsel %vm133, %v151, 0.0
      %154 = vadd.xlane.f32.xlu0 %v153
      %v155 = vpop.xlane.xlu0 %154
      %v156 = vsel %vm133, %v152, 0.0
      %157 = vadd.xlane.f32.xlu0 %v156
      %v158 = vpop.xlane.xlu0 %157
      %v159 = vrcp.pop 32.0
      %v160 = vmul.f32 32.0, %v159
      %v161 = vsub.f32 1.0, %v160
      %v162 = vmul.f32 %v159, %v161
      %v163 = vadd.f32 %v159, %v162
      %vm164 = vweird.f32 %v159
      %v165 = vsel %vm164, %v159, %v163
      %v166 = vmul.f32 %v155, %v165
      %v167 = vmul.f32 %v158, %v165
      %v168 = vsub.f32 %v151, %v166
      %v169 = vsub.f32 %v152, %v167
      %v170 = vmul.f32 %v168, %v168
      %v171 = vmul.f32 %v169, %v169
      %v172 = vsel %vm133, %v170, 0.0
      %173 = vadd.xlane.f32.xlu0 %v172
      %v174 = vpop.xlane.xlu0 %173
      %v175 = vsel %vm133, %v171, 0.0
      %176 = vadd.xlane.f32.xlu0 %v175
      %v177 = vpop.xlane.xlu0 %176
      %v178 = vmul.f32 %v174, %v165
      %v179 = vmul.f32 %v177, %v165
      %v180 = vadd.f32 %v178, 1e-12
      %v181 = vadd.f32 %v179, 1e-12
      %v182 = vrsqrt.pop %v180
      %v183 = vmul.f32 %v182, %v180
      %v184 = vmul.f32 %v183, %v182
      %v185 = vmul.f32 0.5, %v184
      %v186 = vsub.f32 1.5, %v185
      %v187 = vmul.f32 %v182, %v186
      %vm188 = vweird.f32 %v180
      %vm189 = vweird.f32 %v182
      %vm190 = vmor %vm188, %vm189
      %v191 = vsel %vm190, %v182, %v187
      %v192 = vrsqrt.pop %v181
      %v193 = vmul.f32 %v192, %v181
      %v194 = vmul.f32 %v193, %v192
      %v195 = vmul.f32 0.5, %v194
      %v196 = vsub.f32 1.5, %v195
      %v197 = vmul.f32 %v192, %v196
      %vm198 = vweird.f32 %v181
      %vm199 = vweird.f32 %v192
      %vm200 = vmor %vm198, %vm199
      %v201 = vsel %vm200, %v192, %v197
      %v202 = vmul.f32 %v168, %v191
      %v203 = vmul.f32 %v169, %v201
      %v204 = vld [vmem:[#allocation5] sm:$0x1]
      %v206 = vperm.slane %v204, 0
      %v208 = vmul.f32 %v202, %v206
      %v209 = vmul.f32 %v203, %v206
      %v210 = vld [vmem:[#allocation7] sm:$0x1]
      %v212 = vperm.slane %v210, 0
      %v214 = vadd.f32 %v208, %v212
      %v215 = vadd.f32 %v209, %v212
      %v216 = vpack.c.bf16 %v214, %v214
      %v217 = vpack.c.bf16 %v215, %v215
      %vm218 = vcmask 257024
      %219 = vst.msk [vmem:[%s6] sm:$0xf] %vm218, %v216
      %220 = vst.msk [vmem:[%s6 + $0x4] sm:$0xf] %vm218, %v217
    $region45: #{pretrain_split_bert_forward.21} parent=1 // pred_fallthru
      _
    // Predicated region
    $region46: #{pretrain_split_bert_forward.21} parent=1 // pred_check
      _
    $region47: #{pretrain_split_bert_forward.21} parent=1 // pred_check_branch
      %222 = sbr.rel (0) target = $region49
    $region48: #{pretrain_split_bert_forward.21} parent=1 // pred_region
      _
    $region49: #{pretrain_split_bert_forward.21} parent=1 // pred_fallthru
      _
    // Predicated region
    $region50: #{pretrain_split_bert_forward.21} parent=1 // pred_check
      _
    $region51: #{pretrain_split_bert_forward.21} parent=1 // pred_check_branch
      %224 = sbr.rel (0) target = $region53
    $region52: #{pretrain_split_bert_forward.21} parent=1 // pred_region
      _
    $region53: #{pretrain_split_bert_forward.21} parent=1 // pred_fallthru
      _
    %225 = vsyncpa [#allocation4], 1
    %226 = vsyncpa [#allocation6], 1

// kernel: pretrain_split_bert_forward.15
$region0: #{pretrain_split_bert_forward.15}
  #allocation0 [shape = 'u32[]', space=smem, size = 0x4, offset = 0x4, fixed_abs, tag = 'smem constant byte address 0x4 - core index']
  #allocation1 [shape = 'u32[72,128]{1,0:T(1,128)}', space=vmem, size = 0x9000, scoped, tag = 'internal scratch']
  %s0 = inlined_call_operand.vmem [shape: bf16[2,2048], index: 0, kind: input, shape index: {}]
  %s1 = inlined_call_operand.hbm [shape: f32[1,2048], index: 1, kind: input, shape index: {}]
  %s2 = inlined_call_operand.hbm [shape: f32[1,2048], index: 2, kind: input, shape index: {}]
  %s3 = inlined_call_operand.vmem [shape: bf16[2,2048], index: 3, kind: output, shape index: {}]
  %s4 = sld [smem:[#allocation0]]
  $region30: #{pretrain_split_bert_forward.15} parent=0
    _
  %s6 = ssub.s32 1, %s4
  %s7 = scalar_select 0, %s6, %s4
  $region1: #{pretrain_split_bert_forward.15} parent=0
    #allocation2 [shape = 'u8[8192]{0}', space=vmem, size = 0x2000, scoped, tag = 'input window, operand 1, single buffered']
    #allocation3 [shape = 's32[1]{0}', space=sflag, size = 0x4, scoped, tag = 'scoped memory for pretrain_split_bert_forward.15']
    #allocation4 [shape = 'u8[8192]{0}', space=vmem, size = 0x2000, scoped, tag = 'input window, operand 2, single buffered']
    #allocation5 [shape = 's32[1]{0}', space=sflag, size = 0x4, scoped, tag = 'scoped memory for pretrain_split_bert_forward.15']
    %8 = vsyncpa [#allocation3], 0
    %9 = vsyncpa [#allocation5], 0
    // Predicated region
    $region2: #{pretrain_split_bert_forward.15} parent=1 // pred_check
      _
    $region3: #{pretrain_split_bert_forward.15} parent=1 // pred_check_branch
      %11 = sbr.rel (0) target = $region5
    $region4: #{pretrain_split_bert_forward.15} parent=1 // pred_region
      _
    $region5: #{pretrain_split_bert_forward.15} parent=1 // pred_fallthru
      _
    // Predicated region
    $region6: #{pretrain_split_bert_forward.15} parent=1 // pred_check
      _
    $region7: #{pretrain_split_bert_forward.15} parent=1 // pred_check_branch
      %13 = sbr.rel (0) target = $region9
    $region8: #{pretrain_split_bert_forward.15} parent=1 // pred_region
      %15 = vsyncadd [#allocation3], 0
      %s17 = sshll.u32 %s1, 4
      %s18 = int_to_ptr.hbm [resolvable:$true] %s17
      %s19 = sshll.u32 [#allocation2], 4
      %s20 = int_to_ptr.vmem [resolvable:$true] %s19
      %22 = dma.hbm_to_vmem [thread:$0]  %s18, 256, %s20, [#allocation3]
    $region9: #{pretrain_split_bert_forward.15} parent=1 // pred_fallthru
      _
    // Predicated region
    $region10: #{pretrain_split_bert_forward.15} parent=1 // pred_check
      _
    $region11: #{pretrain_split_bert_forward.15} parent=1 // pred_check_branch
      %24 = sbr.rel (0) target = $region13
    $region12: #{pretrain_split_bert_forward.15} parent=1 // pred_region
      %26 = vsyncadd [#allocation5], 0
      %s28 = sshll.u32 %s2, 4
      %s29 = int_to_ptr.hbm [resolvable:$true] %s28
      %s30 = sshll.u32 [#allocation4], 4
      %s31 = int_to_ptr.vmem [resolvable:$true] %s30
      %33 = dma.hbm_to_vmem [thread:$0]  %s29, 256, %s31, [#allocation5]
    $region13: #{pretrain_split_bert_forward.15} parent=1 // pred_fallthru
      _
    // Predicated region
    $region14: #{pretrain_split_bert_forward.15} parent=1 // pred_check
      _
    $region15: #{pretrain_split_bert_forward.15} parent=1 // pred_check_branch
      %35 = sbr.rel (0) target = $region17
    $region16: #{pretrain_split_bert_forward.15} parent=1 // pred_region
      %37 = dma.done [#allocation3], 256
    $region17: #{pretrain_split_bert_forward.15} parent=1 // pred_fallthru
      _
    // Predicated region
    $region18: #{pretrain_split_bert_forward.15} parent=1 // pred_check
      _
    $region19: #{pretrain_split_bert_forward.15} parent=1 // pred_check_branch
      %39 = sbr.rel (0) target = $region21
    $region20: #{pretrain_split_bert_forward.15} parent=1 // pred_region
      %41 = dma.done [#allocation5], 256
    $region21: #{pretrain_split_bert_forward.15} parent=1 // pred_fallthru
      _
    %v42 = vld [vmem:[%s0] sm:$0xff]
    %v43 = vld [vmem:[%s0 + $0x8] sm:$0xff]
    %v44 = vunpack.c.l.bf16 %v42
    %v45 = vunpack.c.h.bf16 %v42
    %v46 = vunpack.c.l.bf16 %v43
    %v47 = vunpack.c.h.bf16 %v43
    %52 = vst [vmem:[#allocation1] ss:$4 sm:$0xff] %v44
    %s53 = scalar_lea.vmem [#allocation1], 32
    %54 = vst [vmem:[%s53] ss:$4 sm:$0xff] %v45
    %v55 = vld.sshfl [vmem:[#allocation1] sm:$0xff pattern:$0x73625140]
    %v56 = vld.sshfl [vmem:[#allocation1 + $0x8] sm:$0xff pattern:$0x73625140]
    %v57 = vld.sshfl [vmem:[#allocation1 + $0x10] sm:$0xff pattern:$0x73625140]
    %v58 = vld.sshfl [vmem:[#allocation1 + $0x18] sm:$0xff pattern:$0x73625140]
    %v59 = vld.sshfl [vmem:[#allocation1 + $0x20] sm:$0xff pattern:$0x73625140]
    %v60 = vld.sshfl [vmem:[#allocation1 + $0x28] sm:$0xff pattern:$0x73625140]
    %v61 = vld.sshfl [vmem:[#allocation1 + $0x30] sm:$0xff pattern:$0x73625140]
    %v62 = vld.sshfl [vmem:[#allocation1 + $0x38] sm:$0xff pattern:$0x73625140]
    %63 = vst [vmem:[#allocation1] ss:$4 sm:$0xff] %v46
    %64 = vst [vmem:[%s53] ss:$4 sm:$0xff] %v47
    %v65 = vld.sshfl [vmem:[#allocation1] sm:$0xff pattern:$0x73625140]
    %v66 = vld.sshfl [vmem:[#allocation1 + $0x8] sm:$0xff pattern:$0x73625140]
    %v67 = vld.sshfl [vmem:[#allocation1 + $0x10] sm:$0xff pattern:$0x73625140]
    %v68 = vld.sshfl [vmem:[#allocation1 + $0x18] sm:$0xff pattern:$0x73625140]
    %v69 = vld.sshfl [vmem:[#allocation1 + $0x20] sm:$0xff pattern:$0x73625140]
    %v70 = vld.sshfl [vmem:[#allocation1 + $0x28] sm:$0xff pattern:$0x73625140]
    %v71 = vld.sshfl [vmem:[#allocation1 + $0x30] sm:$0xff pattern:$0x73625140]
    %v72 = vld.sshfl [vmem:[#allocation1 + $0x38] sm:$0xff pattern:$0x73625140]
    %vm89 = vcmask 1041408
    %v90 = vsel %vm89, %v55, 0.0
    %v91 = vsel %vm89, %v56, 0.0
    %v92 = vadd.f32 %v90, %v91
    %v93 = vsel %vm89, %v57, 0.0
    %v94 = vadd.f32 %v92, %v93
    %v95 = vsel %vm89, %v58, 0.0
    %v96 = vadd.f32 %v94, %v95
    %v97 = vsel %vm89, %v59, 0.0
    %v98 = vadd.f32 %v96, %v97
    %v99 = vsel %vm89, %v60, 0.0
    %v100 = vadd.f32 %v98, %v99
    %v101 = vsel %vm89, %v61, 0.0
    %v102 = vadd.f32 %v100, %v101
    %v103 = vsel %vm89, %v62, 0.0
    %v104 = vadd.f32 %v102, %v103
    %v105 = vsel %vm89, %v65, 0.0
    %v106 = vadd.f32 %v104, %v105
    %v107 = vsel %vm89, %v66, 0.0
    %v108 = vadd.f32 %v106, %v107
    %v109 = vsel %vm89, %v67, 0.0
    %v110 = vadd.f32 %v108, %v109
    %v111 = vsel %vm89, %v68, 0.0
    %v112 = vadd.f32 %v110, %v111
    %v113 = vsel %vm89, %v69, 0.0
    %v114 = vadd.f32 %v112, %v113
    %v115 = vsel %vm89, %v70, 0.0
    %v116 = vadd.f32 %v114, %v115
    %v117 = vsel %vm89, %v71, 0.0
    %v118 = vadd.f32 %v116, %v117
    %v119 = vsel %vm89, %v72, 0.0
    %v120 = vadd.f32 %v118, %v119
    %121 = vadd.xlane.f32.xlu0 %v120
    %v122 = vpop.xlane.xlu0 %121
    %v123 = vrcp.pop 2048.0
    %v124 = vmul.f32 2048.0, %v123
    %v125 = vsub.f32 1.0, %v124
    %v126 = vmul.f32 %v123, %v125
    %v127 = vadd.f32 %v123, %v126
    %vm128 = vweird.f32 %v123
    %v129 = vsel %vm128, %v123, %v127
    %v130 = vmul.f32 %v122, %v129
    %v133 = vunpack.c.l.s4 269488144
    %v134 = vunpack.c.0.s8 %v133
    %v135 = vperm.slane %v130, %v134
    %v137 = vsub.f32 %v44, %v135
    %v138 = vsub.f32 %v45, %v135
    %v139 = vsub.f32 %v46, %v135
    %v140 = vsub.f32 %v47, %v135
    %v141 = vmul.f32 %v137, %v137
    %v142 = vmul.f32 %v138, %v138
    %v143 = vmul.f32 %v139, %v139
    %v144 = vmul.f32 %v140, %v140
    %149 = vst [vmem:[#allocation1] ss:$4 sm:$0xff] %v141
    %s150 = scalar_lea.vmem [#allocation1], 32
    %151 = vst [vmem:[%s150] ss:$4 sm:$0xff] %v142
    %v152 = vld.sshfl [vmem:[#allocation1] sm:$0xff pattern:$0x73625140]
    %v153 = vld.sshfl [vmem:[#allocation1 + $0x8] sm:$0xff pattern:$0x73625140]
    %v154 = vld.sshfl [vmem:[#allocation1 + $0x10] sm:$0xff pattern:$0x73625140]
    %v155 = vld.sshfl [vmem:[#allocation1 + $0x18] sm:$0xff pattern:$0x73625140]
    %v156 = vld.sshfl [vmem:[#allocation1 + $0x20] sm:$0xff pattern:$0x73625140]
    %v157 = vld.sshfl [vmem:[#allocation1 + $0x28] sm:$0xff pattern:$0x73625140]
    %v158 = vld.sshfl [vmem:[#allocation1 + $0x30] sm:$0xff pattern:$0x73625140]
    %v159 = vld.sshfl [vmem:[#allocation1 + $0x38] sm:$0xff pattern:$0x73625140]
    %160 = vst [vmem:[#allocation1] ss:$4 sm:$0xff] %v143
    %161 = vst [vmem:[%s150] ss:$4 sm:$0xff] %v144
    %v162 = vld.sshfl [vmem:[#allocation1] sm:$0xff pattern:$0x73625140]
    %v163 = vld.sshfl [vmem:[#allocation1 + $0x8] sm:$0xff pattern:$0x73625140]
    %v164 = vld.sshfl [vmem:[#allocation1 + $0x10] sm:$0xff pattern:$0x73625140]
    %v165 = vld.sshfl [vmem:[#allocation1 + $0x18] sm:$0xff pattern:$0x73625140]
    %v166 = vld.sshfl [vmem:[#allocation1 + $0x20] sm:$0xff pattern:$0x73625140]
    %v167 = vld.sshfl [vmem:[#allocation1 + $0x28] sm:$0xff pattern:$0x73625140]
    %v168 = vld.sshfl [vmem:[#allocation1 + $0x30] sm:$0xff pattern:$0x73625140]
    %v169 = vld.sshfl [vmem:[#allocation1 + $0x38] sm:$0xff pattern:$0x73625140]
    %v186 = vsel %vm89, %v152, 0.0
    %v187 = vsel %vm89, %v153, 0.0
    %v188 = vadd.f32 %v186, %v187
    %v189 = vsel %vm89, %v154, 0.0
    %v190 = vadd.f32 %v188, %v189
    %v191 = vsel %vm89, %v155, 0.0
    %v192 = vadd.f32 %v190, %v191
    %v193 = vsel %vm89, %v156, 0.0
    %v194 = vadd.f32 %v192, %v193
    %v195 = vsel %vm89, %v157, 0.0
    %v196 = vadd.f32 %v194, %v195
    %v197 = vsel %vm89, %v158, 0.0
    %v198 = vadd.f32 %v196, %v197
    %v199 = vsel %vm89, %v159, 0.0
    %v200 = vadd.f32 %v198, %v199
    %v201 = vsel %vm89, %v162, 0.0
    %v202 = vadd.f32 %v200, %v201
    %v203 = vsel %vm89, %v163, 0.0
    %v204 = vadd.f32 %v202, %v203
    %v205 = vsel %vm89, %v164, 0.0
    %v206 = vadd.f32 %v204, %v205
    %v207 = vsel %vm89, %v165, 0.0
    %v208 = vadd.f32 %v206, %v207
    %v209 = vsel %vm89, %v166, 0.0
    %v210 = vadd.f32 %v208, %v209
    %v211 = vsel %vm89, %v167, 0.0
    %v212 = vadd.f32 %v210, %v211
    %v213 = vsel %vm89, %v168, 0.0
    %v214 = vadd.f32 %v212, %v213
    %v215 = vsel %vm89, %v169, 0.0
    %v216 = vadd.f32 %v214, %v215
    %217 = vadd.xlane.f32.xlu0 %v216
    %v218 = vpop.xlane.xlu0 %217
    %v219 = vmul.f32 %v218, %v129
    %v220 = vadd.f32 %v219, 1e-05
    %v221 = vrsqrt.pop %v220
    %v222 = vmul.f32 %v221, %v220
    %v223 = vmul.f32 %v222, %v221
    %v224 = vmul.f32 0.5, %v223
    %v225 = vsub.f32 1.5, %v224
    %v226 = vmul.f32 %v221, %v225
    %vm227 = vweird.f32 %v220
    %vm228 = vweird.f32 %v221
    %vm229 = vmor %vm227, %vm228
    %v230 = vsel %vm229, %v221, %v226
    %v233 = vunpack.c.l.s4 269488144
    %v234 = vunpack.c.0.s8 %v233
    %v235 = vperm.slane %v230, %v234
    %v237 = vmul.f32 %v137, %v235
    %v238 = vmul.f32 %v138, %v235
    %v239 = vmul.f32 %v139, %v235
    %v240 = vmul.f32 %v140, %v235
    %v241 = vld [vmem:[#allocation2] sm:$0xff]
    %v242 = vld [vmem:[#allocation2 + $0x8] sm:$0xff]
    %v245 = vperm.slane %v241, 0
    %v246 = vperm.slane %v241, 1
    %v247 = vperm.slane %v241, 2
    %v248 = vperm.slane %v241, 3
    %v249 = vperm.slane %v241, 4
    %v250 = vperm.slane %v241, 5
    %v251 = vperm.slane %v241, 6
    %v252 = vperm.slane %v241, 7
    %v253 = vperm.slane %v242, 0
    %v254 = vperm.slane %v242, 1
    %v255 = vperm.slane %v242, 2
    %v256 = vperm.slane %v242, 3
    %v257 = vperm.slane %v242, 4
    %v258 = vperm.slane %v242, 5
    %v259 = vperm.slane %v242, 6
    %v260 = vperm.slane %v242, 7
    %v261 = vrot.slane %v246, 6
    %v262 = vrot.slane %v247, 4
    %v263 = vrot.slane %v248, 2
    %v264 = vrot.slane %v250, 6
    %v265 = vrot.slane %v251, 4
    %v266 = vrot.slane %v252, 2
    %v267 = vrot.slane %v254, 6
    %v268 = vrot.slane %v255, 4
    %v269 = vrot.slane %v256, 2
    %v270 = vrot.slane %v258, 6
    %v271 = vrot.slane %v259, 4
    %v272 = vrot.slane %v260, 2
    %v273 = vsel %vm89, %v245, %v261
    %vm274 = vcmask 1045508
    %v275 = vsel %vm274, %v262, %v263
    %vm276 = vcmask 1043456
    %v277 = vsel %vm276, %v273, %v275
    %v278 = vsel %vm89, %v249, %v264
    %v279 = vsel %vm274, %v265, %v266
    %v280 = vsel %vm276, %v278, %v279
    %v281 = vsel %vm89, %v253, %v267
    %v282 = vsel %vm274, %v268, %v269
    %v283 = vsel %vm276, %v281, %v282
    %v284 = vsel %vm89, %v257, %v270
    %v285 = vsel %vm274, %v271, %v272
    %v286 = vsel %vm276, %v284, %v285
    %v291 = vmul.f32 %v237, %v277
    %v292 = vmul.f32 %v238, %v280
    %v293 = vmul.f32 %v239, %v283
    %v294 = vmul.f32 %v240, %v286
    %v295 = vld [vmem:[#allocation4] sm:$0xff]
    %v296 = vld [vmem:[#allocation4 + $0x8] sm:$0xff]
    %v299 = vperm.slane %v295, 0
    %v300 = vperm.slane %v295, 1
    %v301 = vperm.slane %v295, 2
    %v302 = vperm.slane %v295, 3
    %v303 = vperm.slane %v295, 4
    %v304 = vperm.slane %v295, 5
    %v305 = vperm.slane %v295, 6
    %v306 = vperm.slane %v295, 7
    %v307 = vperm.slane %v296, 0
    %v308 = vperm.slane %v296, 1
    %v309 = vperm.slane %v296, 2
    %v310 = vperm.slane %v296, 3
    %v311 = vperm.slane %v296, 4
    %v312 = vperm.slane %v296, 5
    %v313 = vperm.slane %v296, 6
    %v314 = vperm.slane %v296, 7
    %v315 = vrot.slane %v300, 6
    %v316 = vrot.slane %v301, 4
    %v317 = vrot.slane %v302, 2
    %v318 = vrot.slane %v304, 6
    %v319 = vrot.slane %v305, 4
    %v320 = vrot.slane %v306, 2
    %v321 = vrot.slane %v308, 6
    %v322 = vrot.slane %v309, 4
    %v323 = vrot.slane %v310, 2
    %v324 = vrot.slane %v312, 6
    %v325 = vrot.slane %v313, 4
    %v326 = vrot.slane %v314, 2
    %v327 = vsel %vm89, %v299, %v315
    %v328 = vsel %vm274, %v316, %v317
    %v329 = vsel %vm276, %v327, %v328
    %v330 = vsel %vm89, %v303, %v318
    %v331 = vsel %vm274, %v319, %v320
    %v332 = vsel %vm276, %v330, %v331
    %v333 = vsel %vm89, %v307, %v321
    %v334 = vsel %vm274, %v322, %v323
    %v335 = vsel %vm276, %v333, %v334
    %v336 = vsel %vm89, %v311, %v324
    %v337 = vsel %vm274, %v325, %v326
    %v338 = vsel %vm276, %v336, %v337
    %v343 = vadd.f32 %v291, %v329
    %v344 = vadd.f32 %v292, %v332
    %v345 = vadd.f32 %v293, %v335
    %v346 = vadd.f32 %v294, %v338
    %351 = vst [vmem:[#allocation1] ss:$4 sm:$0xff] %v343
    %s352 = scalar_lea.vmem [#allocation1], 32
    %353 = vst [vmem:[%s352] ss:$4 sm:$0xff] %v344
    %v354 = vld.sshfl [vmem:[#allocation1] sm:$0xff pattern:$0x73625140]
    %v355 = vld.sshfl [vmem:[#allocation1 + $0x8] sm:$0xff pattern:$0x73625140]
    %v356 = vld.sshfl [vmem:[#allocation1 + $0x10] sm:$0xff pattern:$0x73625140]
    %v357 = vld.sshfl [vmem:[#allocation1 + $0x18] sm:$0xff pattern:$0x73625140]
    %v358 = vld.sshfl [vmem:[#allocation1 + $0x20] sm:$0xff pattern:$0x73625140]
    %v359 = vld.sshfl [vmem:[#allocation1 + $0x28] sm:$0xff pattern:$0x73625140]
    %v360 = vld.sshfl [vmem:[#allocation1 + $0x30] sm:$0xff pattern:$0x73625140]
    %v361 = vld.sshfl [vmem:[#allocation1 + $0x38] sm:$0xff pattern:$0x73625140]
    %362 = vst [vmem:[#allocation1] ss:$4 sm:$0xff] %v345
    %363 = vst [vmem:[%s352] ss:$4 sm:$0xff] %v346
    %v364 = vld.sshfl [vmem:[#allocation1] sm:$0xff pattern:$0x73625140]
    %v365 = vld.sshfl [vmem:[#allocation1 + $0x8] sm:$0xff pattern:$0x73625140]
    %v366 = vld.sshfl [vmem:[#allocation1 + $0x10] sm:$0xff pattern:$0x73625140]
    %v367 = vld.sshfl [vmem:[#allocation1 + $0x18] sm:$0xff pattern:$0x73625140]
    %v368 = vld.sshfl [vmem:[#allocation1 + $0x20] sm:$0xff pattern:$0x73625140]
    %v369 = vld.sshfl [vmem:[#allocation1 + $0x28] sm:$0xff pattern:$0x73625140]
    %v370 = vld.sshfl [vmem:[#allocation1 + $0x30] sm:$0xff pattern:$0x73625140]
    %v371 = vld.sshfl [vmem:[#allocation1 + $0x38] sm:$0xff pattern:$0x73625140]
    %v388 = vpack.c.bf16 %v355, %v354
    %v389 = vpack.c.bf16 %v357, %v356
    %v390 = vpack.c.bf16 %v359, %v358
    %v391 = vpack.c.bf16 %v361, %v360
    %v392 = vpack.c.bf16 %v365, %v364
    %v393 = vpack.c.bf16 %v367, %v366
    %v394 = vpack.c.bf16 %v369, %v368
    %v395 = vpack.c.bf16 %v371, %v370
    %v404 = vrot.slane %v388, 3
    %v405 = vrot.slane %v389, 6
    %v406 = vrot.slane %v389, 1
    %v407 = vrot.slane %v390, 4
    %v408 = vrot.slane %v390, 7
    %v409 = vrot.slane %v391, 2
    %v410 = vrot.slane %v391, 5
    %v411 = vrot.slane %v392, 3
    %v412 = vrot.slane %v393, 6
    %v413 = vrot.slane %v393, 1
    %v414 = vrot.slane %v394, 4
    %v415 = vrot.slane %v394, 7
    %v416 = vrot.slane %v395, 2
    %v417 = vrot.slane %v395, 5
    %vm418 = vcmask 1040384
    %v421 = vsel %vm418, %v388, %v404
    %vm422 = vcmask 1042434
    %v425 = vsel %vm422, %v405, %v406
    %v426 = vsel %vm89, %v421, %v425
    %vm427 = vcmask 1044484
    %v430 = vsel %vm427, %v407, %v408
    %vm431 = vcmask 1046534
    %v434 = vsel %vm431, %v409, %v410
    %v435 = vsel %vm274, %v430, %v434
    %v436 = vsel %vm276, %v426, %v435
    %v439 = vsel %vm418, %v392, %v411
    %v442 = vsel %vm422, %v412, %v413
    %v443 = vsel %vm89, %v439, %v442
    %v446 = vsel %vm427, %v414, %v415
    %v449 = vsel %vm431, %v416, %v417
    %v450 = vsel %vm274, %v446, %v449
    %v451 = vsel %vm276, %v443, %v450
    %454 = vst [vmem:[%s3] sm:$0xff] %v436
    %455 = vst [vmem:[%s3 + $0x8] sm:$0xff] %v451
    // Predicated region
    $region22: #{pretrain_split_bert_forward.15} parent=1 // pred_check
      _
    $region23: #{pretrain_split_bert_forward.15} parent=1 // pred_check_branch
      %457 = sbr.rel (0) target = $region25
    $region24: #{pretrain_split_bert_forward.15} parent=1 // pred_region
      _
    $region25: #{pretrain_split_bert_forward.15} parent=1 // pred_fallthru
      _
    // Predicated region
    $region26: #{pretrain_split_bert_forward.15} parent=1 // pred_check
      _
    $region27: #{pretrain_split_bert_forward.15} parent=1 // pred_check_branch
      %459 = sbr.rel (0) target = $region29
    $region28: #{pretrain_split_bert_forward.15} parent=1 // pred_region
      _
    $region29: #{pretrain_split_bert_forward.15} parent=1 // pred_fallthru
      _
    %460 = vsyncpa [#allocation3], 1
    %461 = vsyncpa [#allocation5], 1

// kernel: pretrain_split_bert_forward.14
$region0: #{pretrain_split_bert_forward.14}
  #allocation0 [shape = 'u32[]', space=smem, size = 0x4, offset = 0x4, fixed_abs, tag = 'smem constant byte address 0x4 - core index']
  #allocation1 [shape = 'u32[72,128]{1,0:T(1,128)}', space=vmem, size = 0x9000, scoped, tag = 'internal scratch']
  #allocation2 [shape = 'f32[2,512]{1,0:T(2,128)}', space=vmem, size = 0x1000, scoped, tag = 'scratch operand']
  %s0 = inlined_call_operand.vmem [shape: bf16[2,2048], index: 0, kind: input, shape index: {}]
  %s1 = inlined_call_operand.hbm [shape: bf16[2048,2048], index: 1, kind: input, shape index: {}]
  %s2 = inlined_call_operand.hbm [shape: f32[1,2048], index: 2, kind: input, shape index: {}]
  %s3 = inlined_call_operand.vmem [shape: bf16[2,2048], index: 3, kind: output, shape index: {}]
  %s4 = sld [smem:[#allocation0]]
  $region61: #{pretrain_split_bert_forward.14} parent=0
    _
  %s6 = ssub.s32 1, %s4
  %s7 = scalar_select 0, %s6, %s4
  $region1: #{pretrain_split_bert_forward.14} parent=0
    #allocation3 [shape = 'u8[1048576]{0}', space=vmem, size = 0x100000, scoped, tag = 'input window, operand 1']
    #allocation4 [shape = 's32[2]{0}', space=sflag, size = 0x8, scoped, tag = 'scoped memory for pretrain_split_bert_forward.14']
    #allocation5 [shape = 'u8[4096]{0}', space=vmem, size = 0x1000, scoped, tag = 'input window, operand 2']
    #allocation6 [shape = 's32[2]{0}', space=sflag, size = 0x8, scoped, tag = 'scoped memory for pretrain_split_bert_forward.14']
    %8 = vsyncpa [#allocation4], 0
    %s9 = scalar_lea.sflag [#allocation4], 1
    %10 = vsyncpa %s9, 0
    %11 = vsyncpa [#allocation6], 0
    %s12 = scalar_lea.sflag [#allocation6], 1
    %13 = vsyncpa %s12, 0
    loop: start=0, step=1, limit=18
    $region2: #{pretrain_split_bert_forward.14} parent=1 // loop_pre_header
      _
    $region3: #{pretrain_split_bert_forward.14} parent=1 // loop_header
      %s15 = sphi 0, %s19
      %p16 = scmp.ge.s32.totalorder %s15, 18
      %s22 = sphi 0, %s41
      %s23 = sphi 0, %s37
      %s24 = sphi 0, %s33
      %s25 = sphi 0, %s22
      %s26 = sphi 0, %s23
      %s27 = sphi 0, %s24
      %s28 = sphi 0, %s25
      %s29 = sphi 0, %s26
      %s30 = sphi 0, %s27
      %s46 = sphi 0, %s48
      %s49 = sphi 0, %s46
      %s50 = sphi 0, %s49
      %s66 = sphi 0, %s50
      %s74 = sphi 0, %s76
      %s77 = sphi 0, %s74
      %s78 = sphi 0, %s77
      %s94 = sphi 0, %s78
      %s100 = sphi 0, %s102
      %s103 = sphi 0, %s100
      %s104 = sphi 0, %s103
      %s120 = sphi 0, %s104
      %s128 = sphi 0, %s130
      %s131 = sphi 0, %s128
      %s132 = sphi 0, %s131
      %s148 = sphi 0, %s132
    $region4: #{pretrain_split_bert_forward.14} parent=1 // loop_header_branch
      %18 = sbr.rel (%p16) target = $region8
    $region5: #{pretrain_split_bert_forward.14} parent=1 // loop_body
      %s20 = ssub.s32 %s15, 1
      %s21 = ssub.s32 %s15, 2
      %s31 = sadd.s32 1, %s24
      %p32 = scmp.ge.s32.totalorder %s31, 4
      %s33 = scalar_select %p32, 0, %s31
      %s34 = sadd.s32 1, %s23
      %s35 = scalar_select %p32, %s34, %s23
      %p36 = scmp.ge.s32.totalorder %s35, 4
      %s37 = scalar_select %p36, 0, %s35
      %s38 = sadd.s32 1, %s22
      %s39 = scalar_select %p36, %s38, %s22
      %p40 = scmp.ge.s32.totalorder %s39, 1
      %s41 = scalar_select %p40, 0, %s39
      %s42 = ssub.s32 %s22, %s41
      %s43 = ssub.s32 %s24, %s33
      %s44 = sor.u32 %s42, %s43
      %p45 = scmp.eq.s32.totalorder %s44, 0
      %s47 = sadd.s32 %s46, 1
      %s48 = scalar_select %p45, %s46, %s47
      %p51 = pneg %p45
      %p52 = scmp.eq.s32.totalorder %s15, 15
      %p53 = por %p51, %p52
      %p54 = scmp.ne.s32.totalorder %s46, %s49
      %p55 = scmp.eq.s32.totalorder %s15, 0
      %p56 = por %p54, %p55
      %p57 = scmp.ne.s32.totalorder %s46, %s49
      %p58 = scmp.eq.s32.totalorder %s20, 15
      %p59 = por %p57, %p58
      %p60 = scmp.ne.s32.totalorder %s49, %s50
      %p61 = scmp.eq.s32.totalorder %s20, 0
      %p62 = por %p60, %p61
      %p63 = scmp.ne.s32.totalorder %s49, %s50
      %p64 = scmp.eq.s32.totalorder %s21, 15
      %p65 = por %p63, %p64
      %p67 = scmp.ne.s32.totalorder %s50, %s66
      %p68 = scmp.eq.s32.totalorder %s21, 0
      %p69 = por %p67, %p68
      %s70 = ssub.s32 %s24, %s33
      %s71 = ssub.s32 %s23, %s37
      %s72 = sor.u32 %s70, %s71
      %p73 = scmp.eq.s32.totalorder %s72, 0
      %s75 = sadd.s32 %s74, 1
      %s76 = scalar_select %p73, %s74, %s75
      %p79 = pneg %p73
      %p80 = scmp.eq.s32.totalorder %s15, 15
      %p81 = por %p79, %p80
      %p82 = scmp.ne.s32.totalorder %s74, %s77
      %p83 = scmp.eq.s32.totalorder %s15, 0
      %p84 = por %p82, %p83
      %p85 = scmp.ne.s32.totalorder %s74, %s77
      %p86 = scmp.eq.s32.totalorder %s20, 15
      %p87 = por %p85, %p86
      %p88 = scmp.ne.s32.totalorder %s77, %s78
      %p89 = scmp.eq.s32.totalorder %s20, 0
      %p90 = por %p88, %p89
      %p91 = scmp.ne.s32.totalorder %s77, %s78
      %p92 = scmp.eq.s32.totalorder %s21, 15
      %p93 = por %p91, %p92
      %p95 = scmp.ne.s32.totalorder %s78, %s94
      %p96 = scmp.eq.s32.totalorder %s21, 0
      %p97 = por %p95, %p96
      %s98 = ssub.s32 %s23, %s37
      %p99 = scmp.eq.s32.totalorder %s98, 0
      %s101 = sadd.s32 %s100, 1
      %s102 = scalar_select %p99, %s100, %s101
      %p105 = pneg %p99
      %p106 = scmp.eq.s32.totalorder %s15, 15
      %p107 = por %p105, %p106
      %p108 = scmp.ne.s32.totalorder %s100, %s103
      %p109 = scmp.eq.s32.totalorder %s15, 0
      %p110 = por %p108, %p109
      %p111 = scmp.ne.s32.totalorder %s100, %s103
      %p112 = scmp.eq.s32.totalorder %s20, 15
      %p113 = por %p111, %p112
      %p114 = scmp.ne.s32.totalorder %s103, %s104
      %p115 = scmp.eq.s32.totalorder %s20, 0
      %p116 = por %p114, %p115
      %p117 = scmp.ne.s32.totalorder %s103, %s104
      %p118 = scmp.eq.s32.totalorder %s21, 15
      %p119 = por %p117, %p118
      %p121 = scmp.ne.s32.totalorder %s104, %s120
      %p122 = scmp.eq.s32.totalorder %s21, 0
      %p123 = por %p121, %p122
      %s124 = ssub.s32 %s22, %s41
      %s125 = ssub.s32 %s23, %s37
      %s126 = sor.u32 %s124, %s125
      %p127 = scmp.eq.s32.totalorder %s126, 0
      %s129 = sadd.s32 %s128, 1
      %s130 = scalar_select %p127, %s128, %s129
      %p133 = pneg %p127
      %p134 = scmp.eq.s32.totalorder %s15, 15
      %p135 = por %p133, %p134
      %p136 = scmp.ne.s32.totalorder %s128, %s131
      %p137 = scmp.eq.s32.totalorder %s15, 0
      %p138 = por %p136, %p137
      %p139 = scmp.ne.s32.totalorder %s128, %s131
      %p140 = scmp.eq.s32.totalorder %s20, 15
      %p141 = por %p139, %p140
      %p142 = scmp.ne.s32.totalorder %s131, %s132
      %p143 = scmp.eq.s32.totalorder %s20, 0
      %p144 = por %p142, %p143
      %p145 = scmp.ne.s32.totalorder %s131, %s132
      %p146 = scmp.eq.s32.totalorder %s21, 15
      %p147 = por %p145, %p146
      %p149 = scmp.ne.s32.totalorder %s132, %s148
      %p150 = scmp.eq.s32.totalorder %s21, 0
      %p151 = por %p149, %p150
      %p152 = scmp.le.s32.totalorder 1, %s15
      %p153 = scmp.lt.s32.totalorder %s15, 17
      %p154 = pnand %p152, %p153
      %p155 = pneg %p154
      // Predicated region
      $region9: #{pretrain_split_bert_forward.14} parent=5 // pred_check
        _
      $region10: #{pretrain_split_bert_forward.14} parent=5 // pred_check_branch
        %157 = sbr.rel (%p154) target = $region12
      $region11: #{pretrain_split_bert_forward.14} parent=5 // pred_region
        %s158 = ssub.s32 %s15, 1
      $region12: #{pretrain_split_bert_forward.14} parent=5 // pred_fallthru
        _
      %p159 = scmp.lt.s32.totalorder %s15, 16
      // Predicated region
      $region13: #{pretrain_split_bert_forward.14} parent=5 // pred_check
        %p160 = pneg %p159
      $region14: #{pretrain_split_bert_forward.14} parent=5 // pred_check_branch
        %162 = sbr.rel (%p160) target = $region16
      $region15: #{pretrain_split_bert_forward.14} parent=5 // pred_region
        // Predicated region
        $region17: #{pretrain_split_bert_forward.14} parent=15 // pred_check
          %p163 = pneg %p56
        $region18: #{pretrain_split_bert_forward.14} parent=15 // pred_check_branch
          %165 = sbr.rel (%p163) target = $region20
        $region19: #{pretrain_split_bert_forward.14} parent=15 // pred_region
          %s166 = smul.u32 4, %s24
          %p167 = scmp.lt.s32.totalorder %s22, 0
          %s168 = scalar_select %p167, %s22, 0
          %p169 = scmp.lt.s32.totalorder %s166, 15
          %s170 = scalar_select %p169, %s166, 15
          %s171 = smul.addr %s168, 16
          %s172 = sadd.s32 %s170, %s171
          %s173 = scalar_lea.vmem %s0, %s172
          %s174 = smul.u32 4, %s24
        $region20: #{pretrain_split_bert_forward.14} parent=15 // pred_fallthru
          _
        // Predicated region
        $region21: #{pretrain_split_bert_forward.14} parent=15 // pred_check
          %p175 = pneg %p84
        $region22: #{pretrain_split_bert_forward.14} parent=15 // pred_check_branch
          %177 = sbr.rel (%p175) target = $region24
        $region23: #{pretrain_split_bert_forward.14} parent=15 // pred_region
          %s178 = sand.u32 %s74, 1
          %s179 = scalar_lea.sflag [#allocation4], %s178
          %s180 = sand.u32 %s74, 1
          %s181 = smul.addr %s180, 1024
          %s182 = scalar_lea.vmem [#allocation3], %s181
          %s183 = smul.u32 64, %s24
          %s184 = smul.u32 4, %s23
          %186 = vsyncadd %s179, 0
          %s187 = smul.addr %s183, 16
          %s188 = sadd.s32 %s184, %s187
          %s189 = smul.addr %s188, 4
          %s190 = scalar_lea.hbm %s1, %s189
          %s191 = sshll.u32 %s190, 4
          %s192 = int_to_ptr.hbm [resolvable:$true] %s191
          %s193 = sshll.u32 %s182, 4
          %s194 = int_to_ptr.vmem [resolvable:$true] %s193
          %199 = dma.hbm_to_vmem [thread:$0]  %s192, 16384, %s194, %s179, 1024, 256, 16
        $region24: #{pretrain_split_bert_forward.14} parent=15 // pred_fallthru
          _
        // Predicated region
        $region25: #{pretrain_split_bert_forward.14} parent=15 // pred_check
          %p200 = pneg %p110
        $region26: #{pretrain_split_bert_forward.14} parent=15 // pred_check_branch
          %202 = sbr.rel (%p200) target = $region28
        $region27: #{pretrain_split_bert_forward.14} parent=15 // pred_region
          %s203 = sand.u32 %s100, 1
          %s204 = scalar_lea.sflag [#allocation6], %s203
          %s205 = sand.u32 %s100, 1
          %s206 = smul.addr %s205, 4
          %s207 = scalar_lea.vmem [#allocation5], %s206
          %s208 = smul.u32 4, %s23
          %210 = vsyncadd %s204, 0
          %s211 = scalar_lea.hbm %s2, %s208
          %s213 = sshll.u32 %s211, 4
          %s214 = int_to_ptr.hbm [resolvable:$true] %s213
          %s215 = sshll.u32 %s207, 4
          %s216 = int_to_ptr.vmem [resolvable:$true] %s215
          %218 = dma.hbm_to_vmem [thread:$0]  %s214, 64, %s216, %s204
        $region28: #{pretrain_split_bert_forward.14} parent=15 // pred_fallthru
          _
      $region16: #{pretrain_split_bert_forward.14} parent=5 // pred_fallthru
        _
      %p219 = scmp.le.s32.totalorder 1, %s15
      %p220 = scmp.lt.s32.totalorder %s15, 17
      %p221 = pnand %p219, %p220
      %p222 = pneg %p221
      // Predicated region
      $region29: #{pretrain_split_bert_forward.14} parent=5 // pred_check
        _
      $region30: #{pretrain_split_bert_forward.14} parent=5 // pred_check_branch
        %224 = sbr.rel (%p221) target = $region32
      $region31: #{pretrain_split_bert_forward.14} parent=5 // pred_region
        %s225 = ssub.s32 %s15, 1
        %s226 = sand.u32 %s77, 1
        %s227 = scalar_lea.sflag [#allocation4], %s226
        %s228 = sand.u32 %s77, 1
        %s229 = smul.addr %s228, 1024
        %s230 = scalar_lea.vmem [#allocation3], %s229
        // Predicated region
        $region33: #{pretrain_split_bert_forward.14} parent=31 // pred_check
          %p231 = pneg %p90
        $region34: #{pretrain_split_bert_forward.14} parent=31 // pred_check_branch
          %233 = sbr.rel (%p231) target = $region36
        $region35: #{pretrain_split_bert_forward.14} parent=31 // pred_region
          %235 = dma.done %s227, 16384
        $region36: #{pretrain_split_bert_forward.14} parent=31 // pred_fallthru
          _
        %s236 = sand.u32 %s103, 1
        %s237 = scalar_lea.sflag [#allocation6], %s236
        %s238 = sand.u32 %s103, 1
        %s239 = smul.addr %s238, 4
        %s240 = scalar_lea.vmem [#allocation5], %s239
        // Predicated region
        $region37: #{pretrain_split_bert_forward.14} parent=31 // pred_check
          %p241 = pneg %p116
        $region38: #{pretrain_split_bert_forward.14} parent=31 // pred_check_branch
          %243 = sbr.rel (%p241) target = $region40
        $region39: #{pretrain_split_bert_forward.14} parent=31 // pred_region
          %245 = dma.done %s237, 64
        $region40: #{pretrain_split_bert_forward.14} parent=31 // pred_fallthru
          _
        %s246 = smul.u32 4, %s27
        %p247 = scmp.lt.s32.totalorder %s25, 0
        %s248 = scalar_select %p247, %s25, 0
        %p249 = scmp.lt.s32.totalorder %s246, 15
        %s250 = scalar_select %p249, %s246, 15
        %s251 = smul.addr %s248, 16
        %s252 = sadd.s32 %s250, %s251
        %s253 = scalar_lea.vmem %s0, %s252
        %p254 = pneg %p62
        %p255 = pneg %p59
        %s256 = sand.u32 %s77, 1
        %s257 = scalar_lea.sflag [#allocation4], %s256
        %s258 = sand.u32 %s77, 1
        %s259 = smul.addr %s258, 1024
        %s260 = scalar_lea.vmem [#allocation3], %s259
        %p261 = pneg %p90
        %p262 = pneg %p87
        %s263 = sand.u32 %s103, 1
        %s264 = scalar_lea.sflag [#allocation6], %s263
        %s265 = sand.u32 %s103, 1
        %s266 = smul.addr %s265, 4
        %s267 = scalar_lea.vmem [#allocation5], %s266
        %p268 = pneg %p116
        %p269 = pneg %p113
        %p270 = pneg %p144
        %p271 = pneg %p141
        %s272 = smul.u32 4, %s26
        %p273 = scmp.lt.s32.totalorder %s25, 0
        %s274 = scalar_select %p273, %s25, 0
        %p275 = scmp.lt.s32.totalorder %s272, 15
        %s276 = scalar_select %p275, %s272, 15
        %s277 = smul.addr %s274, 16
        %s278 = sadd.s32 %s276, %s277
        %s279 = scalar_lea.vmem %s3, %s278
        %s280 = smul.u32 4, %s27
        %p281 = scmp.lt.s32.totalorder %s25, 0
        %s282 = scalar_select %p281, %s25, 0
        %p283 = scmp.lt.s32.totalorder %s280, 15
        %s284 = scalar_select %p283, %s280, 15
        %s285 = smul.addr %s282, 16
        %s286 = sadd.s32 %s284, %s285
        %s287 = scalar_lea.vmem %s0, %s286
        %s288 = smul.u32 4, %s27
        %s289 = smul.u32 64, %s27
        %s290 = smul.u32 4, %s26
        %s291 = smul.u32 4, %s26
        %s292 = smul.u32 4, %s26
        %p293 = scmp.lt.s32.totalorder %s25, 0
        %s294 = scalar_select %p293, %s25, 0
        %p295 = scmp.lt.s32.totalorder %s292, 15
        %s296 = scalar_select %p295, %s292, 15
        %s297 = smul.addr %s294, 16
        %s298 = sadd.s32 %s296, %s297
        %s299 = scalar_lea.vmem %s3, %s298
        %s300 = smul.u32 4, %s26
        %p301 = scmp.eq.s32.totalorder %s27, 0
        // Predicated region
        $region41: #{pretrain_split_bert_forward.14} parent=31 // pred_check
          %p302 = pneg %p301
        $region42: #{pretrain_split_bert_forward.14} parent=31 // pred_check_branch
          %304 = sbr.rel (%p302) target = $region44
        $region43: #{pretrain_split_bert_forward.14} parent=31 // pred_region
          %305 = vst [vmem:[#allocation2] sm:$0xff] 0.0
        $region44: #{pretrain_split_bert_forward.14} parent=31 // pred_fallthru
          _
        %v306 = vld [vmem:[#allocation2] sm:$0xff]
        %v307 = vld [vmem:[%s287] sm:$0xf]
        %v308 = vld [vmem:[%s230] sm:$0xff]
        %v309 = vld [vmem:[%s230 + $0x8] sm:$0xff]
        %v310 = vld [vmem:[%s230 + $0x10] sm:$0xff]
        %v311 = vld [vmem:[%s230 + $0x18] sm:$0xff]
        %v312 = vld [vmem:[%s230 + $0x20] sm:$0xff]
        %v313 = vld [vmem:[%s230 + $0x28] sm:$0xff]
        %v314 = vld [vmem:[%s230 + $0x30] sm:$0xff]
        %v315 = vld [vmem:[%s230 + $0x38] sm:$0xff]
        %v316 = vld [vmem:[%s230 + $0x40] sm:$0xff]
        %v317 = vld [vmem:[%s230 + $0x48] sm:$0xff]
        %v318 = vld [vmem:[%s230 + $0x50] sm:$0xff]
        %v319 = vld [vmem:[%s230 + $0x58] sm:$0xff]
        %v320 = vld [vmem:[%s230 + $0x60] sm:$0xff]
        %v321 = vld [vmem:[%s230 + $0x68] sm:$0xff]
        %v322 = vld [vmem:[%s230 + $0x70] sm:$0xff]
        %v323 = vld [vmem:[%s230 + $0x78] sm:$0xff]
        %v324 = vld [vmem:[%s230 + $0x80] sm:$0xff]
        %v325 = vld [vmem:[%s230 + $0x88] sm:$0xff]
        %v326 = vld [vmem:[%s230 + $0x90] sm:$0xff]
        %v327 = vld [vmem:[%s230 + $0x98] sm:$0xff]
        %v328 = vld [vmem:[%s230 + $0xa0] sm:$0xff]
        %v329 = vld [vmem:[%s230 + $0xa8] sm:$0xff]
        %v330 = vld [vmem:[%s230 + $0xb0] sm:$0xff]
        %v331 = vld [vmem:[%s230 + $0xb8] sm:$0xff]
        %v332 = vld [vmem:[%s230 + $0xc0] sm:$0xff]
        %v333 = vld [vmem:[%s230 + $0xc8] sm:$0xff]
        %v334 = vld [vmem:[%s230 + $0xd0] sm:$0xff]
        %v335 = vld [vmem:[%s230 + $0xd8] sm:$0xff]
        %v336 = vld [vmem:[%s230 + $0xe0] sm:$0xff]
        %v337 = vld [vmem:[%s230 + $0xe8] sm:$0xff]
        %v338 = vld [vmem:[%s230 + $0xf0] sm:$0xff]
        %v339 = vld [vmem:[%s230 + $0xf8] sm:$0xff]
        %v340 = vld [vmem:[%s230 + $0x100] sm:$0xff]
        %v341 = vld [vmem:[%s230 + $0x108] sm:$0xff]
        %v342 = vld [vmem:[%s230 + $0x110] sm:$0xff]
        %v343 = vld [vmem:[%s230 + $0x118] sm:$0xff]
        %v344 = vld [vmem:[%s230 + $0x120] sm:$0xff]
        %v345 = vld [vmem:[%s230 + $0x128] sm:$0xff]
        %v346 = vld [vmem:[%s230 + $0x130] sm:$0xff]
        %v347 = vld [vmem:[%s230 + $0x138] sm:$0xff]
        %v348 = vld [vmem:[%s230 + $0x140] sm:$0xff]
        %v349 = vld [vmem:[%s230 + $0x148] sm:$0xff]
        %v350 = vld [vmem:[%s230 + $0x150] sm:$0xff]
        %v351 = vld [vmem:[%s230 + $0x158] sm:$0xff]
        %v352 = vld [vmem:[%s230 + $0x160] sm:$0xff]
        %v353 = vld [vmem:[%s230 + $0x168] sm:$0xff]
        %v354 = vld [vmem:[%s230 + $0x170] sm:$0xff]
        %v355 = vld [vmem:[%s230 + $0x178] sm:$0xff]
        %v356 = vld [vmem:[%s230 + $0x180] sm:$0xff]
        %v357 = vld [vmem:[%s230 + $0x188] sm:$0xff]
        %v358 = vld [vmem:[%s230 + $0x190] sm:$0xff]
        %v359 = vld [vmem:[%s230 + $0x198] sm:$0xff]
        %v360 = vld [vmem:[%s230 + $0x1a0] sm:$0xff]
        %v361 = vld [vmem:[%s230 + $0x1a8] sm:$0xff]
        %v362 = vld [vmem:[%s230 + $0x1b0] sm:$0xff]
        %v363 = vld [vmem:[%s230 + $0x1b8] sm:$0xff]
        %v364 = vld [vmem:[%s230 + $0x1c0] sm:$0xff]
        %v365 = vld [vmem:[%s230 + $0x1c8] sm:$0xff]
        %v366 = vld [vmem:[%s230 + $0x1d0] sm:$0xff]
        %v367 = vld [vmem:[%s230 + $0x1d8] sm:$0xff]
        %v368 = vld [vmem:[%s230 + $0x1e0] sm:$0xff]
        %v369 = vld [vmem:[%s230 + $0x1e8] sm:$0xff]
        %v370 = vld [vmem:[%s230 + $0x1f0] sm:$0xff]
        %v371 = vld [vmem:[%s230 + $0x1f8] sm:$0xff]
        %v372 = vld [vmem:[%s230 + $0x200] sm:$0xff]
        %v373 = vld [vmem:[%s230 + $0x208] sm:$0xff]
        %v374 = vld [vmem:[%s230 + $0x210] sm:$0xff]
        %v375 = vld [vmem:[%s230 + $0x218] sm:$0xff]
        %v376 = vld [vmem:[%s230 + $0x220] sm:$0xff]
        %v377 = vld [vmem:[%s230 + $0x228] sm:$0xff]
        %v378 = vld [vmem:[%s230 + $0x230] sm:$0xff]
        %v379 = vld [vmem:[%s230 + $0x238] sm:$0xff]
        %v380 = vld [vmem:[%s230 + $0x240] sm:$0xff]
        %v381 = vld [vmem:[%s230 + $0x248] sm:$0xff]
        %v382 = vld [vmem:[%s230 + $0x250] sm:$0xff]
        %v383 = vld [vmem:[%s230 + $0x258] sm:$0xff]
        %v384 = vld [vmem:[%s230 + $0x260] sm:$0xff]
        %v385 = vld [vmem:[%s230 + $0x268] sm:$0xff]
        %v386 = vld [vmem:[%s230 + $0x270] sm:$0xff]
        %v387 = vld [vmem:[%s230 + $0x278] sm:$0xff]
        %v388 = vld [vmem:[%s230 + $0x280] sm:$0xff]
        %v389 = vld [vmem:[%s230 + $0x288] sm:$0xff]
        %v390 = vld [vmem:[%s230 + $0x290] sm:$0xff]
        %v391 = vld [vmem:[%s230 + $0x298] sm:$0xff]
        %v392 = vld [vmem:[%s230 + $0x2a0] sm:$0xff]
        %v393 = vld [vmem:[%s230 + $0x2a8] sm:$0xff]
        %v394 = vld [vmem:[%s230 + $0x2b0] sm:$0xff]
        %v395 = vld [vmem:[%s230 + $0x2b8] sm:$0xff]
        %v396 = vld [vmem:[%s230 + $0x2c0] sm:$0xff]
        %v397 = vld [vmem:[%s230 + $0x2c8] sm:$0xff]
        %v398 = vld [vmem:[%s230 + $0x2d0] sm:$0xff]
        %v399 = vld [vmem:[%s230 + $0x2d8] sm:$0xff]
        %v400 = vld [vmem:[%s230 + $0x2e0] sm:$0xff]
        %v401 = vld [vmem:[%s230 + $0x2e8] sm:$0xff]
        %v402 = vld [vmem:[%s230 + $0x2f0] sm:$0xff]
        %v403 = vld [vmem:[%s230 + $0x2f8] sm:$0xff]
        %v404 = vld [vmem:[%s230 + $0x300] sm:$0xff]
        %v405 = vld [vmem:[%s230 + $0x308] sm:$0xff]
        %v406 = vld [vmem:[%s230 + $0x310] sm:$0xff]
        %v407 = vld [vmem:[%s230 + $0x318] sm:$0xff]
        %v408 = vld [vmem:[%s230 + $0x320] sm:$0xff]
        %v409 = vld [vmem:[%s230 + $0x328] sm:$0xff]
        %v410 = vld [vmem:[%s230 + $0x330] sm:$0xff]
        %v411 = vld [vmem:[%s230 + $0x338] sm:$0xff]
        %v412 = vld [vmem:[%s230 + $0x340] sm:$0xff]
        %v413 = vld [vmem:[%s230 + $0x348] sm:$0xff]
        %v414 = vld [vmem:[%s230 + $0x350] sm:$0xff]
        %v415 = vld [vmem:[%s230 + $0x358] sm:$0xff]
        %v416 = vld [vmem:[%s230 + $0x360] sm:$0xff]
        %v417 = vld [vmem:[%s230 + $0x368] sm:$0xff]
        %v418 = vld [vmem:[%s230 + $0x370] sm:$0xff]
        %v419 = vld [vmem:[%s230 + $0x378] sm:$0xff]
        %v420 = vld [vmem:[%s230 + $0x380] sm:$0xff]
        %v421 = vld [vmem:[%s230 + $0x388] sm:$0xff]
        %v422 = vld [vmem:[%s230 + $0x390] sm:$0xff]
        %v423 = vld [vmem:[%s230 + $0x398] sm:$0xff]
        %v424 = vld [vmem:[%s230 + $0x3a0] sm:$0xff]
        %v425 = vld [vmem:[%s230 + $0x3a8] sm:$0xff]
        %v426 = vld [vmem:[%s230 + $0x3b0] sm:$0xff]
        %v427 = vld [vmem:[%s230 + $0x3b8] sm:$0xff]
        %v428 = vld [vmem:[%s230 + $0x3c0] sm:$0xff]
        %v429 = vld [vmem:[%s230 + $0x3c8] sm:$0xff]
        %v430 = vld [vmem:[%s230 + $0x3d0] sm:$0xff]
        %v431 = vld [vmem:[%s230 + $0x3d8] sm:$0xff]
        %v432 = vld [vmem:[%s230 + $0x3e0] sm:$0xff]
        %v433 = vld [vmem:[%s230 + $0x3e8] sm:$0xff]
        %v434 = vld [vmem:[%s230 + $0x3f0] sm:$0xff]
        %v435 = vld [vmem:[%s230 + $0x3f8] sm:$0xff]
        %437 = vst [vmem:[#allocation1] ss:$9 sm:$0xff] %v307
        %v438 = vld [vmem:[#allocation1] sm:$0xff]
        %v439 = vld [vmem:[#allocation1 + $0x9] sm:$0xff]
        %v440 = vld [vmem:[#allocation1 + $0x12] sm:$0xff]
        %v441 = vld [vmem:[#allocation1 + $0x1b] sm:$0xff]
        %v574 = vunpack.c.l.b16 %v308
        %v575 = vunpack.c.h.b16 %v308
        %v576 = vunpack.c.l.b16 %v309
        %v577 = vunpack.c.h.b16 %v309
        %v578 = vunpack.c.l.b16 %v310
        %v579 = vunpack.c.h.b16 %v310
        %v580 = vunpack.c.l.b16 %v311
        %v581 = vunpack.c.h.b16 %v311
        %v582 = vunpack.c.l.b16 %v312
        %v583 = vunpack.c.h.b16 %v312
        %v584 = vunpack.c.l.b16 %v313
        %v585 = vunpack.c.h.b16 %v313
        %v586 = vunpack.c.l.b16 %v314
        %v587 = vunpack.c.h.b16 %v314
        %v588 = vunpack.c.l.b16 %v315
        %v589 = vunpack.c.h.b16 %v315
        %v590 = vunpack.c.l.b16 %v316
        %v591 = vunpack.c.h.b16 %v316
        %v592 = vunpack.c.l.b16 %v317
        %v593 = vunpack.c.h.b16 %v317
        %v594 = vunpack.c.l.b16 %v318
        %v595 = vunpack.c.h.b16 %v318
        %v596 = vunpack.c.l.b16 %v319
        %v597 = vunpack.c.h.b16 %v319
        %v598 = vunpack.c.l.b16 %v320
        %v599 = vunpack.c.h.b16 %v320
        %v600 = vunpack.c.l.b16 %v321
        %v601 = vunpack.c.h.b16 %v321
        %v602 = vunpack.c.l.b16 %v322
        %v603 = vunpack.c.h.b16 %v322
        %v604 = vunpack.c.l.b16 %v323
        %v605 = vunpack.c.h.b16 %v323
        %v606 = vunpack.c.l.b16 %v324
        %v607 = vunpack.c.h.b16 %v324
        %v608 = vunpack.c.l.b16 %v325
        %v609 = vunpack.c.h.b16 %v325
        %v610 = vunpack.c.l.b16 %v326
        %v611 = vunpack.c.h.b16 %v326
        %v612 = vunpack.c.l.b16 %v327
        %v613 = vunpack.c.h.b16 %v327
        %v614 = vunpack.c.l.b16 %v328
        %v615 = vunpack.c.h.b16 %v328
        %v616 = vunpack.c.l.b16 %v329
        %v617 = vunpack.c.h.b16 %v329
        %v618 = vunpack.c.l.b16 %v330
        %v619 = vunpack.c.h.b16 %v330
        %v620 = vunpack.c.l.b16 %v331
        %v621 = vunpack.c.h.b16 %v331
        %v622 = vunpack.c.l.b16 %v332
        %v623 = vunpack.c.h.b16 %v332
        %v624 = vunpack.c.l.b16 %v333
        %v625 = vunpack.c.h.b16 %v333
        %v626 = vunpack.c.l.b16 %v334
        %v627 = vunpack.c.h.b16 %v334
        %v628 = vunpack.c.l.b16 %v335
        %v629 = vunpack.c.h.b16 %v335
        %v630 = vunpack.c.l.b16 %v336
        %v631 = vunpack.c.h.b16 %v336
        %v632 = vunpack.c.l.b16 %v337
        %v633 = vunpack.c.h.b16 %v337
        %v634 = vunpack.c.l.b16 %v338
        %v635 = vunpack.c.h.b16 %v338
        %v636 = vunpack.c.l.b16 %v339
        %v637 = vunpack.c.h.b16 %v339
        %v638 = vunpack.c.l.b16 %v340
        %v639 = vunpack.c.h.b16 %v340
        %v640 = vunpack.c.l.b16 %v341
        %v641 = vunpack.c.h.b16 %v341
        %v642 = vunpack.c.l.b16 %v342
        %v643 = vunpack.c.h.b16 %v342
        %v644 = vunpack.c.l.b16 %v343
        %v645 = vunpack.c.h.b16 %v343
        %v646 = vunpack.c.l.b16 %v344
        %v647 = vunpack.c.h.b16 %v344
        %v648 = vunpack.c.l.b16 %v345
        %v649 = vunpack.c.h.b16 %v345
        %v650 = vunpack.c.l.b16 %v346
        %v651 = vunpack.c.h.b16 %v346
        %v652 = vunpack.c.l.b16 %v347
        %v653 = vunpack.c.h.b16 %v347
        %v654 = vunpack.c.l.b16 %v348
        %v655 = vunpack.c.h.b16 %v348
        %v656 = vunpack.c.l.b16 %v349
        %v657 = vunpack.c.h.b16 %v349
        %v658 = vunpack.c.l.b16 %v350
        %v659 = vunpack.c.h.b16 %v350
        %v660 = vunpack.c.l.b16 %v351
        %v661 = vunpack.c.h.b16 %v351
        %v662 = vunpack.c.l.b16 %v352
        %v663 = vunpack.c.h.b16 %v352
        %v664 = vunpack.c.l.b16 %v353
        %v665 = vunpack.c.h.b16 %v353
        %v666 = vunpack.c.l.b16 %v354
        %v667 = vunpack.c.h.b16 %v354
        %v668 = vunpack.c.l.b16 %v355
        %v669 = vunpack.c.h.b16 %v355
        %v670 = vunpack.c.l.b16 %v356
        %v671 = vunpack.c.h.b16 %v356
        %v672 = vunpack.c.l.b16 %v357
        %v673 = vunpack.c.h.b16 %v357
        %v674 = vunpack.c.l.b16 %v358
        %v675 = vunpack.c.h.b16 %v358
        %v676 = vunpack.c.l.b16 %v359
        %v677 = vunpack.c.h.b16 %v359
        %v678 = vunpack.c.l.b16 %v360
        %v679 = vunpack.c.h.b16 %v360
        %v680 = vunpack.c.l.b16 %v361
        %v681 = vunpack.c.h.b16 %v361
        %v682 = vunpack.c.l.b16 %v362
        %v683 = vunpack.c.h.b16 %v362
        %v684 = vunpack.c.l.b16 %v363
        %v685 = vunpack.c.h.b16 %v363
        %v686 = vunpack.c.l.b16 %v364
        %v687 = vunpack.c.h.b16 %v364
        %v688 = vunpack.c.l.b16 %v365
        %v689 = vunpack.c.h.b16 %v365
        %v690 = vunpack.c.l.b16 %v366
        %v691 = vunpack.c.h.b16 %v366
        %v692 = vunpack.c.l.b16 %v367
        %v693 = vunpack.c.h.b16 %v367
        %v694 = vunpack.c.l.b16 %v368
        %v695 = vunpack.c.h.b16 %v368
        %v696 = vunpack.c.l.b16 %v369
        %v697 = vunpack.c.h.b16 %v369
        %v698 = vunpack.c.l.b16 %v370
        %v699 = vunpack.c.h.b16 %v370
        %v700 = vunpack.c.l.b16 %v371
        %v701 = vunpack.c.h.b16 %v371
        %v702 = vunpack.c.l.b16 %v372
        %v703 = vunpack.c.h.b16 %v372
        %v704 = vunpack.c.l.b16 %v373
        %v705 = vunpack.c.h.b16 %v373
        %v706 = vunpack.c.l.b16 %v374
        %v707 = vunpack.c.h.b16 %v374
        %v708 = vunpack.c.l.b16 %v375
        %v709 = vunpack.c.h.b16 %v375
        %v710 = vunpack.c.l.b16 %v376
        %v711 = vunpack.c.h.b16 %v376
        %v712 = vunpack.c.l.b16 %v377
        %v713 = vunpack.c.h.b16 %v377
        %v714 = vunpack.c.l.b16 %v378
        %v715 = vunpack.c.h.b16 %v378
        %v716 = vunpack.c.l.b16 %v379
        %v717 = vunpack.c.h.b16 %v379
        %v718 = vunpack.c.l.b16 %v380
        %v719 = vunpack.c.h.b16 %v380
        %v720 = vunpack.c.l.b16 %v381
        %v721 = vunpack.c.h.b16 %v381
        %v722 = vunpack.c.l.b16 %v382
        %v723 = vunpack.c.h.b16 %v382
        %v724 = vunpack.c.l.b16 %v383
        %v725 = vunpack.c.h.b16 %v383
        %v726 = vunpack.c.l.b16 %v384
        %v727 = vunpack.c.h.b16 %v384
        %v728 = vunpack.c.l.b16 %v385
        %v729 = vunpack.c.h.b16 %v385
        %v730 = vunpack.c.l.b16 %v386
        %v731 = vunpack.c.h.b16 %v386
        %v732 = vunpack.c.l.b16 %v387
        %v733 = vunpack.c.h.b16 %v387
        %v734 = vunpack.c.l.b16 %v388
        %v735 = vunpack.c.h.b16 %v388
        %v736 = vunpack.c.l.b16 %v389
        %v737 = vunpack.c.h.b16 %v389
        %v738 = vunpack.c.l.b16 %v390
        %v739 = vunpack.c.h.b16 %v390
        %v740 = vunpack.c.l.b16 %v391
        %v741 = vunpack.c.h.b16 %v391
        %v742 = vunpack.c.l.b16 %v392
        %v743 = vunpack.c.h.b16 %v392
        %v744 = vunpack.c.l.b16 %v393
        %v745 = vunpack.c.h.b16 %v393
        %v746 = vunpack.c.l.b16 %v394
        %v747 = vunpack.c.h.b16 %v394
        %v748 = vunpack.c.l.b16 %v395
        %v749 = vunpack.c.h.b16 %v395
        %v750 = vunpack.c.l.b16 %v396
        %v751 = vunpack.c.h.b16 %v396
        %v752 = vunpack.c.l.b16 %v397
        %v753 = vunpack.c.h.b16 %v397
        %v754 = vunpack.c.l.b16 %v398
        %v755 = vunpack.c.h.b16 %v398
        %v756 = vunpack.c.l.b16 %v399
        %v757 = vunpack.c.h.b16 %v399
        %v758 = vunpack.c.l.b16 %v400
        %v759 = vunpack.c.h.b16 %v400
        %v760 = vunpack.c.l.b16 %v401
        %v761 = vunpack.c.h.b16 %v401
        %v762 = vunpack.c.l.b16 %v402
        %v763 = vunpack.c.h.b16 %v402
        %v764 = vunpack.c.l.b16 %v403
        %v765 = vunpack.c.h.b16 %v403
        %v766 = vunpack.c.l.b16 %v404
        %v767 = vunpack.c.h.b16 %v404
        %v768 = vunpack.c.l.b16 %v405
        %v769 = vunpack.c.h.b16 %v405
        %v770 = vunpack.c.l.b16 %v406
        %v771 = vunpack.c.h.b16 %v406
        %v772 = vunpack.c.l.b16 %v407
        %v773 = vunpack.c.h.b16 %v407
        %v774 = vunpack.c.l.b16 %v408
        %v775 = vunpack.c.h.b16 %v408
        %v776 = vunpack.c.l.b16 %v409
        %v777 = vunpack.c.h.b16 %v409
        %v778 = vunpack.c.l.b16 %v410
        %v779 = vunpack.c.h.b16 %v410
        %v780 = vunpack.c.l.b16 %v411
        %v781 = vunpack.c.h.b16 %v411
        %v782 = vunpack.c.l.b16 %v412
        %v783 = vunpack.c.h.b16 %v412
        %v784 = vunpack.c.l.b16 %v413
        %v785 = vunpack.c.h.b16 %v413
        %v786 = vunpack.c.l.b16 %v414
        %v787 = vunpack.c.h.b16 %v414
        %v788 = vunpack.c.l.b16 %v415
        %v789 = vunpack.c.h.b16 %v415
        %v790 = vunpack.c.l.b16 %v416
        %v791 = vunpack.c.h.b16 %v416
        %v792 = vunpack.c.l.b16 %v417
        %v793 = vunpack.c.h.b16 %v417
        %v794 = vunpack.c.l.b16 %v418
        %v795 = vunpack.c.h.b16 %v418
        %v796 = vunpack.c.l.b16 %v419
        %v797 = vunpack.c.h.b16 %v419
        %v798 = vunpack.c.l.b16 %v420
        %v799 = vunpack.c.h.b16 %v420
        %v800 = vunpack.c.l.b16 %v421
        %v801 = vunpack.c.h.b16 %v421
        %v802 = vunpack.c.l.b16 %v422
        %v803 = vunpack.c.h.b16 %v422
        %v804 = vunpack.c.l.b16 %v423
        %v805 = vunpack.c.h.b16 %v423
        %v806 = vunpack.c.l.b16 %v424
        %v807 = vunpack.c.h.b16 %v424
        %v808 = vunpack.c.l.b16 %v425
        %v809 = vunpack.c.h.b16 %v425
        %v810 = vunpack.c.l.b16 %v426
        %v811 = vunpack.c.h.b16 %v426
        %v812 = vunpack.c.l.b16 %v427
        %v813 = vunpack.c.h.b16 %v427
        %v814 = vunpack.c.l.b16 %v428
        %v815 = vunpack.c.h.b16 %v428
        %v816 = vunpack.c.l.b16 %v429
        %v817 = vunpack.c.h.b16 %v429
        %v818 = vunpack.c.l.b16 %v430
        %v819 = vunpack.c.h.b16 %v430
        %v820 = vunpack.c.l.b16 %v431
        %v821 = vunpack.c.h.b16 %v431
        %v822 = vunpack.c.l.b16 %v432
        %v823 = vunpack.c.h.b16 %v432
        %v824 = vunpack.c.l.b16 %v433
        %v825 = vunpack.c.h.b16 %v433
        %v826 = vunpack.c.l.b16 %v434
        %v827 = vunpack.c.h.b16 %v434
        %v828 = vunpack.c.l.b16 %v435
        %v829 = vunpack.c.h.b16 %v435
        %v830 = vpack.c.b16 %v578, %v574
        %v831 = vpack.c.b16 %v579, %v575
        %v832 = vpack.c.b16 %v580, %v576
        %v833 = vpack.c.b16 %v581, %v577
        %v834 = vpack.c.b16 %v586, %v582
        %v835 = vpack.c.b16 %v587, %v583
        %v836 = vpack.c.b16 %v588, %v584
        %v837 = vpack.c.b16 %v589, %v585
        %v838 = vpack.c.b16 %v594, %v590
        %v839 = vpack.c.b16 %v595, %v591
        %v840 = vpack.c.b16 %v596, %v592
        %v841 = vpack.c.b16 %v597, %v593
        %v842 = vpack.c.b16 %v602, %v598
        %v843 = vpack.c.b16 %v603, %v599
        %v844 = vpack.c.b16 %v604, %v600
        %v845 = vpack.c.b16 %v605, %v601
        %v846 = vpack.c.b16 %v610, %v606
        %v847 = vpack.c.b16 %v611, %v607
        %v848 = vpack.c.b16 %v612, %v608
        %v849 = vpack.c.b16 %v613, %v609
        %v850 = vpack.c.b16 %v618, %v614
        %v851 = vpack.c.b16 %v619, %v615
        %v852 = vpack.c.b16 %v620, %v616
        %v853 = vpack.c.b16 %v621, %v617
        %v854 = vpack.c.b16 %v626, %v622
        %v855 = vpack.c.b16 %v627, %v623
        %v856 = vpack.c.b16 %v628, %v624
        %v857 = vpack.c.b16 %v629, %v625
        %v858 = vpack.c.b16 %v634, %v630
        %v859 = vpack.c.b16 %v635, %v631
        %v860 = vpack.c.b16 %v636, %v632
        %v861 = vpack.c.b16 %v637, %v633
        %v862 = vpack.c.b16 %v642, %v638
        %v863 = vpack.c.b16 %v643, %v639
        %v864 = vpack.c.b16 %v644, %v640
        %v865 = vpack.c.b16 %v645, %v641
        %v866 = vpack.c.b16 %v650, %v646
        %v867 = vpack.c.b16 %v651, %v647
        %v868 = vpack.c.b16 %v652, %v648
        %v869 = vpack.c.b16 %v653, %v649
        %v870 = vpack.c.b16 %v658, %v654
        %v871 = vpack.c.b16 %v659, %v655
        %v872 = vpack.c.b16 %v660, %v656
        %v873 = vpack.c.b16 %v661, %v657
        %v874 = vpack.c.b16 %v666, %v662
        %v875 = vpack.c.b16 %v667, %v663
        %v876 = vpack.c.b16 %v668, %v664
        %v877 = vpack.c.b16 %v669, %v665
        %v878 = vpack.c.b16 %v674, %v670
        %v879 = vpack.c.b16 %v675, %v671
        %v880 = vpack.c.b16 %v676, %v672
        %v881 = vpack.c.b16 %v677, %v673
        %v882 = vpack.c.b16 %v682, %v678
        %v883 = vpack.c.b16 %v683, %v679
        %v884 = vpack.c.b16 %v684, %v680
        %v885 = vpack.c.b16 %v685, %v681
        %v886 = vpack.c.b16 %v690, %v686
        %v887 = vpack.c.b16 %v691, %v687
        %v888 = vpack.c.b16 %v692, %v688
        %v889 = vpack.c.b16 %v693, %v689
        %v890 = vpack.c.b16 %v698, %v694
        %v891 = vpack.c.b16 %v699, %v695
        %v892 = vpack.c.b16 %v700, %v696
        %v893 = vpack.c.b16 %v701, %v697
        %v894 = vpack.c.b16 %v706, %v702
        %v895 = vpack.c.b16 %v707, %v703
        %v896 = vpack.c.b16 %v708, %v704
        %v897 = vpack.c.b16 %v709, %v705
        %v898 = vpack.c.b16 %v714, %v710
        %v899 = vpack.c.b16 %v715, %v711
        %v900 = vpack.c.b16 %v716, %v712
        %v901 = vpack.c.b16 %v717, %v713
        %v902 = vpack.c.b16 %v722, %v718
        %v903 = vpack.c.b16 %v723, %v719
        %v904 = vpack.c.b16 %v724, %v720
        %v905 = vpack.c.b16 %v725, %v721
        %v906 = vpack.c.b16 %v730, %v726
        %v907 = vpack.c.b16 %v731, %v727
        %v908 = vpack.c.b16 %v732, %v728
        %v909 = vpack.c.b16 %v733, %v729
        %v910 = vpack.c.b16 %v738, %v734
        %v911 = vpack.c.b16 %v739, %v735
        %v912 = vpack.c.b16 %v740, %v736
        %v913 = vpack.c.b16 %v741, %v737
        %v914 = vpack.c.b16 %v746, %v742
        %v915 = vpack.c.b16 %v747, %v743
        %v916 = vpack.c.b16 %v748, %v744
        %v917 = vpack.c.b16 %v749, %v745
        %v918 = vpack.c.b16 %v754, %v750
        %v919 = vpack.c.b16 %v755, %v751
        %v920 = vpack.c.b16 %v756, %v752
        %v921 = vpack.c.b16 %v757, %v753
        %v922 = vpack.c.b16 %v762, %v758
        %v923 = vpack.c.b16 %v763, %v759
        %v924 = vpack.c.b16 %v764, %v760
        %v925 = vpack.c.b16 %v765, %v761
        %v926 = vpack.c.b16 %v770, %v766
        %v927 = vpack.c.b16 %v771, %v767
        %v928 = vpack.c.b16 %v772, %v768
        %v929 = vpack.c.b16 %v773, %v769
        %v930 = vpack.c.b16 %v778, %v774
        %v931 = vpack.c.b16 %v779, %v775
        %v932 = vpack.c.b16 %v780, %v776
        %v933 = vpack.c.b16 %v781, %v777
        %v934 = vpack.c.b16 %v786, %v782
        %v935 = vpack.c.b16 %v787, %v783
        %v936 = vpack.c.b16 %v788, %v784
        %v937 = vpack.c.b16 %v789, %v785
        %v938 = vpack.c.b16 %v794, %v790
        %v939 = vpack.c.b16 %v795, %v791
        %v940 = vpack.c.b16 %v796, %v792
        %v941 = vpack.c.b16 %v797, %v793
        %v942 = vpack.c.b16 %v802, %v798
        %v943 = vpack.c.b16 %v803, %v799
        %v944 = vpack.c.b16 %v804, %v800
        %v945 = vpack.c.b16 %v805, %v801
        %v946 = vpack.c.b16 %v810, %v806
        %v947 = vpack.c.b16 %v811, %v807
        %v948 = vpack.c.b16 %v812, %v808
        %v949 = vpack.c.b16 %v813, %v809
        %v950 = vpack.c.b16 %v818, %v814
        %v951 = vpack.c.b16 %v819, %v815
        %v952 = vpack.c.b16 %v820, %v816
        %v953 = vpack.c.b16 %v821, %v817
        %v954 = vpack.c.b16 %v826, %v822
        %v955 = vpack.c.b16 %v827, %v823
        %v956 = vpack.c.b16 %v828, %v824
        %v957 = vpack.c.b16 %v829, %v825
        %1086 = vmatpush.bf16.msra.mxu0 %v858
        %1087 = vmatpush.bf16.msra.mxu0 %v854
        %1088 = vmatpush.bf16.msra.mxu0 %v850
        %1089 = vmatpush.bf16.msra.mxu0 %v846
        %1090 = vmatpush.bf16.msra.mxu0 %v842
        %1091 = vmatpush.bf16.msra.mxu0 %v838
        %1092 = vmatpush.bf16.msra.mxu0 %v834
        %1093 = vmatpush.bf16.msra.mxu0 %v830
        %1094 = vmatmul.bf16.gmra.mxu0 %v438
        %v1095 = vpop.f32.mrf.mxu0
        %v1096 = vadd.f32 0.0, %v1095
        %v1097 = vpop.f32.mrf.mxu0
        %1098 = vdwg.mxu0
        %1099 = vmatpush.bf16.msra.mxu0 %v890
        %1100 = vmatpush.bf16.msra.mxu0 %v886
        %1101 = vmatpush.bf16.msra.mxu0 %v882
        %1102 = vmatpush.bf16.msra.mxu0 %v878
        %1103 = vmatpush.bf16.msra.mxu0 %v874
        %1104 = vmatpush.bf16.msra.mxu0 %v870
        %1105 = vmatpush.bf16.msra.mxu0 %v866
        %1106 = vmatpush.bf16.msra.mxu0 %v862
        %1107 = vmatmul.bf16.gmra.mxu0 %v439
        %v1108 = vpop.f32.mrf.mxu0
        %v1109 = vadd.f32 %v1096, %v1108
        %v1110 = vpop.f32.mrf.mxu0
        %1111 = vdwg.mxu0
        %1112 = vmatpush.bf16.msra.mxu0 %v922
        %1113 = vmatpush.bf16.msra.mxu0 %v918
        %1114 = vmatpush.bf16.msra.mxu0 %v914
        %1115 = vmatpush.bf16.msra.mxu0 %v910
        %1116 = vmatpush.bf16.msra.mxu0 %v906
        %1117 = vmatpush.bf16.msra.mxu0 %v902
        %1118 = vmatpush.bf16.msra.mxu0 %v898
        %1119 = vmatpush.bf16.msra.mxu0 %v894
        %1120 = vmatmul.bf16.gmra.mxu0 %v440
        %v1121 = vpop.f32.mrf.mxu0
        %v1122 = vadd.f32 %v1109, %v1121
        %v1123 = vpop.f32.mrf.mxu0
        %1124 = vdwg.mxu0
        %1125 = vmatpush.bf16.msra.mxu0 %v954
        %1126 = vmatpush.bf16.msra.mxu0 %v950
        %1127 = vmatpush.bf16.msra.mxu0 %v946
        %1128 = vmatpush.bf16.msra.mxu0 %v942
        %1129 = vmatpush.bf16.msra.mxu0 %v938
        %1130 = vmatpush.bf16.msra.mxu0 %v934
        %1131 = vmatpush.bf16.msra.mxu0 %v930
        %1132 = vmatpush.bf16.msra.mxu0 %v926
        %1133 = vmatmul.bf16.gmra.mxu0 %v441
        %v1134 = vpop.f32.mrf.mxu0
        %v1135 = vadd.f32 %v1122, %v1134
        %v1136 = vpop.f32.mrf.mxu0
        %1137 = vdwg.mxu0
        %1138 = vmatpush.bf16.msra.mxu0 %v859
        %1139 = vmatpush.bf16.msra.mxu0 %v855
        %1140 = vmatpush.bf16.msra.mxu0 %v851
        %1141 = vmatpush.bf16.msra.mxu0 %v847
        %1142 = vmatpush.bf16.msra.mxu0 %v843
        %1143 = vmatpush.bf16.msra.mxu0 %v839
        %1144 = vmatpush.bf16.msra.mxu0 %v835
        %1145 = vmatpush.bf16.msra.mxu0 %v831
        %1146 = vmatmul.bf16.gmra.mxu0 %v438
        %v1147 = vpop.f32.mrf.mxu0
        %v1148 = vadd.f32 0.0, %v1147
        %v1149 = vpop.f32.mrf.mxu0
        %1150 = vdwg.mxu0
        %1151 = vmatpush.bf16.msra.mxu0 %v891
        %1152 = vmatpush.bf16.msra.mxu0 %v887
        %1153 = vmatpush.bf16.msra.mxu0 %v883
        %1154 = vmatpush.bf16.msra.mxu0 %v879
        %1155 = vmatpush.bf16.msra.mxu0 %v875
        %1156 = vmatpush.bf16.msra.mxu0 %v871
        %1157 = vmatpush.bf16.msra.mxu0 %v867
        %1158 = vmatpush.bf16.msra.mxu0 %v863
        %1159 = vmatmul.bf16.gmra.mxu0 %v439
        %v1160 = vpop.f32.mrf.mxu0
        %v1161 = vadd.f32 %v1148, %v1160
        %v1162 = vpop.f32.mrf.mxu0
        %1163 = vdwg.mxu0
        %1164 = vmatpush.bf16.msra.mxu0 %v923
        %1165 = vmatpush.bf16.msra.mxu0 %v919
        %1166 = vmatpush.bf16.msra.mxu0 %v915
        %1167 = vmatpush.bf16.msra.mxu0 %v911
        %1168 = vmatpush.bf16.msra.mxu0 %v907
        %1169 = vmatpush.bf16.msra.mxu0 %v903
        %1170 = vmatpush.bf16.msra.mxu0 %v899
        %1171 = vmatpush.bf16.msra.mxu0 %v895
        %1172 = vmatmul.bf16.gmra.mxu0 %v440
        %v1173 = vpop.f32.mrf.mxu0
        %v1174 = vadd.f32 %v1161, %v1173
        %v1175 = vpop.f32.mrf.mxu0
        %1176 = vdwg.mxu0
        %1177 = vmatpush.bf16.msra.mxu0 %v955
        %1178 = vmatpush.bf16.msra.mxu0 %v951
        %1179 = vmatpush.bf16.msra.mxu0 %v947
        %1180 = vmatpush.bf16.msra.mxu0 %v943
        %1181 = vmatpush.bf16.msra.mxu0 %v939
        %1182 = vmatpush.bf16.msra.mxu0 %v935
        %1183 = vmatpush.bf16.msra.mxu0 %v931
        %1184 = vmatpush.bf16.msra.mxu0 %v927
        %1185 = vmatmul.bf16.gmra.mxu0 %v441
        %v1186 = vpop.f32.mrf.mxu0
        %v1187 = vadd.f32 %v1174, %v1186
        %v1188 = vpop.f32.mrf.mxu0
        %1189 = vdwg.mxu0
        %1190 = vmatpush.bf16.msra.mxu0 %v860
        %1191 = vmatpush.bf16.msra.mxu0 %v856
        %1192 = vmatpush.bf16.msra.mxu0 %v852
        %1193 = vmatpush.bf16.msra.mxu0 %v848
        %1194 = vmatpush.bf16.msra.mxu0 %v844
        %1195 = vmatpush.bf16.msra.mxu0 %v840
        %1196 = vmatpush.bf16.msra.mxu0 %v836
        %1197 = vmatpush.bf16.msra.mxu0 %v832
        %1198 = vmatmul.bf16.gmra.mxu0 %v438
        %v1199 = vpop.f32.mrf.mxu0
        %v1200 = vadd.f32 0.0, %v1199
        %v1201 = vpop.f32.mrf.mxu0
        %1202 = vdwg.mxu0
        %1203 = vmatpush.bf16.msra.mxu0 %v892
        %1204 = vmatpush.bf16.msra.mxu0 %v888
        %1205 = vmatpush.bf16.msra.mxu0 %v884
        %1206 = vmatpush.bf16.msra.mxu0 %v880
        %1207 = vmatpush.bf16.msra.mxu0 %v876
        %1208 = vmatpush.bf16.msra.mxu0 %v872
        %1209 = vmatpush.bf16.msra.mxu0 %v868
        %1210 = vmatpush.bf16.msra.mxu0 %v864
        %1211 = vmatmul.bf16.gmra.mxu0 %v439
        %v1212 = vpop.f32.mrf.mxu0
        %v1213 = vadd.f32 %v1200, %v1212
        %v1214 = vpop.f32.mrf.mxu0
        %1215 = vdwg.mxu0
        %1216 = vmatpush.bf16.msra.mxu0 %v924
        %1217 = vmatpush.bf16.msra.mxu0 %v920
        %1218 = vmatpush.bf16.msra.mxu0 %v916
        %1219 = vmatpush.bf16.msra.mxu0 %v912
        %1220 = vmatpush.bf16.msra.mxu0 %v908
        %1221 = vmatpush.bf16.msra.mxu0 %v904
        %1222 = vmatpush.bf16.msra.mxu0 %v900
        %1223 = vmatpush.bf16.msra.mxu0 %v896
        %1224 = vmatmul.bf16.gmra.mxu0 %v440
        %v1225 = vpop.f32.mrf.mxu0
        %v1226 = vadd.f32 %v1213, %v1225
        %v1227 = vpop.f32.mrf.mxu0
        %1228 = vdwg.mxu0
        %1229 = vmatpush.bf16.msra.mxu0 %v956
        %1230 = vmatpush.bf16.msra.mxu0 %v952
        %1231 = vmatpush.bf16.msra.mxu0 %v948
        %1232 = vmatpush.bf16.msra.mxu0 %v944
        %1233 = vmatpush.bf16.msra.mxu0 %v940
        %1234 = vmatpush.bf16.msra.mxu0 %v936
        %1235 = vmatpush.bf16.msra.mxu0 %v932
        %1236 = vmatpush.bf16.msra.mxu0 %v928
        %1237 = vmatmul.bf16.gmra.mxu0 %v441
        %v1238 = vpop.f32.mrf.mxu0
        %v1239 = vadd.f32 %v1226, %v1238
        %v1240 = vpop.f32.mrf.mxu0
        %1241 = vdwg.mxu0
        %1242 = vmatpush.bf16.msra.mxu0 %v861
        %1243 = vmatpush.bf16.msra.mxu0 %v857
        %1244 = vmatpush.bf16.msra.mxu0 %v853
        %1245 = vmatpush.bf16.msra.mxu0 %v849
        %1246 = vmatpush.bf16.msra.mxu0 %v845
        %1247 = vmatpush.bf16.msra.mxu0 %v841
        %1248 = vmatpush.bf16.msra.mxu0 %v837
        %1249 = vmatpush.bf16.msra.mxu0 %v833
        %1250 = vmatmul.bf16.gmra.mxu0 %v438
        %v1251 = vpop.f32.mrf.mxu0
        %v1252 = vadd.f32 0.0, %v1251
        %v1253 = vpop.f32.mrf.mxu0
        %1254 = vdwg.mxu0
        %1255 = vmatpush.bf16.msra.mxu0 %v893
        %1256 = vmatpush.bf16.msra.mxu0 %v889
        %1257 = vmatpush.bf16.msra.mxu0 %v885
        %1258 = vmatpush.bf16.msra.mxu0 %v881
        %1259 = vmatpush.bf16.msra.mxu0 %v877
        %1260 = vmatpush.bf16.msra.mxu0 %v873
        %1261 = vmatpush.bf16.msra.mxu0 %v869
        %1262 = vmatpush.bf16.msra.mxu0 %v865
        %1263 = vmatmul.bf16.gmra.mxu0 %v439
        %v1264 = vpop.f32.mrf.mxu0
        %v1265 = vadd.f32 %v1252, %v1264
        %v1266 = vpop.f32.mrf.mxu0
        %1267 = vdwg.mxu0
        %1268 = vmatpush.bf16.msra.mxu0 %v925
        %1269 = vmatpush.bf16.msra.mxu0 %v921
        %1270 = vmatpush.bf16.msra.mxu0 %v917
        %1271 = vmatpush.bf16.msra.mxu0 %v913
        %1272 = vmatpush.bf16.msra.mxu0 %v909
        %1273 = vmatpush.bf16.msra.mxu0 %v905
        %1274 = vmatpush.bf16.msra.mxu0 %v901
        %1275 = vmatpush.bf16.msra.mxu0 %v897
        %1276 = vmatmul.bf16.gmra.mxu0 %v440
        %v1277 = vpop.f32.mrf.mxu0
        %v1278 = vadd.f32 %v1265, %v1277
        %v1279 = vpop.f32.mrf.mxu0
        %1280 = vdwg.mxu0
        %1281 = vmatpush.bf16.msra.mxu0 %v957
        %1282 = vmatpush.bf16.msra.mxu0 %v953
        %1283 = vmatpush.bf16.msra.mxu0 %v949
        %1284 = vmatpush.bf16.msra.mxu0 %v945
        %1285 = vmatpush.bf16.msra.mxu0 %v941
        %1286 = vmatpush.bf16.msra.mxu0 %v937
        %1287 = vmatpush.bf16.msra.mxu0 %v933
        %1288 = vmatpush.bf16.msra.mxu0 %v929
        %1289 = vmatmul.bf16.gmra.mxu0 %v441
        %v1290 = vpop.f32.mrf.mxu0
        %v1291 = vadd.f32 %v1278, %v1290
        %v1292 = vpop.f32.mrf.mxu0
        %1293 = vdwg.mxu0
        %v1298 = vrot.slane %v1187, 6
        %v1299 = vrot.slane %v1239, 4
        %v1300 = vrot.slane %v1291, 2
        %vm1301 = vcmask 1041408
        %v1302 = vsel %vm1301, %v1135, %v1298
        %vm1303 = vcmask 1045508
        %v1304 = vsel %vm1303, %v1299, %v1300
        %vm1305 = vcmask 1043456
        %v1306 = vsel %vm1305, %v1302, %v1304
        %v1308 = vadd.f32 %v306, %v1306
        %1309 = vst [vmem:[#allocation2] sm:$0xff] %v1308
        %p1310 = scmp.eq.s32.totalorder %s27, 3
        // Predicated region
        $region45: #{pretrain_split_bert_forward.14} parent=31 // pred_check
          %p1311 = pneg %p1310
        $region46: #{pretrain_split_bert_forward.14} parent=31 // pred_check_branch
          %1313 = sbr.rel (%p1311) target = $region48
        $region47: #{pretrain_split_bert_forward.14} parent=31 // pred_region
          %v1314 = vld [vmem:[#allocation2] sm:$0xff]
          %v1315 = vld [vmem:[%s240] sm:$0xf]
          %v1317 = vperm.slane %v1315, 0
          %v1318 = vperm.slane %v1315, 1
          %v1319 = vperm.slane %v1315, 2
          %v1320 = vperm.slane %v1315, 3
          %v1321 = vrot.slane %v1318, 6
          %v1322 = vrot.slane %v1319, 4
          %v1323 = vrot.slane %v1320, 2
          %v1324 = vsel %vm1301, %v1317, %v1321
          %v1325 = vsel %vm1303, %v1322, %v1323
          %v1326 = vsel %vm1305, %v1324, %v1325
          %v1328 = vadd.f32 %v1314, %v1326
          %1330 = vst [vmem:[#allocation1] ss:$4 sm:$0xff] %v1328
          %v1331 = vld.sshfl [vmem:[#allocation1] sm:$0xff pattern:$0x73625140]
          %v1332 = vld.sshfl [vmem:[#allocation1 + $0x8] sm:$0xff pattern:$0x73625140]
          %v1333 = vld.sshfl [vmem:[#allocation1 + $0x10] sm:$0xff pattern:$0x73625140]
          %v1334 = vld.sshfl [vmem:[#allocation1 + $0x18] sm:$0xff pattern:$0x73625140]
          %v1339 = vpack.c.bf16 %v1332, %v1331
          %v1340 = vpack.c.bf16 %v1334, %v1333
          %v1343 = vrot.slane %v1339, 3
          %v1344 = vrot.slane %v1340, 6
          %v1345 = vrot.slane %v1340, 1
          %vm1346 = vcmask 1040384
          %v1349 = vsel %vm1346, %v1339, %v1343
          %vm1350 = vcmask 1042434
          %v1353 = vsel %vm1350, %v1344, %v1345
          %v1354 = vsel %vm1301, %v1349, %v1353
          %1356 = vst [vmem:[%s299] sm:$0xf] %v1354
        $region48: #{pretrain_split_bert_forward.14} parent=31 // pred_fallthru
          _
        %s1357 = smul.u32 4, %s26
        %p1358 = scmp.lt.s32.totalorder %s25, 0
        %s1359 = scalar_select %p1358, %s25, 0
        %p1360 = scmp.lt.s32.totalorder %s1357, 15
        %s1361 = scalar_select %p1360, %s1357, 15
        %s1362 = smul.addr %s1359, 16
        %s1363 = sadd.s32 %s1361, %s1362
        %s1364 = scalar_lea.vmem %s3, %s1363
        // Predicated region
        $region49: #{pretrain_split_bert_forward.14} parent=31 // pred_check
          %p1365 = pneg %p141
        $region50: #{pretrain_split_bert_forward.14} parent=31 // pred_check_branch
          %1367 = sbr.rel (%p1365) target = $region52
        $region51: #{pretrain_split_bert_forward.14} parent=31 // pred_region
          %s1368 = smul.u32 4, %s26
        $region52: #{pretrain_split_bert_forward.14} parent=31 // pred_fallthru
          _
      $region32: #{pretrain_split_bert_forward.14} parent=5 // pred_fallthru
        _
      %p1369 = scmp.le.s32.totalorder 2, %s15
      // Predicated region
      $region53: #{pretrain_split_bert_forward.14} parent=5 // pred_check
        %p1370 = pneg %p1369
      $region54: #{pretrain_split_bert_forward.14} parent=5 // pred_check_branch
        %1372 = sbr.rel (%p1370) target = $region56
      $region55: #{pretrain_split_bert_forward.14} parent=5 // pred_region
        %s1373 = ssub.s32 %s15, 2
        // Predicated region
        $region57: #{pretrain_split_bert_forward.14} parent=55 // pred_check
          %p1374 = pneg %p147
        $region58: #{pretrain_split_bert_forward.14} parent=55 // pred_check_branch
          %1376 = sbr.rel (%p1374) target = $region60
        $region59: #{pretrain_split_bert_forward.14} parent=55 // pred_region
          %s1377 = smul.u32 4, %s29
          %p1378 = scmp.lt.s32.totalorder %s28, 0
          %s1379 = scalar_select %p1378, %s28, 0
          %p1380 = scmp.lt.s32.totalorder %s1377, 15
          %s1381 = scalar_select %p1380, %s1377, 15
          %s1382 = smul.addr %s1379, 16
          %s1383 = sadd.s32 %s1381, %s1382
          %s1384 = scalar_lea.vmem %s3, %s1383
        $region60: #{pretrain_split_bert_forward.14} parent=55 // pred_fallthru
          _
      $region56: #{pretrain_split_bert_forward.14} parent=5 // pred_fallthru
        _
    $region6: #{pretrain_split_bert_forward.14} parent=1 // loop_footer
      %s19 = sadd.s32 1, %s15
    $region7: #{pretrain_split_bert_forward.14} parent=1 // loop_footer_branch
      %14 = sbr.rel target = $region3
    $region8: #{pretrain_split_bert_forward.14} parent=1 // loop_exit
      _
    %1385 = vsyncpa [#allocation4], 1
    %s1386 = scalar_lea.sflag [#allocation4], 1
    %1387 = vsyncpa %s1386, 1
    %1388 = vsyncpa [#allocation6], 1
    %s1389 = scalar_lea.sflag [#allocation6], 1
    %1390 = vsyncpa %s1389, 1

// kernel: pretrain_split_bert_forward.27
$region0: #{pretrain_split_bert_forward.27}
  #allocation0 [shape = 'u32[]', space=smem, size = 0x4, offset = 0x4, fixed_abs, tag = 'smem constant byte address 0x4 - core index']
  #allocation1 [shape = 'u32[72,128]{1,0:T(1,128)}', space=vmem, size = 0x9000, scoped, tag = 'internal scratch']
  #allocation2 [shape = 'f32[16,32]{1,0:T(8,128)}', space=vmem, size = 0x2000, scoped, tag = 'scratch operand']
  #allocation3 [shape = 'f32[1,1]{1,0:T(1,128)S(1)}', space=vmem, size = 0x200, scoped, tag = 'scoped memory for pretrain_split_bert_forward.27']
  %s0 = inlined_call_operand.vmem [shape: bf16[16,2080], index: 0, kind: input, shape index: {}]
  %s1 = inlined_call_operand.vmem [shape: bf16[2080,32], index: 1, kind: input, shape index: {}]
  %s2 = inlined_call_operand.hbm [shape: f32[1,32], index: 2, kind: input, shape index: {}]
  %s3 = inlined_call_operand.hbm [shape: f32[1,32], index: 3, kind: input, shape index: {}]
  %s4 = inlined_call_operand.hbm [shape: f32[1,32], index: 4, kind: input, shape index: {}]
  %s5 = inlined_call_operand.hbm [shape: f32[1,32], index: 5, kind: input, shape index: {}]
  %s6 = inlined_call_operand.<no memory space> [shape: f32[1,1], index: 6, kind: input, shape index: {}]
  %s7 = inlined_call_operand.vmem [shape: f32[16,1], index: 7, kind: output, shape index: {}]
  %s8 = sld [smem:[#allocation0]]
  $region62: #{pretrain_split_bert_forward.27} parent=0
    _
  %s10 = ssub.s32 1, %s8
  %s11 = scalar_select 0, %s10, %s8
  %v12 = vstv %s6
  %13 = vst [vmem:[#allocation3] sm:$0x1] %v12
  $region1: #{pretrain_split_bert_forward.27} parent=0
    #allocation4 [shape = 'u8[512]{0}', space=vmem, size = 0x400, scoped, tag = 'input window, operand 2, single buffered']
    #allocation5 [shape = 's32[1]{0}', space=sflag, size = 0x4, scoped, tag = 'scoped memory for pretrain_split_bert_forward.27']
    #allocation6 [shape = 'u8[512]{0}', space=vmem, size = 0x400, scoped, tag = 'input window, operand 3, single buffered']
    #allocation7 [shape = 's32[1]{0}', space=sflag, size = 0x4, scoped, tag = 'scoped memory for pretrain_split_bert_forward.27']
    #allocation8 [shape = 'u8[512]{0}', space=vmem, size = 0x400, scoped, tag = 'input window, operand 4, single buffered']
    #allocation9 [shape = 'u8[512]{0}', space=vmem, size = 0x400, scoped, tag = 'input window, operand 5, single buffered']
    #allocation10 [shape = 's32[1]{0}', space=sflag, size = 0x4, scoped, tag = 'scoped memory for pretrain_split_bert_forward.27']
    %14 = vsyncpa [#allocation5], 0
    %15 = vsyncpa [#allocation7], 0
    %16 = vsyncpa [#allocation10], 0
    // Predicated region
    $region2: #{pretrain_split_bert_forward.27} parent=1 // pred_check
      _
    $region3: #{pretrain_split_bert_forward.27} parent=1 // pred_check_branch
      %18 = sbr.rel (0) target = $region5
    $region4: #{pretrain_split_bert_forward.27} parent=1 // pred_region
      _
    $region5: #{pretrain_split_bert_forward.27} parent=1 // pred_fallthru
      _
    // Predicated region
    $region6: #{pretrain_split_bert_forward.27} parent=1 // pred_check
      _
    $region7: #{pretrain_split_bert_forward.27} parent=1 // pred_check_branch
      %20 = sbr.rel (0) target = $region9
    $region8: #{pretrain_split_bert_forward.27} parent=1 // pred_region
      _
    $region9: #{pretrain_split_bert_forward.27} parent=1 // pred_fallthru
      _
    // Predicated region
    $region10: #{pretrain_split_bert_forward.27} parent=1 // pred_check
      _
    $region11: #{pretrain_split_bert_forward.27} parent=1 // pred_check_branch
      %22 = sbr.rel (0) target = $region13
    $region12: #{pretrain_split_bert_forward.27} parent=1 // pred_region
      %24 = vsyncadd [#allocation5], 0
      %s26 = sshll.u32 %s2, 4
      %s27 = int_to_ptr.hbm [resolvable:$true] %s26
      %s28 = sshll.u32 [#allocation4], 4
      %s29 = int_to_ptr.vmem [resolvable:$true] %s28
      %31 = dma.hbm_to_vmem [thread:$0]  %s27, 16, %s29, [#allocation5]
    $region13: #{pretrain_split_bert_forward.27} parent=1 // pred_fallthru
      _
    // Predicated region
    $region14: #{pretrain_split_bert_forward.27} parent=1 // pred_check
      _
    $region15: #{pretrain_split_bert_forward.27} parent=1 // pred_check_branch
      %33 = sbr.rel (0) target = $region17
    $region16: #{pretrain_split_bert_forward.27} parent=1 // pred_region
      %35 = vsyncadd [#allocation7], 0
      %s37 = sshll.u32 %s3, 4
      %s38 = int_to_ptr.hbm [resolvable:$true] %s37
      %s39 = sshll.u32 [#allocation6], 4
      %s40 = int_to_ptr.vmem [resolvable:$true] %s39
      %42 = dma.hbm_to_vmem [thread:$0]  %s38, 16, %s40, [#allocation7]
    $region17: #{pretrain_split_bert_forward.27} parent=1 // pred_fallthru
      _
    // Predicated region
    $region18: #{pretrain_split_bert_forward.27} parent=1 // pred_check
      _
    $region19: #{pretrain_split_bert_forward.27} parent=1 // pred_check_branch
      %44 = sbr.rel (0) target = $region21
    $region20: #{pretrain_split_bert_forward.27} parent=1 // pred_region
      %46 = vsyncadd [#allocation7], 0
      %s48 = sshll.u32 %s4, 4
      %s49 = int_to_ptr.hbm [resolvable:$true] %s48
      %s50 = sshll.u32 [#allocation8], 4
      %s51 = int_to_ptr.vmem [resolvable:$true] %s50
      %53 = dma.hbm_to_vmem [thread:$0]  %s49, 16, %s51, [#allocation7]
    $region21: #{pretrain_split_bert_forward.27} parent=1 // pred_fallthru
      _
    // Predicated region
    $region22: #{pretrain_split_bert_forward.27} parent=1 // pred_check
      _
    $region23: #{pretrain_split_bert_forward.27} parent=1 // pred_check_branch
      %55 = sbr.rel (0) target = $region25
    $region24: #{pretrain_split_bert_forward.27} parent=1 // pred_region
      %57 = vsyncadd [#allocation10], 0
      %s59 = sshll.u32 %s5, 4
      %s60 = int_to_ptr.hbm [resolvable:$true] %s59
      %s61 = sshll.u32 [#allocation9], 4
      %s62 = int_to_ptr.vmem [resolvable:$true] %s61
      %64 = dma.hbm_to_vmem [thread:$0]  %s60, 16, %s62, [#allocation10]
    $region25: #{pretrain_split_bert_forward.27} parent=1 // pred_fallthru
      _
    // Predicated region
    $region26: #{pretrain_split_bert_forward.27} parent=1 // pred_check
      _
    $region27: #{pretrain_split_bert_forward.27} parent=1 // pred_check_branch
      %66 = sbr.rel (0) target = $region29
    $region28: #{pretrain_split_bert_forward.27} parent=1 // pred_region
      _
    $region29: #{pretrain_split_bert_forward.27} parent=1 // pred_fallthru
      _
    // Predicated region
    $region30: #{pretrain_split_bert_forward.27} parent=1 // pred_check
      _
    $region31: #{pretrain_split_bert_forward.27} parent=1 // pred_check_branch
      %68 = sbr.rel (0) target = $region33
    $region32: #{pretrain_split_bert_forward.27} parent=1 // pred_region
      %70 = dma.done [#allocation5], 16
    $region33: #{pretrain_split_bert_forward.27} parent=1 // pred_fallthru
      _
    // Predicated region
    $region34: #{pretrain_split_bert_forward.27} parent=1 // pred_check
      _
    $region35: #{pretrain_split_bert_forward.27} parent=1 // pred_check_branch
      %72 = sbr.rel (0) target = $region37
    $region36: #{pretrain_split_bert_forward.27} parent=1 // pred_region
      %74 = dma.done [#allocation7], 16
    $region37: #{pretrain_split_bert_forward.27} parent=1 // pred_fallthru
      _
    // Predicated region
    $region38: #{pretrain_split_bert_forward.27} parent=1 // pred_check
      _
    $region39: #{pretrain_split_bert_forward.27} parent=1 // pred_check_branch
      %76 = sbr.rel (0) target = $region41
    $region40: #{pretrain_split_bert_forward.27} parent=1 // pred_region
      %78 = dma.done [#allocation7], 16
    $region41: #{pretrain_split_bert_forward.27} parent=1 // pred_fallthru
      _
    // Predicated region
    $region42: #{pretrain_split_bert_forward.27} parent=1 // pred_check
      _
    $region43: #{pretrain_split_bert_forward.27} parent=1 // pred_check_branch
      %80 = sbr.rel (0) target = $region45
    $region44: #{pretrain_split_bert_forward.27} parent=1 // pred_region
      %82 = dma.done [#allocation10], 16
    $region45: #{pretrain_split_bert_forward.27} parent=1 // pred_fallthru
      _
    %p84 = scmp.eq.s32.totalorder 0, 0
    // Predicated region
    $region46: #{pretrain_split_bert_forward.27} parent=1 // pred_check
      %p85 = pneg %p84
    $region47: #{pretrain_split_bert_forward.27} parent=1 // pred_check_branch
      %87 = sbr.rel (%p85) target = $region49
    $region48: #{pretrain_split_bert_forward.27} parent=1 // pred_region
      %vm88 = vcmask 261120
      %89 = vst.msk [vmem:[#allocation2] sm:$0xff] %vm88, 0.0
      %90 = vst.msk [vmem:[#allocation2 + $0x8] sm:$0xff] %vm88, 0.0
    $region49: #{pretrain_split_bert_forward.27} parent=1 // pred_fallthru
      _
    %v91 = vld [vmem:[#allocation2] sm:$0xff]
    %v92 = vld [vmem:[#allocation2 + $0x8] sm:$0xff]
    %v93 = vld [vmem:[%s0] sm:$0xff]
    %v94 = vld [vmem:[%s0 + $0x8] sm:$0xff]
    %v95 = vld [vmem:[%s0 + $0x10] sm:$0xff]
    %v96 = vld [vmem:[%s0 + $0x18] sm:$0xff]
    %v97 = vld [vmem:[%s0 + $0x20] sm:$0xff]
    %v98 = vld [vmem:[%s0 + $0x28] sm:$0xff]
    %v99 = vld [vmem:[%s0 + $0x30] sm:$0xff]
    %v100 = vld [vmem:[%s0 + $0x38] sm:$0xff]
    %v101 = vld [vmem:[%s0 + $0x40] sm:$0xf]
    %v102 = vld [vmem:[%s0 + $0x44] sm:$0xff]
    %v103 = vld [vmem:[%s0 + $0x4c] sm:$0xff]
    %v104 = vld [vmem:[%s0 + $0x54] sm:$0xff]
    %v105 = vld [vmem:[%s0 + $0x5c] sm:$0xff]
    %v106 = vld [vmem:[%s0 + $0x64] sm:$0xff]
    %v107 = vld [vmem:[%s0 + $0x6c] sm:$0xff]
    %v108 = vld [vmem:[%s0 + $0x74] sm:$0xff]
    %v109 = vld [vmem:[%s0 + $0x7c] sm:$0xff]
    %v110 = vld [vmem:[%s0 + $0x84] sm:$0xf]
    %v111 = vld [vmem:[%s1] sm:$0xf]
    %v112 = vld [vmem:[%s1 + $0x4] sm:$0xf]
    %v113 = vld [vmem:[%s1 + $0x8] sm:$0xf]
    %v114 = vld [vmem:[%s1 + $0xc] sm:$0xf]
    %v115 = vld [vmem:[%s1 + $0x10] sm:$0xf]
    %v116 = vld [vmem:[%s1 + $0x14] sm:$0xf]
    %v117 = vld [vmem:[%s1 + $0x18] sm:$0xf]
    %v118 = vld [vmem:[%s1 + $0x1c] sm:$0xf]
    %v119 = vld [vmem:[%s1 + $0x20] sm:$0xf]
    %v120 = vld [vmem:[%s1 + $0x24] sm:$0xf]
    %v121 = vld [vmem:[%s1 + $0x28] sm:$0xf]
    %v122 = vld [vmem:[%s1 + $0x2c] sm:$0xf]
    %v123 = vld [vmem:[%s1 + $0x30] sm:$0xf]
    %v124 = vld [vmem:[%s1 + $0x34] sm:$0xf]
    %v125 = vld [vmem:[%s1 + $0x38] sm:$0xf]
    %v126 = vld [vmem:[%s1 + $0x3c] sm:$0xf]
    %v127 = vld [vmem:[%s1 + $0x40] sm:$0xf]
    %v128 = vld [vmem:[%s1 + $0x44] sm:$0xf]
    %v129 = vld [vmem:[%s1 + $0x48] sm:$0xf]
    %v130 = vld [vmem:[%s1 + $0x4c] sm:$0xf]
    %v131 = vld [vmem:[%s1 + $0x50] sm:$0xf]
    %v132 = vld [vmem:[%s1 + $0x54] sm:$0xf]
    %v133 = vld [vmem:[%s1 + $0x58] sm:$0xf]
    %v134 = vld [vmem:[%s1 + $0x5c] sm:$0xf]
    %v135 = vld [vmem:[%s1 + $0x60] sm:$0xf]
    %v136 = vld [vmem:[%s1 + $0x64] sm:$0xf]
    %v137 = vld [vmem:[%s1 + $0x68] sm:$0xf]
    %v138 = vld [vmem:[%s1 + $0x6c] sm:$0xf]
    %v139 = vld [vmem:[%s1 + $0x70] sm:$0xf]
    %v140 = vld [vmem:[%s1 + $0x74] sm:$0xf]
    %v141 = vld [vmem:[%s1 + $0x78] sm:$0xf]
    %v142 = vld [vmem:[%s1 + $0x7c] sm:$0xf]
    %v143 = vld [vmem:[%s1 + $0x80] sm:$0xf]
    %v144 = vld [vmem:[%s1 + $0x84] sm:$0xf]
    %v145 = vld [vmem:[%s1 + $0x88] sm:$0xf]
    %v146 = vld [vmem:[%s1 + $0x8c] sm:$0xf]
    %v147 = vld [vmem:[%s1 + $0x90] sm:$0xf]
    %v148 = vld [vmem:[%s1 + $0x94] sm:$0xf]
    %v149 = vld [vmem:[%s1 + $0x98] sm:$0xf]
    %v150 = vld [vmem:[%s1 + $0x9c] sm:$0xf]
    %v151 = vld [vmem:[%s1 + $0xa0] sm:$0xf]
    %v152 = vld [vmem:[%s1 + $0xa4] sm:$0xf]
    %v153 = vld [vmem:[%s1 + $0xa8] sm:$0xf]
    %v154 = vld [vmem:[%s1 + $0xac] sm:$0xf]
    %v155 = vld [vmem:[%s1 + $0xb0] sm:$0xf]
    %v156 = vld [vmem:[%s1 + $0xb4] sm:$0xf]
    %v157 = vld [vmem:[%s1 + $0xb8] sm:$0xf]
    %v158 = vld [vmem:[%s1 + $0xbc] sm:$0xf]
    %v159 = vld [vmem:[%s1 + $0xc0] sm:$0xf]
    %v160 = vld [vmem:[%s1 + $0xc4] sm:$0xf]
    %v161 = vld [vmem:[%s1 + $0xc8] sm:$0xf]
    %v162 = vld [vmem:[%s1 + $0xcc] sm:$0xf]
    %v163 = vld [vmem:[%s1 + $0xd0] sm:$0xf]
    %v164 = vld [vmem:[%s1 + $0xd4] sm:$0xf]
    %v165 = vld [vmem:[%s1 + $0xd8] sm:$0xf]
    %v166 = vld [vmem:[%s1 + $0xdc] sm:$0xf]
    %v167 = vld [vmem:[%s1 + $0xe0] sm:$0xf]
    %v168 = vld [vmem:[%s1 + $0xe4] sm:$0xf]
    %v169 = vld [vmem:[%s1 + $0xe8] sm:$0xf]
    %v170 = vld [vmem:[%s1 + $0xec] sm:$0xf]
    %v171 = vld [vmem:[%s1 + $0xf0] sm:$0xf]
    %v172 = vld [vmem:[%s1 + $0xf4] sm:$0xf]
    %v173 = vld [vmem:[%s1 + $0xf8] sm:$0xf]
    %v174 = vld [vmem:[%s1 + $0xfc] sm:$0xf]
    %v175 = vld [vmem:[%s1 + $0x100] sm:$0xf]
    %v176 = vld [vmem:[%s1 + $0x104] sm:$0xf]
    %v177 = vld [vmem:[%s1 + $0x108] sm:$0xf]
    %v178 = vld [vmem:[%s1 + $0x10c] sm:$0xf]
    %v179 = vld [vmem:[%s1 + $0x110] sm:$0xf]
    %v180 = vld [vmem:[%s1 + $0x114] sm:$0xf]
    %v181 = vld [vmem:[%s1 + $0x118] sm:$0xf]
    %v182 = vld [vmem:[%s1 + $0x11c] sm:$0xf]
    %v183 = vld [vmem:[%s1 + $0x120] sm:$0xf]
    %v184 = vld [vmem:[%s1 + $0x124] sm:$0xf]
    %v185 = vld [vmem:[%s1 + $0x128] sm:$0xf]
    %v186 = vld [vmem:[%s1 + $0x12c] sm:$0xf]
    %v187 = vld [vmem:[%s1 + $0x130] sm:$0xf]
    %v188 = vld [vmem:[%s1 + $0x134] sm:$0xf]
    %v189 = vld [vmem:[%s1 + $0x138] sm:$0xf]
    %v190 = vld [vmem:[%s1 + $0x13c] sm:$0xf]
    %v191 = vld [vmem:[%s1 + $0x140] sm:$0xf]
    %v192 = vld [vmem:[%s1 + $0x144] sm:$0xf]
    %v193 = vld [vmem:[%s1 + $0x148] sm:$0xf]
    %v194 = vld [vmem:[%s1 + $0x14c] sm:$0xf]
    %v195 = vld [vmem:[%s1 + $0x150] sm:$0xf]
    %v196 = vld [vmem:[%s1 + $0x154] sm:$0xf]
    %v197 = vld [vmem:[%s1 + $0x158] sm:$0xf]
    %v198 = vld [vmem:[%s1 + $0x15c] sm:$0xf]
    %v199 = vld [vmem:[%s1 + $0x160] sm:$0xf]
    %v200 = vld [vmem:[%s1 + $0x164] sm:$0xf]
    %v201 = vld [vmem:[%s1 + $0x168] sm:$0xf]
    %v202 = vld [vmem:[%s1 + $0x16c] sm:$0xf]
    %v203 = vld [vmem:[%s1 + $0x170] sm:$0xf]
    %v204 = vld [vmem:[%s1 + $0x174] sm:$0xf]
    %v205 = vld [vmem:[%s1 + $0x178] sm:$0xf]
    %v206 = vld [vmem:[%s1 + $0x17c] sm:$0xf]
    %v207 = vld [vmem:[%s1 + $0x180] sm:$0xf]
    %v208 = vld [vmem:[%s1 + $0x184] sm:$0xf]
    %v209 = vld [vmem:[%s1 + $0x188] sm:$0xf]
    %v210 = vld [vmem:[%s1 + $0x18c] sm:$0xf]
    %v211 = vld [vmem:[%s1 + $0x190] sm:$0xf]
    %v212 = vld [vmem:[%s1 + $0x194] sm:$0xf]
    %v213 = vld [vmem:[%s1 + $0x198] sm:$0xf]
    %v214 = vld [vmem:[%s1 + $0x19c] sm:$0xf]
    %v215 = vld [vmem:[%s1 + $0x1a0] sm:$0xf]
    %v216 = vld [vmem:[%s1 + $0x1a4] sm:$0xf]
    %v217 = vld [vmem:[%s1 + $0x1a8] sm:$0xf]
    %v218 = vld [vmem:[%s1 + $0x1ac] sm:$0xf]
    %v219 = vld [vmem:[%s1 + $0x1b0] sm:$0xf]
    %v220 = vld [vmem:[%s1 + $0x1b4] sm:$0xf]
    %v221 = vld [vmem:[%s1 + $0x1b8] sm:$0xf]
    %v222 = vld [vmem:[%s1 + $0x1bc] sm:$0xf]
    %v223 = vld [vmem:[%s1 + $0x1c0] sm:$0xf]
    %v224 = vld [vmem:[%s1 + $0x1c4] sm:$0xf]
    %v225 = vld [vmem:[%s1 + $0x1c8] sm:$0xf]
    %v226 = vld [vmem:[%s1 + $0x1cc] sm:$0xf]
    %v227 = vld [vmem:[%s1 + $0x1d0] sm:$0xf]
    %v228 = vld [vmem:[%s1 + $0x1d4] sm:$0xf]
    %v229 = vld [vmem:[%s1 + $0x1d8] sm:$0xf]
    %v230 = vld [vmem:[%s1 + $0x1dc] sm:$0xf]
    %v231 = vld [vmem:[%s1 + $0x1e0] sm:$0xf]
    %v232 = vld [vmem:[%s1 + $0x1e4] sm:$0xf]
    %v233 = vld [vmem:[%s1 + $0x1e8] sm:$0xf]
    %v234 = vld [vmem:[%s1 + $0x1ec] sm:$0xf]
    %v235 = vld [vmem:[%s1 + $0x1f0] sm:$0xf]
    %v236 = vld [vmem:[%s1 + $0x1f4] sm:$0xf]
    %v237 = vld [vmem:[%s1 + $0x1f8] sm:$0xf]
    %v238 = vld [vmem:[%s1 + $0x1fc] sm:$0xf]
    %v239 = vld [vmem:[%s1 + $0x200] sm:$0xf]
    %v240 = vld [vmem:[%s1 + $0x204] sm:$0xf]
    %v241 = vld [vmem:[%s1 + $0x208] sm:$0xf]
    %v242 = vld [vmem:[%s1 + $0x20c] sm:$0xf]
    %v243 = vld [vmem:[%s1 + $0x210] sm:$0xf]
    %v244 = vld [vmem:[%s1 + $0x214] sm:$0xf]
    %v245 = vld [vmem:[%s1 + $0x218] sm:$0xf]
    %v246 = vld [vmem:[%s1 + $0x21c] sm:$0xf]
    %v247 = vld [vmem:[%s1 + $0x220] sm:$0xf]
    %v248 = vld [vmem:[%s1 + $0x224] sm:$0xf]
    %v249 = vld [vmem:[%s1 + $0x228] sm:$0xf]
    %v250 = vld [vmem:[%s1 + $0x22c] sm:$0xf]
    %v251 = vld [vmem:[%s1 + $0x230] sm:$0xf]
    %v252 = vld [vmem:[%s1 + $0x234] sm:$0xf]
    %v253 = vld [vmem:[%s1 + $0x238] sm:$0xf]
    %v254 = vld [vmem:[%s1 + $0x23c] sm:$0xf]
    %v255 = vld [vmem:[%s1 + $0x240] sm:$0xf]
    %v256 = vld [vmem:[%s1 + $0x244] sm:$0xf]
    %v257 = vld [vmem:[%s1 + $0x248] sm:$0xf]
    %v258 = vld [vmem:[%s1 + $0x24c] sm:$0xf]
    %v259 = vld [vmem:[%s1 + $0x250] sm:$0xf]
    %v260 = vld [vmem:[%s1 + $0x254] sm:$0xf]
    %v261 = vld [vmem:[%s1 + $0x258] sm:$0xf]
    %v262 = vld [vmem:[%s1 + $0x25c] sm:$0xf]
    %v263 = vld [vmem:[%s1 + $0x260] sm:$0xf]
    %v264 = vld [vmem:[%s1 + $0x264] sm:$0xf]
    %v265 = vld [vmem:[%s1 + $0x268] sm:$0xf]
    %v266 = vld [vmem:[%s1 + $0x26c] sm:$0xf]
    %v267 = vld [vmem:[%s1 + $0x270] sm:$0xf]
    %v268 = vld [vmem:[%s1 + $0x274] sm:$0xf]
    %v269 = vld [vmem:[%s1 + $0x278] sm:$0xf]
    %v270 = vld [vmem:[%s1 + $0x27c] sm:$0xf]
    %v271 = vld [vmem:[%s1 + $0x280] sm:$0xf]
    %v272 = vld [vmem:[%s1 + $0x284] sm:$0xf]
    %v273 = vld [vmem:[%s1 + $0x288] sm:$0xf]
    %v274 = vld [vmem:[%s1 + $0x28c] sm:$0xf]
    %v275 = vld [vmem:[%s1 + $0x290] sm:$0xf]
    %v276 = vld [vmem:[%s1 + $0x294] sm:$0xf]
    %v277 = vld [vmem:[%s1 + $0x298] sm:$0xf]
    %v278 = vld [vmem:[%s1 + $0x29c] sm:$0xf]
    %v279 = vld [vmem:[%s1 + $0x2a0] sm:$0xf]
    %v280 = vld [vmem:[%s1 + $0x2a4] sm:$0xf]
    %v281 = vld [vmem:[%s1 + $0x2a8] sm:$0xf]
    %v282 = vld [vmem:[%s1 + $0x2ac] sm:$0xf]
    %v283 = vld [vmem:[%s1 + $0x2b0] sm:$0xf]
    %v284 = vld [vmem:[%s1 + $0x2b4] sm:$0xf]
    %v285 = vld [vmem:[%s1 + $0x2b8] sm:$0xf]
    %v286 = vld [vmem:[%s1 + $0x2bc] sm:$0xf]
    %v287 = vld [vmem:[%s1 + $0x2c0] sm:$0xf]
    %v288 = vld [vmem:[%s1 + $0x2c4] sm:$0xf]
    %v289 = vld [vmem:[%s1 + $0x2c8] sm:$0xf]
    %v290 = vld [vmem:[%s1 + $0x2cc] sm:$0xf]
    %v291 = vld [vmem:[%s1 + $0x2d0] sm:$0xf]
    %v292 = vld [vmem:[%s1 + $0x2d4] sm:$0xf]
    %v293 = vld [vmem:[%s1 + $0x2d8] sm:$0xf]
    %v294 = vld [vmem:[%s1 + $0x2dc] sm:$0xf]
    %v295 = vld [vmem:[%s1 + $0x2e0] sm:$0xf]
    %v296 = vld [vmem:[%s1 + $0x2e4] sm:$0xf]
    %v297 = vld [vmem:[%s1 + $0x2e8] sm:$0xf]
    %v298 = vld [vmem:[%s1 + $0x2ec] sm:$0xf]
    %v299 = vld [vmem:[%s1 + $0x2f0] sm:$0xf]
    %v300 = vld [vmem:[%s1 + $0x2f4] sm:$0xf]
    %v301 = vld [vmem:[%s1 + $0x2f8] sm:$0xf]
    %v302 = vld [vmem:[%s1 + $0x2fc] sm:$0xf]
    %v303 = vld [vmem:[%s1 + $0x300] sm:$0xf]
    %v304 = vld [vmem:[%s1 + $0x304] sm:$0xf]
    %v305 = vld [vmem:[%s1 + $0x308] sm:$0xf]
    %v306 = vld [vmem:[%s1 + $0x30c] sm:$0xf]
    %v307 = vld [vmem:[%s1 + $0x310] sm:$0xf]
    %v308 = vld [vmem:[%s1 + $0x314] sm:$0xf]
    %v309 = vld [vmem:[%s1 + $0x318] sm:$0xf]
    %v310 = vld [vmem:[%s1 + $0x31c] sm:$0xf]
    %v311 = vld [vmem:[%s1 + $0x320] sm:$0xf]
    %v312 = vld [vmem:[%s1 + $0x324] sm:$0xf]
    %v313 = vld [vmem:[%s1 + $0x328] sm:$0xf]
    %v314 = vld [vmem:[%s1 + $0x32c] sm:$0xf]
    %v315 = vld [vmem:[%s1 + $0x330] sm:$0xf]
    %v316 = vld [vmem:[%s1 + $0x334] sm:$0xf]
    %v317 = vld [vmem:[%s1 + $0x338] sm:$0xf]
    %v318 = vld [vmem:[%s1 + $0x33c] sm:$0xf]
    %v319 = vld [vmem:[%s1 + $0x340] sm:$0xf]
    %v320 = vld [vmem:[%s1 + $0x344] sm:$0xf]
    %v321 = vld [vmem:[%s1 + $0x348] sm:$0xf]
    %v322 = vld [vmem:[%s1 + $0x34c] sm:$0xf]
    %v323 = vld [vmem:[%s1 + $0x350] sm:$0xf]
    %v324 = vld [vmem:[%s1 + $0x354] sm:$0xf]
    %v325 = vld [vmem:[%s1 + $0x358] sm:$0xf]
    %v326 = vld [vmem:[%s1 + $0x35c] sm:$0xf]
    %v327 = vld [vmem:[%s1 + $0x360] sm:$0xf]
    %v328 = vld [vmem:[%s1 + $0x364] sm:$0xf]
    %v329 = vld [vmem:[%s1 + $0x368] sm:$0xf]
    %v330 = vld [vmem:[%s1 + $0x36c] sm:$0xf]
    %v331 = vld [vmem:[%s1 + $0x370] sm:$0xf]
    %v332 = vld [vmem:[%s1 + $0x374] sm:$0xf]
    %v333 = vld [vmem:[%s1 + $0x378] sm:$0xf]
    %v334 = vld [vmem:[%s1 + $0x37c] sm:$0xf]
    %v335 = vld [vmem:[%s1 + $0x380] sm:$0xf]
    %v336 = vld [vmem:[%s1 + $0x384] sm:$0xf]
    %v337 = vld [vmem:[%s1 + $0x388] sm:$0xf]
    %v338 = vld [vmem:[%s1 + $0x38c] sm:$0xf]
    %v339 = vld [vmem:[%s1 + $0x390] sm:$0xf]
    %v340 = vld [vmem:[%s1 + $0x394] sm:$0xf]
    %v341 = vld [vmem:[%s1 + $0x398] sm:$0xf]
    %v342 = vld [vmem:[%s1 + $0x39c] sm:$0xf]
    %v343 = vld [vmem:[%s1 + $0x3a0] sm:$0xf]
    %v344 = vld [vmem:[%s1 + $0x3a4] sm:$0xf]
    %v345 = vld [vmem:[%s1 + $0x3a8] sm:$0xf]
    %v346 = vld [vmem:[%s1 + $0x3ac] sm:$0xf]
    %v347 = vld [vmem:[%s1 + $0x3b0] sm:$0xf]
    %v348 = vld [vmem:[%s1 + $0x3b4] sm:$0xf]
    %v349 = vld [vmem:[%s1 + $0x3b8] sm:$0xf]
    %v350 = vld [vmem:[%s1 + $0x3bc] sm:$0xf]
    %v351 = vld [vmem:[%s1 + $0x3c0] sm:$0xf]
    %v352 = vld [vmem:[%s1 + $0x3c4] sm:$0xf]
    %v353 = vld [vmem:[%s1 + $0x3c8] sm:$0xf]
    %v354 = vld [vmem:[%s1 + $0x3cc] sm:$0xf]
    %v355 = vld [vmem:[%s1 + $0x3d0] sm:$0xf]
    %v356 = vld [vmem:[%s1 + $0x3d4] sm:$0xf]
    %v357 = vld [vmem:[%s1 + $0x3d8] sm:$0xf]
    %v358 = vld [vmem:[%s1 + $0x3dc] sm:$0xf]
    %v359 = vld [vmem:[%s1 + $0x3e0] sm:$0xf]
    %v360 = vld [vmem:[%s1 + $0x3e4] sm:$0xf]
    %v361 = vld [vmem:[%s1 + $0x3e8] sm:$0xf]
    %v362 = vld [vmem:[%s1 + $0x3ec] sm:$0xf]
    %v363 = vld [vmem:[%s1 + $0x3f0] sm:$0xf]
    %v364 = vld [vmem:[%s1 + $0x3f4] sm:$0xf]
    %v365 = vld [vmem:[%s1 + $0x3f8] sm:$0xf]
    %v366 = vld [vmem:[%s1 + $0x3fc] sm:$0xf]
    %v367 = vld [vmem:[%s1 + $0x400] sm:$0xf]
    %v368 = vld [vmem:[%s1 + $0x404] sm:$0xf]
    %v369 = vld [vmem:[%s1 + $0x408] sm:$0xf]
    %v370 = vld [vmem:[%s1 + $0x40c] sm:$0xf]
    %v389 = vunpack.c.l.b16 %v93
    %v390 = vunpack.c.h.b16 %v93
    %v391 = vunpack.c.l.b16 %v94
    %v392 = vunpack.c.h.b16 %v94
    %v393 = vunpack.c.l.b16 %v95
    %v394 = vunpack.c.h.b16 %v95
    %v395 = vunpack.c.l.b16 %v96
    %v396 = vunpack.c.h.b16 %v96
    %v397 = vunpack.c.l.b16 %v97
    %v398 = vunpack.c.h.b16 %v97
    %v399 = vunpack.c.l.b16 %v98
    %v400 = vunpack.c.h.b16 %v98
    %v401 = vunpack.c.l.b16 %v99
    %v402 = vunpack.c.h.b16 %v99
    %v403 = vunpack.c.l.b16 %v100
    %v404 = vunpack.c.h.b16 %v100
    %v405 = vunpack.c.l.b16 %v101
    %v406 = vunpack.c.l.b16 %v102
    %v407 = vunpack.c.h.b16 %v102
    %v408 = vunpack.c.l.b16 %v103
    %v409 = vunpack.c.h.b16 %v103
    %v410 = vunpack.c.l.b16 %v104
    %v411 = vunpack.c.h.b16 %v104
    %v412 = vunpack.c.l.b16 %v105
    %v413 = vunpack.c.h.b16 %v105
    %v414 = vunpack.c.l.b16 %v106
    %v415 = vunpack.c.h.b16 %v106
    %v416 = vunpack.c.l.b16 %v107
    %v417 = vunpack.c.h.b16 %v107
    %v418 = vunpack.c.l.b16 %v108
    %v419 = vunpack.c.h.b16 %v108
    %v420 = vunpack.c.l.b16 %v109
    %v421 = vunpack.c.h.b16 %v109
    %v422 = vunpack.c.l.b16 %v110
    %v423 = vpack.c.b16 %v406, %v389
    %v424 = vpack.c.b16 %v407, %v390
    %v425 = vpack.c.b16 %v408, %v391
    %v426 = vpack.c.b16 %v409, %v392
    %v427 = vpack.c.b16 %v410, %v393
    %v428 = vpack.c.b16 %v411, %v394
    %v429 = vpack.c.b16 %v412, %v395
    %v430 = vpack.c.b16 %v413, %v396
    %v431 = vpack.c.b16 %v414, %v397
    %v432 = vpack.c.b16 %v415, %v398
    %v433 = vpack.c.b16 %v416, %v399
    %v434 = vpack.c.b16 %v417, %v400
    %v435 = vpack.c.b16 %v418, %v401
    %v436 = vpack.c.b16 %v419, %v402
    %v437 = vpack.c.b16 %v420, %v403
    %v438 = vpack.c.b16 %v421, %v404
    %v439 = vpack.c.b16 %v422, %v405
    %v716 = vunpack.c.l.b16 %v111
    %v717 = vunpack.c.l.b16 %v112
    %v718 = vunpack.c.l.b16 %v113
    %v719 = vunpack.c.l.b16 %v114
    %v720 = vunpack.c.l.b16 %v115
    %v721 = vunpack.c.l.b16 %v116
    %v722 = vunpack.c.l.b16 %v117
    %v723 = vunpack.c.l.b16 %v118
    %v724 = vunpack.c.l.b16 %v119
    %v725 = vunpack.c.l.b16 %v120
    %v726 = vunpack.c.l.b16 %v121
    %v727 = vunpack.c.l.b16 %v122
    %v728 = vunpack.c.l.b16 %v123
    %v729 = vunpack.c.l.b16 %v124
    %v730 = vunpack.c.l.b16 %v125
    %v731 = vunpack.c.l.b16 %v126
    %v732 = vunpack.c.l.b16 %v127
    %v733 = vunpack.c.l.b16 %v128
    %v734 = vunpack.c.l.b16 %v129
    %v735 = vunpack.c.l.b16 %v130
    %v736 = vunpack.c.l.b16 %v131
    %v737 = vunpack.c.l.b16 %v132
    %v738 = vunpack.c.l.b16 %v133
    %v739 = vunpack.c.l.b16 %v134
    %v740 = vunpack.c.l.b16 %v135
    %v741 = vunpack.c.l.b16 %v136
    %v742 = vunpack.c.l.b16 %v137
    %v743 = vunpack.c.l.b16 %v138
    %v744 = vunpack.c.l.b16 %v139
    %v745 = vunpack.c.l.b16 %v140
    %v746 = vunpack.c.l.b16 %v141
    %v747 = vunpack.c.l.b16 %v142
    %v748 = vunpack.c.l.b16 %v143
    %v749 = vunpack.c.l.b16 %v144
    %v750 = vunpack.c.l.b16 %v145
    %v751 = vunpack.c.l.b16 %v146
    %v752 = vunpack.c.l.b16 %v147
    %v753 = vunpack.c.l.b16 %v148
    %v754 = vunpack.c.l.b16 %v149
    %v755 = vunpack.c.l.b16 %v150
    %v756 = vunpack.c.l.b16 %v151
    %v757 = vunpack.c.l.b16 %v152
    %v758 = vunpack.c.l.b16 %v153
    %v759 = vunpack.c.l.b16 %v154
    %v760 = vunpack.c.l.b16 %v155
    %v761 = vunpack.c.l.b16 %v156
    %v762 = vunpack.c.l.b16 %v157
    %v763 = vunpack.c.l.b16 %v158
    %v764 = vunpack.c.l.b16 %v159
    %v765 = vunpack.c.l.b16 %v160
    %v766 = vunpack.c.l.b16 %v161
    %v767 = vunpack.c.l.b16 %v162
    %v768 = vunpack.c.l.b16 %v163
    %v769 = vunpack.c.l.b16 %v164
    %v770 = vunpack.c.l.b16 %v165
    %v771 = vunpack.c.l.b16 %v166
    %v772 = vunpack.c.l.b16 %v167
    %v773 = vunpack.c.l.b16 %v168
    %v774 = vunpack.c.l.b16 %v169
    %v775 = vunpack.c.l.b16 %v170
    %v776 = vunpack.c.l.b16 %v171
    %v777 = vunpack.c.l.b16 %v172
    %v778 = vunpack.c.l.b16 %v173
    %v779 = vunpack.c.l.b16 %v174
    %v780 = vunpack.c.l.b16 %v175
    %v781 = vunpack.c.l.b16 %v176
    %v782 = vunpack.c.l.b16 %v177
    %v783 = vunpack.c.l.b16 %v178
    %v784 = vunpack.c.l.b16 %v179
    %v785 = vunpack.c.l.b16 %v180
    %v786 = vunpack.c.l.b16 %v181
    %v787 = vunpack.c.l.b16 %v182
    %v788 = vunpack.c.l.b16 %v183
    %v789 = vunpack.c.l.b16 %v184
    %v790 = vunpack.c.l.b16 %v185
    %v791 = vunpack.c.l.b16 %v186
    %v792 = vunpack.c.l.b16 %v187
    %v793 = vunpack.c.l.b16 %v188
    %v794 = vunpack.c.l.b16 %v189
    %v795 = vunpack.c.l.b16 %v190
    %v796 = vunpack.c.l.b16 %v191
    %v797 = vunpack.c.l.b16 %v192
    %v798 = vunpack.c.l.b16 %v193
    %v799 = vunpack.c.l.b16 %v194
    %v800 = vunpack.c.l.b16 %v195
    %v801 = vunpack.c.l.b16 %v196
    %v802 = vunpack.c.l.b16 %v197
    %v803 = vunpack.c.l.b16 %v198
    %v804 = vunpack.c.l.b16 %v199
    %v805 = vunpack.c.l.b16 %v200
    %v806 = vunpack.c.l.b16 %v201
    %v807 = vunpack.c.l.b16 %v202
    %v808 = vunpack.c.l.b16 %v203
    %v809 = vunpack.c.l.b16 %v204
    %v810 = vunpack.c.l.b16 %v205
    %v811 = vunpack.c.l.b16 %v206
    %v812 = vunpack.c.l.b16 %v207
    %v813 = vunpack.c.l.b16 %v208
    %v814 = vunpack.c.l.b16 %v209
    %v815 = vunpack.c.l.b16 %v210
    %v816 = vunpack.c.l.b16 %v211
    %v817 = vunpack.c.l.b16 %v212
    %v818 = vunpack.c.l.b16 %v213
    %v819 = vunpack.c.l.b16 %v214
    %v820 = vunpack.c.l.b16 %v215
    %v821 = vunpack.c.l.b16 %v216
    %v822 = vunpack.c.l.b16 %v217
    %v823 = vunpack.c.l.b16 %v218
    %v824 = vunpack.c.l.b16 %v219
    %v825 = vunpack.c.l.b16 %v220
    %v826 = vunpack.c.l.b16 %v221
    %v827 = vunpack.c.l.b16 %v222
    %v828 = vunpack.c.l.b16 %v223
    %v829 = vunpack.c.l.b16 %v224
    %v830 = vunpack.c.l.b16 %v225
    %v831 = vunpack.c.l.b16 %v226
    %v832 = vunpack.c.l.b16 %v227
    %v833 = vunpack.c.l.b16 %v228
    %v834 = vunpack.c.l.b16 %v229
    %v835 = vunpack.c.l.b16 %v230
    %v836 = vunpack.c.l.b16 %v231
    %v837 = vunpack.c.l.b16 %v232
    %v838 = vunpack.c.l.b16 %v233
    %v839 = vunpack.c.l.b16 %v234
    %v840 = vunpack.c.l.b16 %v235
    %v841 = vunpack.c.l.b16 %v236
    %v842 = vunpack.c.l.b16 %v237
    %v843 = vunpack.c.l.b16 %v238
    %v844 = vunpack.c.l.b16 %v239
    %v845 = vunpack.c.l.b16 %v240
    %v846 = vunpack.c.l.b16 %v241
    %v847 = vunpack.c.l.b16 %v242
    %v848 = vunpack.c.l.b16 %v243
    %v849 = vunpack.c.l.b16 %v244
    %v850 = vunpack.c.l.b16 %v245
    %v851 = vunpack.c.l.b16 %v246
    %v852 = vunpack.c.l.b16 %v247
    %v853 = vunpack.c.l.b16 %v248
    %v854 = vunpack.c.l.b16 %v249
    %v855 = vunpack.c.l.b16 %v250
    %v856 = vunpack.c.l.b16 %v251
    %v857 = vunpack.c.l.b16 %v252
    %v858 = vunpack.c.l.b16 %v253
    %v859 = vunpack.c.l.b16 %v254
    %v860 = vunpack.c.l.b16 %v255
    %v861 = vunpack.c.l.b16 %v256
    %v862 = vunpack.c.l.b16 %v257
    %v863 = vunpack.c.l.b16 %v258
    %v864 = vunpack.c.l.b16 %v259
    %v865 = vunpack.c.l.b16 %v260
    %v866 = vunpack.c.l.b16 %v261
    %v867 = vunpack.c.l.b16 %v262
    %v868 = vunpack.c.l.b16 %v263
    %v869 = vunpack.c.l.b16 %v264
    %v870 = vunpack.c.l.b16 %v265
    %v871 = vunpack.c.l.b16 %v266
    %v872 = vunpack.c.l.b16 %v267
    %v873 = vunpack.c.l.b16 %v268
    %v874 = vunpack.c.l.b16 %v269
    %v875 = vunpack.c.l.b16 %v270
    %v876 = vunpack.c.l.b16 %v271
    %v877 = vunpack.c.l.b16 %v272
    %v878 = vunpack.c.l.b16 %v273
    %v879 = vunpack.c.l.b16 %v274
    %v880 = vunpack.c.l.b16 %v275
    %v881 = vunpack.c.l.b16 %v276
    %v882 = vunpack.c.l.b16 %v277
    %v883 = vunpack.c.l.b16 %v278
    %v884 = vunpack.c.l.b16 %v279
    %v885 = vunpack.c.l.b16 %v280
    %v886 = vunpack.c.l.b16 %v281
    %v887 = vunpack.c.l.b16 %v282
    %v888 = vunpack.c.l.b16 %v283
    %v889 = vunpack.c.l.b16 %v284
    %v890 = vunpack.c.l.b16 %v285
    %v891 = vunpack.c.l.b16 %v286
    %v892 = vunpack.c.l.b16 %v287
    %v893 = vunpack.c.l.b16 %v288
    %v894 = vunpack.c.l.b16 %v289
    %v895 = vunpack.c.l.b16 %v290
    %v896 = vunpack.c.l.b16 %v291
    %v897 = vunpack.c.l.b16 %v292
    %v898 = vunpack.c.l.b16 %v293
    %v899 = vunpack.c.l.b16 %v294
    %v900 = vunpack.c.l.b16 %v295
    %v901 = vunpack.c.l.b16 %v296
    %v902 = vunpack.c.l.b16 %v297
    %v903 = vunpack.c.l.b16 %v298
    %v904 = vunpack.c.l.b16 %v299
    %v905 = vunpack.c.l.b16 %v300
    %v906 = vunpack.c.l.b16 %v301
    %v907 = vunpack.c.l.b16 %v302
    %v908 = vunpack.c.l.b16 %v303
    %v909 = vunpack.c.l.b16 %v304
    %v910 = vunpack.c.l.b16 %v305
    %v911 = vunpack.c.l.b16 %v306
    %v912 = vunpack.c.l.b16 %v307
    %v913 = vunpack.c.l.b16 %v308
    %v914 = vunpack.c.l.b16 %v309
    %v915 = vunpack.c.l.b16 %v310
    %v916 = vunpack.c.l.b16 %v311
    %v917 = vunpack.c.l.b16 %v312
    %v918 = vunpack.c.l.b16 %v313
    %v919 = vunpack.c.l.b16 %v314
    %v920 = vunpack.c.l.b16 %v315
    %v921 = vunpack.c.l.b16 %v316
    %v922 = vunpack.c.l.b16 %v317
    %v923 = vunpack.c.l.b16 %v318
    %v924 = vunpack.c.l.b16 %v319
    %v925 = vunpack.c.l.b16 %v320
    %v926 = vunpack.c.l.b16 %v321
    %v927 = vunpack.c.l.b16 %v322
    %v928 = vunpack.c.l.b16 %v323
    %v929 = vunpack.c.l.b16 %v324
    %v930 = vunpack.c.l.b16 %v325
    %v931 = vunpack.c.l.b16 %v326
    %v932 = vunpack.c.l.b16 %v327
    %v933 = vunpack.c.l.b16 %v328
    %v934 = vunpack.c.l.b16 %v329
    %v935 = vunpack.c.l.b16 %v330
    %v936 = vunpack.c.l.b16 %v331
    %v937 = vunpack.c.l.b16 %v332
    %v938 = vunpack.c.l.b16 %v333
    %v939 = vunpack.c.l.b16 %v334
    %v940 = vunpack.c.l.b16 %v335
    %v941 = vunpack.c.l.b16 %v336
    %v942 = vunpack.c.l.b16 %v337
    %v943 = vunpack.c.l.b16 %v338
    %v944 = vunpack.c.l.b16 %v339
    %v945 = vunpack.c.l.b16 %v340
    %v946 = vunpack.c.l.b16 %v341
    %v947 = vunpack.c.l.b16 %v342
    %v948 = vunpack.c.l.b16 %v343
    %v949 = vunpack.c.l.b16 %v344
    %v950 = vunpack.c.l.b16 %v345
    %v951 = vunpack.c.l.b16 %v346
    %v952 = vunpack.c.l.b16 %v347
    %v953 = vunpack.c.l.b16 %v348
    %v954 = vunpack.c.l.b16 %v349
    %v955 = vunpack.c.l.b16 %v350
    %v956 = vunpack.c.l.b16 %v351
    %v957 = vunpack.c.l.b16 %v352
    %v958 = vunpack.c.l.b16 %v353
    %v959 = vunpack.c.l.b16 %v354
    %v960 = vunpack.c.l.b16 %v355
    %v961 = vunpack.c.l.b16 %v356
    %v962 = vunpack.c.l.b16 %v357
    %v963 = vunpack.c.l.b16 %v358
    %v964 = vunpack.c.l.b16 %v359
    %v965 = vunpack.c.l.b16 %v360
    %v966 = vunpack.c.l.b16 %v361
    %v967 = vunpack.c.l.b16 %v362
    %v968 = vunpack.c.l.b16 %v363
    %v969 = vunpack.c.l.b16 %v364
    %v970 = vunpack.c.l.b16 %v365
    %v971 = vunpack.c.l.b16 %v366
    %v972 = vunpack.c.l.b16 %v367
    %v973 = vunpack.c.l.b16 %v368
    %v974 = vunpack.c.l.b16 %v369
    %v975 = vunpack.c.l.b16 %v370
    %v976 = vpack.c.b16 %v717, %v716
    %v977 = vpack.c.b16 %v719, %v718
    %v978 = vpack.c.b16 %v721, %v720
    %v979 = vpack.c.b16 %v723, %v722
    %v980 = vpack.c.b16 %v725, %v724
    %v981 = vpack.c.b16 %v727, %v726
    %v982 = vpack.c.b16 %v729, %v728
    %v983 = vpack.c.b16 %v731, %v730
    %v984 = vpack.c.b16 %v733, %v732
    %v985 = vpack.c.b16 %v735, %v734
    %v986 = vpack.c.b16 %v737, %v736
    %v987 = vpack.c.b16 %v739, %v738
    %v988 = vpack.c.b16 %v741, %v740
    %v989 = vpack.c.b16 %v743, %v742
    %v990 = vpack.c.b16 %v745, %v744
    %v991 = vpack.c.b16 %v747, %v746
    %v992 = vpack.c.b16 %v749, %v748
    %v993 = vpack.c.b16 %v751, %v750
    %v994 = vpack.c.b16 %v753, %v752
    %v995 = vpack.c.b16 %v755, %v754
    %v996 = vpack.c.b16 %v757, %v756
    %v997 = vpack.c.b16 %v759, %v758
    %v998 = vpack.c.b16 %v761, %v760
    %v999 = vpack.c.b16 %v763, %v762
    %v1000 = vpack.c.b16 %v765, %v764
    %v1001 = vpack.c.b16 %v767, %v766
    %v1002 = vpack.c.b16 %v769, %v768
    %v1003 = vpack.c.b16 %v771, %v770
    %v1004 = vpack.c.b16 %v773, %v772
    %v1005 = vpack.c.b16 %v775, %v774
    %v1006 = vpack.c.b16 %v777, %v776
    %v1007 = vpack.c.b16 %v779, %v778
    %v1008 = vpack.c.b16 %v781, %v780
    %v1009 = vpack.c.b16 %v783, %v782
    %v1010 = vpack.c.b16 %v785, %v784
    %v1011 = vpack.c.b16 %v787, %v786
    %v1012 = vpack.c.b16 %v789, %v788
    %v1013 = vpack.c.b16 %v791, %v790
    %v1014 = vpack.c.b16 %v793, %v792
    %v1015 = vpack.c.b16 %v795, %v794
    %v1016 = vpack.c.b16 %v797, %v796
    %v1017 = vpack.c.b16 %v799, %v798
    %v1018 = vpack.c.b16 %v801, %v800
    %v1019 = vpack.c.b16 %v803, %v802
    %v1020 = vpack.c.b16 %v805, %v804
    %v1021 = vpack.c.b16 %v807, %v806
    %v1022 = vpack.c.b16 %v809, %v808
    %v1023 = vpack.c.b16 %v811, %v810
    %v1024 = vpack.c.b16 %v813, %v812
    %v1025 = vpack.c.b16 %v815, %v814
    %v1026 = vpack.c.b16 %v817, %v816
    %v1027 = vpack.c.b16 %v819, %v818
    %v1028 = vpack.c.b16 %v821, %v820
    %v1029 = vpack.c.b16 %v823, %v822
    %v1030 = vpack.c.b16 %v825, %v824
    %v1031 = vpack.c.b16 %v827, %v826
    %v1032 = vpack.c.b16 %v829, %v828
    %v1033 = vpack.c.b16 %v831, %v830
    %v1034 = vpack.c.b16 %v833, %v832
    %v1035 = vpack.c.b16 %v835, %v834
    %v1036 = vpack.c.b16 %v837, %v836
    %v1037 = vpack.c.b16 %v839, %v838
    %v1038 = vpack.c.b16 %v841, %v840
    %v1039 = vpack.c.b16 %v843, %v842
    %v1040 = vpack.c.b16 %v845, %v844
    %v1041 = vpack.c.b16 %v847, %v846
    %v1042 = vpack.c.b16 %v849, %v848
    %v1043 = vpack.c.b16 %v851, %v850
    %v1044 = vpack.c.b16 %v853, %v852
    %v1045 = vpack.c.b16 %v855, %v854
    %v1046 = vpack.c.b16 %v857, %v856
    %v1047 = vpack.c.b16 %v859, %v858
    %v1048 = vpack.c.b16 %v861, %v860
    %v1049 = vpack.c.b16 %v863, %v862
    %v1050 = vpack.c.b16 %v865, %v864
    %v1051 = vpack.c.b16 %v867, %v866
    %v1052 = vpack.c.b16 %v869, %v868
    %v1053 = vpack.c.b16 %v871, %v870
    %v1054 = vpack.c.b16 %v873, %v872
    %v1055 = vpack.c.b16 %v875, %v874
    %v1056 = vpack.c.b16 %v877, %v876
    %v1057 = vpack.c.b16 %v879, %v878
    %v1058 = vpack.c.b16 %v881, %v880
    %v1059 = vpack.c.b16 %v883, %v882
    %v1060 = vpack.c.b16 %v885, %v884
    %v1061 = vpack.c.b16 %v887, %v886
    %v1062 = vpack.c.b16 %v889, %v888
    %v1063 = vpack.c.b16 %v891, %v890
    %v1064 = vpack.c.b16 %v893, %v892
    %v1065 = vpack.c.b16 %v895, %v894
    %v1066 = vpack.c.b16 %v897, %v896
    %v1067 = vpack.c.b16 %v899, %v898
    %v1068 = vpack.c.b16 %v901, %v900
    %v1069 = vpack.c.b16 %v903, %v902
    %v1070 = vpack.c.b16 %v905, %v904
    %v1071 = vpack.c.b16 %v907, %v906
    %v1072 = vpack.c.b16 %v909, %v908
    %v1073 = vpack.c.b16 %v911, %v910
    %v1074 = vpack.c.b16 %v913, %v912
    %v1075 = vpack.c.b16 %v915, %v914
    %v1076 = vpack.c.b16 %v917, %v916
    %v1077 = vpack.c.b16 %v919, %v918
    %v1078 = vpack.c.b16 %v921, %v920
    %v1079 = vpack.c.b16 %v923, %v922
    %v1080 = vpack.c.b16 %v925, %v924
    %v1081 = vpack.c.b16 %v927, %v926
    %v1082 = vpack.c.b16 %v929, %v928
    %v1083 = vpack.c.b16 %v931, %v930
    %v1084 = vpack.c.b16 %v933, %v932
    %v1085 = vpack.c.b16 %v935, %v934
    %v1086 = vpack.c.b16 %v937, %v936
    %v1087 = vpack.c.b16 %v939, %v938
    %v1088 = vpack.c.b16 %v941, %v940
    %v1089 = vpack.c.b16 %v943, %v942
    %v1090 = vpack.c.b16 %v945, %v944
    %v1091 = vpack.c.b16 %v947, %v946
    %v1092 = vpack.c.b16 %v949, %v948
    %v1093 = vpack.c.b16 %v951, %v950
    %v1094 = vpack.c.b16 %v953, %v952
    %v1095 = vpack.c.b16 %v955, %v954
    %v1096 = vpack.c.b16 %v957, %v956
    %v1097 = vpack.c.b16 %v959, %v958
    %v1098 = vpack.c.b16 %v961, %v960
    %v1099 = vpack.c.b16 %v963, %v962
    %v1100 = vpack.c.b16 %v965, %v964
    %v1101 = vpack.c.b16 %v967, %v966
    %v1102 = vpack.c.b16 %v969, %v968
    %v1103 = vpack.c.b16 %v971, %v970
    %v1104 = vpack.c.b16 %v973, %v972
    %v1105 = vpack.c.b16 %v975, %v974
    %vm1236 = vcmask 261120
    %v1238 = vsel %vm1236, %v439, 0
    %1240 = vmatpush.bf16.msra.mxu0 %v983
    %1241 = vmatpush.bf16.msra.mxu0 %v982
    %1242 = vmatpush.bf16.msra.mxu0 %v981
    %1243 = vmatpush.bf16.msra.mxu0 %v980
    %1244 = vmatpush.bf16.msra.mxu0 %v979
    %1245 = vmatpush.bf16.msra.mxu0 %v978
    %1246 = vmatpush.bf16.msra.mxu0 %v977
    %1247 = vmatpush.bf16.msra.mxu0 %v976
    %1248 = vmatmul.bf16.gmra.mxu0 %v423
    %v1249 = vpop.f32.mrf.mxu0
    %v1250 = vadd.f32 0.0, %v1249
    %v1251 = vpop.f32.mrf.mxu0
    %v1252 = vadd.f32 0.0, %v1251
    %1253 = vdwg.mxu0
    %1254 = vmatpush.bf16.msra.mxu0 %v991
    %1255 = vmatpush.bf16.msra.mxu0 %v990
    %1256 = vmatpush.bf16.msra.mxu0 %v989
    %1257 = vmatpush.bf16.msra.mxu0 %v988
    %1258 = vmatpush.bf16.msra.mxu0 %v987
    %1259 = vmatpush.bf16.msra.mxu0 %v986
    %1260 = vmatpush.bf16.msra.mxu0 %v985
    %1261 = vmatpush.bf16.msra.mxu0 %v984
    %1262 = vmatmul.bf16.gmra.mxu0 %v424
    %v1263 = vpop.f32.mrf.mxu0
    %v1264 = vadd.f32 %v1250, %v1263
    %v1265 = vpop.f32.mrf.mxu0
    %v1266 = vadd.f32 %v1252, %v1265
    %1267 = vdwg.mxu0
    %1268 = vmatpush.bf16.msra.mxu0 %v999
    %1269 = vmatpush.bf16.msra.mxu0 %v998
    %1270 = vmatpush.bf16.msra.mxu0 %v997
    %1271 = vmatpush.bf16.msra.mxu0 %v996
    %1272 = vmatpush.bf16.msra.mxu0 %v995
    %1273 = vmatpush.bf16.msra.mxu0 %v994
    %1274 = vmatpush.bf16.msra.mxu0 %v993
    %1275 = vmatpush.bf16.msra.mxu0 %v992
    %1276 = vmatmul.bf16.gmra.mxu0 %v425
    %v1277 = vpop.f32.mrf.mxu0
    %v1278 = vadd.f32 %v1264, %v1277
    %v1279 = vpop.f32.mrf.mxu0
    %v1280 = vadd.f32 %v1266, %v1279
    %1281 = vdwg.mxu0
    %1282 = vmatpush.bf16.msra.mxu0 %v1007
    %1283 = vmatpush.bf16.msra.mxu0 %v1006
    %1284 = vmatpush.bf16.msra.mxu0 %v1005
    %1285 = vmatpush.bf16.msra.mxu0 %v1004
    %1286 = vmatpush.bf16.msra.mxu0 %v1003
    %1287 = vmatpush.bf16.msra.mxu0 %v1002
    %1288 = vmatpush.bf16.msra.mxu0 %v1001
    %1289 = vmatpush.bf16.msra.mxu0 %v1000
    %1290 = vmatmul.bf16.gmra.mxu0 %v426
    %v1291 = vpop.f32.mrf.mxu0
    %v1292 = vadd.f32 %v1278, %v1291
    %v1293 = vpop.f32.mrf.mxu0
    %v1294 = vadd.f32 %v1280, %v1293
    %1295 = vdwg.mxu0
    %1296 = vmatpush.bf16.msra.mxu0 %v1015
    %1297 = vmatpush.bf16.msra.mxu0 %v1014
    %1298 = vmatpush.bf16.msra.mxu0 %v1013
    %1299 = vmatpush.bf16.msra.mxu0 %v1012
    %1300 = vmatpush.bf16.msra.mxu0 %v1011
    %1301 = vmatpush.bf16.msra.mxu0 %v1010
    %1302 = vmatpush.bf16.msra.mxu0 %v1009
    %1303 = vmatpush.bf16.msra.mxu0 %v1008
    %1304 = vmatmul.bf16.gmra.mxu0 %v427
    %v1305 = vpop.f32.mrf.mxu0
    %v1306 = vadd.f32 %v1292, %v1305
    %v1307 = vpop.f32.mrf.mxu0
    %v1308 = vadd.f32 %v1294, %v1307
    %1309 = vdwg.mxu0
    %1310 = vmatpush.bf16.msra.mxu0 %v1023
    %1311 = vmatpush.bf16.msra.mxu0 %v1022
    %1312 = vmatpush.bf16.msra.mxu0 %v1021
    %1313 = vmatpush.bf16.msra.mxu0 %v1020
    %1314 = vmatpush.bf16.msra.mxu0 %v1019
    %1315 = vmatpush.bf16.msra.mxu0 %v1018
    %1316 = vmatpush.bf16.msra.mxu0 %v1017
    %1317 = vmatpush.bf16.msra.mxu0 %v1016
    %1318 = vmatmul.bf16.gmra.mxu0 %v428
    %v1319 = vpop.f32.mrf.mxu0
    %v1320 = vadd.f32 %v1306, %v1319
    %v1321 = vpop.f32.mrf.mxu0
    %v1322 = vadd.f32 %v1308, %v1321
    %1323 = vdwg.mxu0
    %1324 = vmatpush.bf16.msra.mxu0 %v1031
    %1325 = vmatpush.bf16.msra.mxu0 %v1030
    %1326 = vmatpush.bf16.msra.mxu0 %v1029
    %1327 = vmatpush.bf16.msra.mxu0 %v1028
    %1328 = vmatpush.bf16.msra.mxu0 %v1027
    %1329 = vmatpush.bf16.msra.mxu0 %v1026
    %1330 = vmatpush.bf16.msra.mxu0 %v1025
    %1331 = vmatpush.bf16.msra.mxu0 %v1024
    %1332 = vmatmul.bf16.gmra.mxu0 %v429
    %v1333 = vpop.f32.mrf.mxu0
    %v1334 = vadd.f32 %v1320, %v1333
    %v1335 = vpop.f32.mrf.mxu0
    %v1336 = vadd.f32 %v1322, %v1335
    %1337 = vdwg.mxu0
    %1338 = vmatpush.bf16.msra.mxu0 %v1039
    %1339 = vmatpush.bf16.msra.mxu0 %v1038
    %1340 = vmatpush.bf16.msra.mxu0 %v1037
    %1341 = vmatpush.bf16.msra.mxu0 %v1036
    %1342 = vmatpush.bf16.msra.mxu0 %v1035
    %1343 = vmatpush.bf16.msra.mxu0 %v1034
    %1344 = vmatpush.bf16.msra.mxu0 %v1033
    %1345 = vmatpush.bf16.msra.mxu0 %v1032
    %1346 = vmatmul.bf16.gmra.mxu0 %v430
    %v1347 = vpop.f32.mrf.mxu0
    %v1348 = vadd.f32 %v1334, %v1347
    %v1349 = vpop.f32.mrf.mxu0
    %v1350 = vadd.f32 %v1336, %v1349
    %1351 = vdwg.mxu0
    %1352 = vmatpush.bf16.msra.mxu0 %v1047
    %1353 = vmatpush.bf16.msra.mxu0 %v1046
    %1354 = vmatpush.bf16.msra.mxu0 %v1045
    %1355 = vmatpush.bf16.msra.mxu0 %v1044
    %1356 = vmatpush.bf16.msra.mxu0 %v1043
    %1357 = vmatpush.bf16.msra.mxu0 %v1042
    %1358 = vmatpush.bf16.msra.mxu0 %v1041
    %1359 = vmatpush.bf16.msra.mxu0 %v1040
    %1360 = vmatmul.bf16.gmra.mxu0 %v431
    %v1361 = vpop.f32.mrf.mxu0
    %v1362 = vadd.f32 %v1348, %v1361
    %v1363 = vpop.f32.mrf.mxu0
    %v1364 = vadd.f32 %v1350, %v1363
    %1365 = vdwg.mxu0
    %1366 = vmatpush.bf16.msra.mxu0 %v1055
    %1367 = vmatpush.bf16.msra.mxu0 %v1054
    %1368 = vmatpush.bf16.msra.mxu0 %v1053
    %1369 = vmatpush.bf16.msra.mxu0 %v1052
    %1370 = vmatpush.bf16.msra.mxu0 %v1051
    %1371 = vmatpush.bf16.msra.mxu0 %v1050
    %1372 = vmatpush.bf16.msra.mxu0 %v1049
    %1373 = vmatpush.bf16.msra.mxu0 %v1048
    %1374 = vmatmul.bf16.gmra.mxu0 %v432
    %v1375 = vpop.f32.mrf.mxu0
    %v1376 = vadd.f32 %v1362, %v1375
    %v1377 = vpop.f32.mrf.mxu0
    %v1378 = vadd.f32 %v1364, %v1377
    %1379 = vdwg.mxu0
    %1380 = vmatpush.bf16.msra.mxu0 %v1063
    %1381 = vmatpush.bf16.msra.mxu0 %v1062
    %1382 = vmatpush.bf16.msra.mxu0 %v1061
    %1383 = vmatpush.bf16.msra.mxu0 %v1060
    %1384 = vmatpush.bf16.msra.mxu0 %v1059
    %1385 = vmatpush.bf16.msra.mxu0 %v1058
    %1386 = vmatpush.bf16.msra.mxu0 %v1057
    %1387 = vmatpush.bf16.msra.mxu0 %v1056
    %1388 = vmatmul.bf16.gmra.mxu0 %v433
    %v1389 = vpop.f32.mrf.mxu0
    %v1390 = vadd.f32 %v1376, %v1389
    %v1391 = vpop.f32.mrf.mxu0
    %v1392 = vadd.f32 %v1378, %v1391
    %1393 = vdwg.mxu0
    %1394 = vmatpush.bf16.msra.mxu0 %v1071
    %1395 = vmatpush.bf16.msra.mxu0 %v1070
    %1396 = vmatpush.bf16.msra.mxu0 %v1069
    %1397 = vmatpush.bf16.msra.mxu0 %v1068
    %1398 = vmatpush.bf16.msra.mxu0 %v1067
    %1399 = vmatpush.bf16.msra.mxu0 %v1066
    %1400 = vmatpush.bf16.msra.mxu0 %v1065
    %1401 = vmatpush.bf16.msra.mxu0 %v1064
    %1402 = vmatmul.bf16.gmra.mxu0 %v434
    %v1403 = vpop.f32.mrf.mxu0
    %v1404 = vadd.f32 %v1390, %v1403
    %v1405 = vpop.f32.mrf.mxu0
    %v1406 = vadd.f32 %v1392, %v1405
    %1407 = vdwg.mxu0
    %1408 = vmatpush.bf16.msra.mxu0 %v1079
    %1409 = vmatpush.bf16.msra.mxu0 %v1078
    %1410 = vmatpush.bf16.msra.mxu0 %v1077
    %1411 = vmatpush.bf16.msra.mxu0 %v1076
    %1412 = vmatpush.bf16.msra.mxu0 %v1075
    %1413 = vmatpush.bf16.msra.mxu0 %v1074
    %1414 = vmatpush.bf16.msra.mxu0 %v1073
    %1415 = vmatpush.bf16.msra.mxu0 %v1072
    %1416 = vmatmul.bf16.gmra.mxu0 %v435
    %v1417 = vpop.f32.mrf.mxu0
    %v1418 = vadd.f32 %v1404, %v1417
    %v1419 = vpop.f32.mrf.mxu0
    %v1420 = vadd.f32 %v1406, %v1419
    %1421 = vdwg.mxu0
    %1422 = vmatpush.bf16.msra.mxu0 %v1087
    %1423 = vmatpush.bf16.msra.mxu0 %v1086
    %1424 = vmatpush.bf16.msra.mxu0 %v1085
    %1425 = vmatpush.bf16.msra.mxu0 %v1084
    %1426 = vmatpush.bf16.msra.mxu0 %v1083
    %1427 = vmatpush.bf16.msra.mxu0 %v1082
    %1428 = vmatpush.bf16.msra.mxu0 %v1081
    %1429 = vmatpush.bf16.msra.mxu0 %v1080
    %1430 = vmatmul.bf16.gmra.mxu0 %v436
    %v1431 = vpop.f32.mrf.mxu0
    %v1432 = vadd.f32 %v1418, %v1431
    %v1433 = vpop.f32.mrf.mxu0
    %v1434 = vadd.f32 %v1420, %v1433
    %1435 = vdwg.mxu0
    %1436 = vmatpush.bf16.msra.mxu0 %v1095
    %1437 = vmatpush.bf16.msra.mxu0 %v1094
    %1438 = vmatpush.bf16.msra.mxu0 %v1093
    %1439 = vmatpush.bf16.msra.mxu0 %v1092
    %1440 = vmatpush.bf16.msra.mxu0 %v1091
    %1441 = vmatpush.bf16.msra.mxu0 %v1090
    %1442 = vmatpush.bf16.msra.mxu0 %v1089
    %1443 = vmatpush.bf16.msra.mxu0 %v1088
    %1444 = vmatmul.bf16.gmra.mxu0 %v437
    %v1445 = vpop.f32.mrf.mxu0
    %v1446 = vadd.f32 %v1432, %v1445
    %v1447 = vpop.f32.mrf.mxu0
    %v1448 = vadd.f32 %v1434, %v1447
    %1449 = vdwg.mxu0
    %1450 = vmatpush.bf16.msra.mxu0 %v1103
    %1451 = vmatpush.bf16.msra.mxu0 %v1102
    %1452 = vmatpush.bf16.msra.mxu0 %v1101
    %1453 = vmatpush.bf16.msra.mxu0 %v1100
    %1454 = vmatpush.bf16.msra.mxu0 %v1099
    %1455 = vmatpush.bf16.msra.mxu0 %v1098
    %1456 = vmatpush.bf16.msra.mxu0 %v1097
    %1457 = vmatpush.bf16.msra.mxu0 %v1096
    %1458 = vmatmul.bf16.gmra.mxu0 %v438
    %v1459 = vpop.f32.mrf.mxu0
    %v1460 = vadd.f32 %v1446, %v1459
    %v1461 = vpop.f32.mrf.mxu0
    %v1462 = vadd.f32 %v1448, %v1461
    %1463 = vdwg.mxu0
    %1464 = vmatpush.bf16.msra.mxu0 0
    %1465 = vmatpush.bf16.msra.mxu0 0
    %1466 = vmatpush.bf16.msra.mxu0 0
    %1467 = vmatpush.bf16.msra.mxu0 0
    %1468 = vmatpush.bf16.msra.mxu0 0
    %1469 = vmatpush.bf16.msra.mxu0 0
    %1470 = vmatpush.bf16.msra.mxu0 %v1105
    %1471 = vmatpush.bf16.msra.mxu0 %v1104
    %1472 = vmatmul.bf16.gmra.mxu0 %v1238
    %v1473 = vpop.f32.mrf.mxu0
    %v1474 = vadd.f32 %v1460, %v1473
    %v1475 = vpop.f32.mrf.mxu0
    %v1476 = vadd.f32 %v1462, %v1475
    %1477 = vdwg.mxu0
    %v1478 = vadd.f32 %v91, %v1474
    %v1479 = vadd.f32 %v92, %v1476
    %1480 = vst.msk [vmem:[#allocation2] sm:$0xff] %vm1236, %v1478
    %1481 = vst.msk [vmem:[#allocation2 + $0x8] sm:$0xff] %vm1236, %v1479
    // Predicated region
    $region50: #{pretrain_split_bert_forward.27} parent=1 // pred_check
      %p1482 = pneg %p84
    $region51: #{pretrain_split_bert_forward.27} parent=1 // pred_check_branch
      %1484 = sbr.rel (%p1482) target = $region53
    $region52: #{pretrain_split_bert_forward.27} parent=1 // pred_region
      %v1485 = vld [vmem:[#allocation2] sm:$0xff]
      %v1486 = vld [vmem:[#allocation2 + $0x8] sm:$0xff]
      %v1487 = vld [vmem:[#allocation4] sm:$0x1]
      %v1489 = vperm.slane %v1487, 0
      %v1491 = vadd.f32 %v1485, %v1489
      %v1492 = vadd.f32 %v1486, %v1489
      %v1493 = vsel %vm1236, %v1491, 0.0
      %1494 = vadd.xlane.f32.xlu0 %v1493
      %v1495 = vpop.xlane.xlu0 %1494
      %v1496 = vsel %vm1236, %v1492, 0.0
      %1497 = vadd.xlane.f32.xlu0 %v1496
      %v1498 = vpop.xlane.xlu0 %1497
      %v1499 = vrcp.pop 32.0
      %v1500 = vmul.f32 32.0, %v1499
      %v1501 = vsub.f32 1.0, %v1500
      %v1502 = vmul.f32 %v1499, %v1501
      %v1503 = vadd.f32 %v1499, %v1502
      %vm1504 = vweird.f32 %v1499
      %v1505 = vsel %vm1504, %v1499, %v1503
      %v1506 = vmul.f32 %v1495, %v1505
      %v1507 = vmul.f32 %v1498, %v1505
      %v1508 = vsub.f32 %v1491, %v1506
      %v1509 = vsub.f32 %v1492, %v1507
      %v1510 = vmul.f32 %v1508, %v1508
      %v1511 = vmul.f32 %v1509, %v1509
      %v1512 = vsel %vm1236, %v1510, 0.0
      %1513 = vadd.xlane.f32.xlu0 %v1512
      %v1514 = vpop.xlane.xlu0 %1513
      %v1515 = vsel %vm1236, %v1511, 0.0
      %1516 = vadd.xlane.f32.xlu0 %v1515
      %v1517 = vpop.xlane.xlu0 %1516
      %v1518 = vmul.f32 %v1514, %v1505
      %v1519 = vmul.f32 %v1517, %v1505
      %v1520 = vadd.f32 %v1518, 1e-05
      %v1521 = vadd.f32 %v1519, 1e-05
      %v1522 = vrsqrt.pop %v1520
      %v1523 = vmul.f32 %v1522, %v1520
      %v1524 = vmul.f32 %v1523, %v1522
      %v1525 = vmul.f32 0.5, %v1524
      %v1526 = vsub.f32 1.5, %v1525
      %v1527 = vmul.f32 %v1522, %v1526
      %vm1528 = vweird.f32 %v1520
      %vm1529 = vweird.f32 %v1522
      %vm1530 = vmor %vm1528, %vm1529
      %v1531 = vsel %vm1530, %v1522, %v1527
      %v1532 = vrsqrt.pop %v1521
      %v1533 = vmul.f32 %v1532, %v1521
      %v1534 = vmul.f32 %v1533, %v1532
      %v1535 = vmul.f32 0.5, %v1534
      %v1536 = vsub.f32 1.5, %v1535
      %v1537 = vmul.f32 %v1532, %v1536
      %vm1538 = vweird.f32 %v1521
      %vm1539 = vweird.f32 %v1532
      %vm1540 = vmor %vm1538, %vm1539
      %v1541 = vsel %vm1540, %v1532, %v1537
      %v1542 = vmul.f32 %v1508, %v1531
      %v1543 = vmul.f32 %v1509, %v1541
      %v1544 = vld [vmem:[#allocation6] sm:$0x1]
      %v1546 = vperm.slane %v1544, 0
      %v1548 = vmul.f32 %v1542, %v1546
      %v1549 = vmul.f32 %v1543, %v1546
      %v1550 = vld [vmem:[#allocation8] sm:$0x1]
      %v1552 = vperm.slane %v1550, 0
      %v1554 = vadd.f32 %v1548, %v1552
      %v1555 = vadd.f32 %v1549, %v1552
      %v1556 = vmax.f32 %v1554, 0.0
      %v1557 = vmax.f32 %v1555, 0.0
      %v1558 = vld [vmem:[#allocation9] sm:$0x1]
      %v1560 = vperm.slane %v1558, 0
      %v1562 = vmul.f32 %v1556, %v1560
      %v1563 = vmul.f32 %v1557, %v1560
      %v1564 = vsel %vm1236, %v1562, 0.0
      %1565 = vadd.xlane.f32.xlu0 %v1564
      %v1566 = vpop.xlane.xlu0 %1565
      %v1567 = vsel %vm1236, %v1563, 0.0
      %1568 = vadd.xlane.f32.xlu0 %v1567
      %v1569 = vpop.xlane.xlu0 %1568
      %v1570 = vld [vmem:[#allocation3] sm:$0x1]
      %v1572 = vperm.slane %v1570, 0
      %v1574 = vadd.f32 %v1566, %v1572
      %v1575 = vadd.f32 %v1569, %v1572
      %vm1576 = vcmask 7168
      %1577 = vst.msk [vmem:[%s7] sm:$0xff] %vm1576, %v1574
      %1578 = vst.msk [vmem:[%s7 + $0x8] sm:$0xff] %vm1576, %v1575
    $region53: #{pretrain_split_bert_forward.27} parent=1 // pred_fallthru
      _
    // Predicated region
    $region54: #{pretrain_split_bert_forward.27} parent=1 // pred_check
      _
    $region55: #{pretrain_split_bert_forward.27} parent=1 // pred_check_branch
      %1580 = sbr.rel (0) target = $region57
    $region56: #{pretrain_split_bert_forward.27} parent=1 // pred_region
      _
    $region57: #{pretrain_split_bert_forward.27} parent=1 // pred_fallthru
      _
    // Predicated region
    $region58: #{pretrain_split_bert_forward.27} parent=1 // pred_check
      _
    $region59: #{pretrain_split_bert_forward.27} parent=1 // pred_check_branch
      %1582 = sbr.rel (0) target = $region61
    $region60: #{pretrain_split_bert_forward.27} parent=1 // pred_region
      _
    $region61: #{pretrain_split_bert_forward.27} parent=1 // pred_fallthru
      _
    %1583 = vsyncpa [#allocation5], 1
    %1584 = vsyncpa [#allocation7], 1
    %1585 = vsyncpa [#allocation10], 1

</llo_original>
